<compile_context>
chip_gen: v7x
topology: tpu7x:2x2x1
jax: 0.10.0
libtpu: 0.0.40
codegen_flags: <defaults>
</compile_context>

<pallas_src>
import jax
import jax.numpy as jnp
from jax.experimental import pallas as pl
from jax.experimental.pallas import tpu as pltpu

CFG = {
    'VGG11': [64, 'M', 128, 'M', 256, 256, 'M', 512, 512, 'M', 512, 512, 'M'],
    'VGG13': [64, 64, 'M', 128, 128, 'M', 256, 256, 'M', 512, 512, 'M', 512, 512, 'M'],
    'VGG16': [64, 64, 'M', 128, 128, 'M', 256, 256, 256, 'M', 512, 512, 512, 'M',
              512, 512, 512, 'M'],
    'VGG19': [64, 64, 'M', 128, 128, 'M', 256, 256, 256, 256, 'M', 512, 512, 512, 512, 'M',
              512, 512, 512, 512, 'M'],
}


# ----------------------------- Pallas kernels ------------------------------

def _conv_bn_relu_kernel(x_ref, w_ref, b_ref, o_ref, acc_ref):
    # Conv(3x3)+BN+ReLU as a K-tiled GEMM with an f32 accumulator.
    # x_ref: (tm, tk) bf16  im2col rows (batch folded into M)
    # w_ref: (tk, tn) bf16  BN-scale already folded in
    # b_ref: (1, tn)  f32   folded bias
    # o_ref: (tm, tn) bf16
    k = pl.program_id(2)

    @pl.when(k == 0)
    def _init():
        acc_ref[...] = jnp.zeros_like(acc_ref)

    acc_ref[...] += jnp.dot(x_ref[...], w_ref[...],
                            preferred_element_type=jnp.float32)

    @pl.when(k == pl.num_programs(2) - 1)
    def _finalize():
        o_ref[...] = jnp.maximum(acc_ref[...] + b_ref[...], 0.0).astype(o_ref.dtype)


def _conv_bn_relu_pool_kernel(x_ref, w_ref, b_ref, o_ref, acc_ref):
    # Fused Conv(3x3)+BN+ReLU+MaxPool2d(2,2): ONE merged (4*tm, tk) x (tk, tn) dot per
    # grid step (single MXU weight push), max over the 4 row slabs at the end.
    # x_ref: (4, tm, tk) bf16  im2col rows for the 4 taps of each 2x2 pool window
    # w_ref: (tk, tn)    bf16
    # b_ref: (1, tn)     f32
    # o_ref: (tm, tn)    bf16  pooled output rows
    # acc_ref: (4*tm, tn) f32
    k = pl.program_id(2)

    @pl.when(k == 0)
    def _init():
        acc_ref[...] = jnp.zeros_like(acc_ref)

    # tm is a multiple of 16 (bf16 sublane tile), so this concat is tile-aligned.
    a = jnp.concatenate([x_ref[0], x_ref[1], x_ref[2], x_ref[3]], axis=0)
    acc_ref[...] += jnp.dot(a, w_ref[...], preferred_element_type=jnp.float32)

    @pl.when(k == pl.num_programs(2) - 1)
    def _finalize():
        tm = o_ref.shape[0]
        r = jnp.maximum(acc_ref[...] + b_ref[...], 0.0)          # (4*tm, tn)
        pooled = jnp.maximum(jnp.maximum(r[0:tm], r[tm:2 * tm]),
                             jnp.maximum(r[2 * tm:3 * tm], r[3 * tm:4 * tm]))
        o_ref[...] = pooled.astype(o_ref.dtype)


def _linear_kernel(x_ref, w_ref, b_ref, o_ref):
    # x_ref: (N, Din) bf16, w_ref: (Din, Dpad) bf16, b_ref: (1, Dpad) f32, o_ref: (N, Dpad) f32
    o_ref[...] = (jnp.dot(x_ref[...], w_ref[...], preferred_element_type=jnp.float32)
                  + b_ref[...])


# ------------------------------ thin wrappers -------------------------------

def _round_up(x, m):
    return (x + m - 1) // m * m


def _choose_tiles(M, K, Cout):
    """VMEM-aware tile selection (per-layer).

    Budget sketch at the largest choices (tm=256, tn=256, tk=1152, pooled):
      x (4,256,1152) bf16 = 2.4 MiB, w (1152,256) bf16 = 0.6 MiB, out 0.13 MiB,
      acc (1024,256) f32 = 1 MiB  ->  ~7 MiB double-buffered: fits every generation
      (v5e 16 MiB default scoped, v7x 64 MiB physical) with room to spare.
    """
    # Cout tile: lane-dense, and >=2 blocks for the wide layers (v7x 2 TCs).
    tn = Cout // 2 if Cout >= 256 else Cout
    # Reduction tile: 1152 = 9*128 divides the big-K layers (2304 / 4608).
    tk = 1152 if (K > 1152 and K % 1152 == 0) else K
    # M tile: multiple of 16 (bf16 sublane packing -> free tap concat / slab max).
    tm = 16
    for cand in (256, 128, 64, 32, 16):
        if cand <= max(M, 16):
            tm = cand
            break
    # If the parallel axes would collapse to a single block, split M (cheap) so both
    # TensorCores get work on v7x. No effect on single-TC v5e/v6e.
    if Cout < 256 and _round_up(M, tm) // tm == 1 and tm > 16 and M > tm // 2:
        tm //= 2
    return tm, tn, tk


def _im2col(x_bf16, fuse_pool):
    """x: (N,H,W,Cin) bf16 -> im2col rows (slicing glue only; no arithmetic)."""
    N, H, W, Cin = x_bf16.shape
    K = 9 * Cin
    xpad = jnp.pad(x_bf16, ((0, 0), (1, 1), (1, 1), (0, 0)))
    # K ordering matches w_hwio.reshape(9*Cin, Cout): index = (dy*3+dx)*Cin + c
    cols = jnp.concatenate(
        [xpad[:, dy:dy + H, dx:dx + W, :] for dy in range(3) for dx in range(3)],
        axis=-1)                                             # (N, H, W, 9*Cin)
    if fuse_pool:
        Hp, Wp = H // 2, W // 2
        taps = [cols[:, py::2, px::2, :].reshape(N * Hp * Wp, K)
                for py in range(2) for px in range(2)]
        return jnp.stack(taps, axis=0), (N, Hp, Wp)          # (4, M, K)
    return cols.reshape(N * H * W, K), (N, H, W)             # (M, K)


def conv_block(x, p, fuse_pool, eps=1e-5):
    """Conv2d(3x3,s=1,p=1,bias) + BatchNorm2d(eval) + ReLU [+ MaxPool2d(2,2)]. x: NHWC bf16."""
    N, H, W, Cin = x.shape
    Cout = p['w'].shape[-1]
    K = 9 * Cin

    # Fold BatchNorm (eval) into the weights/bias:
    #   y = (conv(x) + b - mean) * gamma/sqrt(var+eps) + beta
    inv_std = p['gamma'] / jnp.sqrt(p['var'] + eps)
    w = (p['w'].reshape(K, Cout) * inv_std[None, :]).astype(jnp.bfloat16)
    bias = ((p['b'] - p['mean']) * inv_std + p['beta']).reshape(1, Cout).astype(jnp.float32)

    xcol, (No, Ho, Wo) = _im2col(x.astype(jnp.bfloat16), fuse_pool)
    M = No * Ho * Wo
    tm, tn, tk = _choose_tiles(M, K, Cout)
    Mpad = _round_up(M, tm)
    grid = (Mpad // tm, Cout // tn, K // tk)

    if fuse_pool:
        if Mpad != M:
            xcol = jnp.pad(xcol, ((0, 0), (0, Mpad - M), (0, 0)))
        kernel = _conv_bn_relu_pool_kernel
        x_spec = pl.BlockSpec((4, tm, tk), lambda i, j, k: (0, i, k))
        acc_shape = pltpu.VMEM((4 * tm, tn), jnp.float32)
    else:
        if Mpad != M:
            xcol = jnp.pad(xcol, ((0, Mpad - M), (0, 0)))
        kernel = _conv_bn_relu_kernel
        x_spec = pl.BlockSpec((tm, tk), lambda i, j, k: (i, k))
        acc_shape = pltpu.VMEM((tm, tn), jnp.float32)

    out = pl.pallas_call(
        kernel,
        out_shape=jax.ShapeDtypeStruct((Mpad, Cout), jnp.bfloat16),
        grid=grid,
        in_specs=[
            x_spec,
            pl.BlockSpec((tk, tn), lambda i, j, k: (k, j)),
            pl.BlockSpec((1, tn), lambda i, j, k: (0, j)),
        ],
        out_specs=pl.BlockSpec((tm, tn), lambda i, j, k: (i, j)),
        scratch_shapes=[acc_shape],
        compiler_params=pltpu.CompilerParams(
            dimension_semantics=("parallel", "parallel", "arbitrary"),
            vmem_limit_bytes=32 * 1024 * 1024),
    )(xcol, w, bias)

    if Mpad != M:
        out = out[:M]
    return out.reshape(No, Ho, Wo, Cout)


def linear(x, w, b):
    """nn.Linear(512, num_classes) with the output dim padded to a 128-lane multiple."""
    N, Din = x.shape
    Dout = w.shape[-1]
    Dpad = ((Dout + 127) // 128) * 128
    w_p = jnp.zeros((Din, Dpad), jnp.bfloat16).at[:, :Dout].set(w.astype(jnp.bfloat16))
    b_p = jnp.zeros((1, Dpad), jnp.float32).at[:, :Dout].set(b.astype(jnp.float32))
    out = pl.pallas_call(
        _linear_kernel,
        out_shape=jax.ShapeDtypeStruct((N, Dpad), jnp.float32),
        grid=(1,),
        in_specs=[
            pl.BlockSpec((N, Din), lambda i: (0, 0)),
            pl.BlockSpec((Din, Dpad), lambda i: (0, 0)),
            pl.BlockSpec((1, Dpad), lambda i: (0, 0)),
        ],
        out_specs=pl.BlockSpec((N, Dpad), lambda i: (0, 0)),
    )(x.astype(jnp.bfloat16), w_p, b_p)
    return out[:, :Dout]


# --------------------------- parameters & forward ---------------------------

def init_params(key, vgg_name='VGG11', num_classes=100):
    params = {'convs': []}
    in_c = 3
    for item in CFG[vgg_name]:
        if item == 'M':
            continue
        out_c = item
        key, k1, k2, k3, k4, k5, k6 = jax.random.split(key, 7)
        std = (2.0 / (9 * in_c)) ** 0.5
        params['convs'].append(dict(
            w=jax.random.normal(k1, (3, 3, in_c, out_c), jnp.float32) * std,   # HWIO
            b=jax.random.normal(k2, (out_c,), jnp.float32) * 0.01,
            gamma=1.0 + 0.1 * jax.random.normal(k3, (out_c,), jnp.float32),
            beta=0.1 * jax.random.normal(k4, (out_c,), jnp.float32),
            mean=0.1 * jax.random.normal(k5, (out_c,), jnp.float32),
            var=jax.random.uniform(k6, (out_c,), jnp.float32, 0.5, 1.5),
        ))
        in_c = out_c
    key, kw, kb = jax.random.split(key, 3)
    params['fc_w'] = jax.random.normal(kw, (512, num_classes), jnp.float32) / (512.0 ** 0.5)
    params['fc_b'] = jax.random.normal(kb, (num_classes,), jnp.float32) * 0.01
    return params


def avgpool2d_fi_vgg_forward(params, x_nchw, vgg_name='VGG11'):
    # PyTorch input is NCHW; transpose once to the kernel layout (NHWC) and cast bf16.
    x = jnp.transpose(x_nchw, (0, 2, 3, 1)).astype(jnp.bfloat16)
    items = CFG[vgg_name]
    n_items = len(items)
    ci = 0
    i = 0
    while i < n_items:
        # In all VGG configs an 'M' is always directly preceded by a conv layer,
        # so the pool is fused into that conv's kernel.
        assert items[i] != 'M'
        fuse_pool = (i + 1 < n_items) and items[i + 1] == 'M'
        p = params['convs'][ci]; ci += 1
        x = conv_block(x, p, fuse_pool)
        i += 2 if fuse_pool else 1

    # AvgPool2d_fi(ber, bit, kernel_size=1, stride=1): a 1x1 / stride-1 average pool is
    # the identity on the values.
    # TODO(synk): the bit-level fault injection (ber, bit) of AvgPool2d_fi has no
    # reference implementation available here; it is omitted (equivalent to ber=0).
    N = x.shape[0]
    feat = x.reshape(N, -1)  # (N, 512): spatial is 1x1, so identical to the NCHW flatten
    return linear(feat, params['fc_w'], params['fc_b'])


if __name__ == "__main__":
    key = jax.random.PRNGKey(0)
    kp, kx = jax.random.split(key)
    params = init_params(kp, 'VGG11', num_classes=100)
    # CIFAR-100 style input (the model's 512 -> 100 classifier implies 32x32 input).
    x = jax.random.normal(kx, (2, 3, 32, 32), jnp.float32)
    out = avgpool2d_fi_vgg_forward(params, x, 'VGG11')
    jax.block_until_ready(out)
    assert out.shape == (2, 100) and out.dtype == jnp.float32
    print("KERNEL_OK")
</pallas_src>

<mosaic_0001>
module attributes {stable_mosaic.version = 11 : i64} {
  func.func @_conv_bn_relu_pool_kernel(%arg0: i32, %arg1: i32, %arg2: i32, %arg3: memref<4x256x27xbf16, #tpu.memory_space<vmem>>, %arg4: memref<27x64xbf16, #tpu.memory_space<vmem>>, %arg5: memref<1x64xf32, #tpu.memory_space<vmem>>, %arg6: memref<256x64xbf16, #tpu.memory_space<vmem>>, %arg7: memref<1024x64xf32, #tpu.memory_space<vmem>>) attributes {dimension_semantics = [#tpu.dimension_semantics<parallel>, #tpu.dimension_semantics<parallel>, #tpu.dimension_semantics<arbitrary>], iteration_bounds = array<i64: 2, 1, 1>, scalar_prefetch = 0 : i64, scratch_operands = 1 : i64, tpu.core_type = #tpu.core_type<tc>, window_params = [{transform_indices = @transform_0, window_bounds = array<i64: 4, 256, 27>}, {transform_indices = @transform_1, window_bounds = array<i64: 27, 64>}, {transform_indices = @transform_2, window_bounds = array<i64: 1, 64>}, {transform_indices = @transform_3, window_bounds = array<i64: 256, 64>}]} {
    %c0_i32 = arith.constant 0 : i32
    %0 = arith.cmpi eq, %arg2, %c0_i32 : i32
    %1 = arith.extui %0 : i1 to i32
    %c0_i32_0 = arith.constant 0 : i32
    %2 = arith.cmpi ne, %1, %c0_i32_0 : i32
    scf.if %2 {
      %cst_17 = arith.constant 0.000000e+00 : f32
      %20 = vector.broadcast %cst_17 : f32 to vector<1024x64xf32>
      %c0_18 = arith.constant 0 : index
      %c0_19 = arith.constant 0 : index
      %21 = vector.load %arg7[%c0_18, %c0_19] : memref<1024x64xf32, #tpu.memory_space<vmem>>, vector<1024x64xf32>
      tpu.vector_store %arg7[%c0_18, %c0_19], %20 {strides = array<i32>} : memref<1024x64xf32, #tpu.memory_space<vmem>>, vector<1024x64xf32>,
    } else {
    }
    %c0 = arith.constant 0 : index
    %c0_1 = arith.constant 0 : index
    %c0_2 = arith.constant 0 : index
    %3 = vector.load %arg3[%c0, %c0_1, %c0_2] : memref<4x256x27xbf16, #tpu.memory_space<vmem>>, vector<1x256x27xbf16>
    %4 = vector.shape_cast %3 : vector<1x256x27xbf16> to vector<256x27xbf16>
    %c1 = arith.constant 1 : index
    %c0_3 = arith.constant 0 : index
    %c0_4 = arith.constant 0 : index
    %5 = vector.load %arg3[%c1, %c0_3, %c0_4] : memref<4x256x27xbf16, #tpu.memory_space<vmem>>, vector<1x256x27xbf16>
    %6 = vector.shape_cast %5 : vector<1x256x27xbf16> to vector<256x27xbf16>
    %c2 = arith.constant 2 : index
    %c0_5 = arith.constant 0 : index
    %c0_6 = arith.constant 0 : index
    %7 = vector.load %arg3[%c2, %c0_5, %c0_6] : memref<4x256x27xbf16, #tpu.memory_space<vmem>>, vector<1x256x27xbf16>
    %8 = vector.shape_cast %7 : vector<1x256x27xbf16> to vector<256x27xbf16>
    %c3 = arith.constant 3 : index
    %c0_7 = arith.constant 0 : index
    %c0_8 = arith.constant 0 : index
    %9 = vector.load %arg3[%c3, %c0_7, %c0_8] : memref<4x256x27xbf16, #tpu.memory_space<vmem>>, vector<1x256x27xbf16>
    %10 = vector.shape_cast %9 : vector<1x256x27xbf16> to vector<256x27xbf16>
    %11 = tpu.concatenate %4, %6, %8, %10 in 0 : vector<256x27xbf16>, vector<256x27xbf16>, vector<256x27xbf16>, vector<256x27xbf16> -> vector<1024x27xbf16>
    %c0_9 = arith.constant 0 : index
    %c0_10 = arith.constant 0 : index
    %12 = vector.load %arg7[%c0_9, %c0_10] : memref<1024x64xf32, #tpu.memory_space<vmem>>, vector<1024x64xf32>
    %c0_11 = arith.constant 0 : index
    %c0_12 = arith.constant 0 : index
    %13 = vector.load %arg4[%c0_11, %c0_12] : memref<27x64xbf16, #tpu.memory_space<vmem>>, vector<27x64xbf16>
    %cst = arith.constant dense<0.000000e+00> : vector<1024x64xf32>
    %14 = tpu.matmul %11, %13, %cst {dimension_numbers = #tpu.dot_dimension_numbers<[1], [0], [0], [1], [0, 0, 1, 1], [], []>} : vector<1024x27xbf16>, vector<27x64xbf16>, vector<1024x64xf32> -> vector<1024x64xf32>
    %15 = arith.addf %12, %14 : vector<1024x64xf32>
    %c0_13 = arith.constant 0 : index
    %c0_14 = arith.constant 0 : index
    %16 = vector.load %arg7[%c0_13, %c0_14] : memref<1024x64xf32, #tpu.memory_space<vmem>>, vector<1024x64xf32>
    tpu.vector_store %arg7[%c0_13, %c0_14], %15 {strides = array<i32>} : memref<1024x64xf32, #tpu.memory_space<vmem>>, vector<1024x64xf32>,
    %c0_i32_15 = arith.constant 0 : i32
    %17 = arith.cmpi eq, %arg2, %c0_i32_15 : i32
    %18 = arith.extui %17 : i1 to i32
    %c0_i32_16 = arith.constant 0 : i32
    %19 = arith.cmpi ne, %18, %c0_i32_16 : i32
    scf.if %19 {
      %c0_17 = arith.constant 0 : index
      %c0_18 = arith.constant 0 : index
      %20 = vector.load %arg7[%c0_17, %c0_18] : memref<1024x64xf32, #tpu.memory_space<vmem>>, vector<1024x64xf32>
      %c0_19 = arith.constant 0 : index
      %c0_20 = arith.constant 0 : index
      %21 = vector.load %arg5[%c0_19, %c0_20] : memref<1x64xf32, #tpu.memory_space<vmem>>, vector<1x64xf32>
      %22 = vector.broadcast %21 : vector<1x64xf32> to vector<1024x64xf32>
      %23 = arith.addf %20, %22 : vector<1024x64xf32>
      %cst_21 = arith.constant 0.000000e+00 : f32
      %24 = vector.broadcast %cst_21 : f32 to vector<1024x64xf32>
      %25 = arith.maximumf %23, %24 : vector<1024x64xf32>
      %26 = vector.extract_strided_slice %25 {offsets = [0, 0], sizes = [256, 64], strides = [1, 1]} : vector<1024x64xf32> to vector<256x64xf32>
      %27 = vector.extract_strided_slice %25 {offsets = [256, 0], sizes = [256, 64], strides = [1, 1]} : vector<1024x64xf32> to vector<256x64xf32>
      %28 = arith.maximumf %26, %27 : vector<256x64xf32>
      %29 = vector.extract_strided_slice %25 {offsets = [512, 0], sizes = [256, 64], strides = [1, 1]} : vector<1024x64xf32> to vector<256x64xf32>
      %30 = vector.extract_strided_slice %25 {offsets = [768, 0], sizes = [256, 64], strides = [1, 1]} : vector<1024x64xf32> to vector<256x64xf32>
      %31 = arith.maximumf %29, %30 : vector<256x64xf32>
      %32 = arith.maximumf %28, %31 : vector<256x64xf32>
      %33 = arith.truncf %32 : vector<256x64xf32> to vector<256x64xbf16>
      %c0_22 = arith.constant 0 : index
      %c0_23 = arith.constant 0 : index
      %34 = vector.load %arg6[%c0_22, %c0_23] : memref<256x64xbf16, #tpu.memory_space<vmem>>, vector<256x64xbf16>
      tpu.vector_store %arg6[%c0_22, %c0_23], %33 {strides = array<i32>} : memref<256x64xbf16, #tpu.memory_space<vmem>>, vector<256x64xbf16>,
    } else {
    }
    return
  }
  func.func @transform_0(%arg0: i32, %arg1: i32, %arg2: i32) -> (i32, i32, i32) {
    %c0_i32 = arith.constant 0 : i32
    %c0_i32_0 = arith.constant 0 : i32
    return %c0_i32, %arg0, %arg2 : i32, i32, i32
  }
  func.func @transform_1(%arg0: i32, %arg1: i32, %arg2: i32) -> (i32, i32) {
    %c0_i32 = arith.constant 0 : i32
    return %arg2, %arg1 : i32, i32
  }
  func.func @transform_2(%arg0: i32, %arg1: i32, %arg2: i32) -> (i32, i32) {
    %c0_i32 = arith.constant 0 : i32
    %c0_i32_0 = arith.constant 0 : i32
    return %c0_i32, %arg1 : i32, i32
  }
  func.func @transform_3(%arg0: i32, %arg1: i32, %arg2: i32) -> (i32, i32) {
    %c0_i32 = arith.constant 0 : i32
    return %arg0, %arg1 : i32, i32
  }
}

</mosaic_0001>

<llo_original>
// kernel: tpu_custom_call.1
$region0: #{tpu_custom_call.1}
  #allocation0 [shape = 'u32[]', space=smem, size = 0x4, offset = 0x4, fixed_abs, tag = 'smem constant byte address 0x4 - core index']
  #allocation1 [shape = 'u32[144,128]{1,0:T(1,128)}', space=vmem, size = 0x12000, scoped, tag = 'internal scratch']
  #allocation2 [shape = 'f32[1024,64]{1,0:T(8,128)}', space=vmem, size = 0x80000, scoped, tag = 'scratch operand']
  %s0 = inlined_call_operand.vmem [shape: bf16[4,512,27], index: 0, kind: input, shape index: {}]
  %s1 = inlined_call_operand.vmem [shape: bf16[27,64], index: 1, kind: input, shape index: {}]
  %s2 = inlined_call_operand.vmem [shape: f32[1,64], index: 2, kind: input, shape index: {}]
  %s3 = inlined_call_operand.vmem [shape: bf16[512,64], index: 3, kind: output, shape index: {}]
  %s4 = sld [smem:[#allocation0]]
  $region94: #{tpu_custom_call.1} parent=0
    _
  %s6 = ssub.s32 1, %s4
  %s7 = scalar_select 0, %s6, %s4
  $region1: #{tpu_custom_call.1} parent=0
    #allocation3 [shape = 'u8[524288]{0}', space=vmem, size = 0x80000, scoped, tag = 'input window, operand 0']
    loop: start=0, step=1, limit=4
    $region2: #{tpu_custom_call.1} parent=1 // loop_pre_header
      _
    $region3: #{tpu_custom_call.1} parent=1 // loop_header
      %s9 = sphi 0, %s13
      %p10 = scmp.ge.s32.totalorder %s9, 4
      %s16 = sphi 0, %s35
      %s17 = sphi 0, %s31
      %s18 = sphi 0, %s27
      %s19 = sphi 0, %s16
      %s20 = sphi 0, %s17
      %s21 = sphi 0, %s18
      %s22 = sphi 0, %s19
      %s23 = sphi 0, %s20
      %s24 = sphi 0, %s21
      %s40 = sphi 0, %s42
      %s43 = sphi 0, %s40
      %s44 = sphi 0, %s43
      %s60 = sphi 0, %s44
      %s68 = sphi 0, %s70
      %s71 = sphi 0, %s68
      %s72 = sphi 0, %s71
      %s88 = sphi 0, %s72
      %s94 = sphi 0, %s96
      %s97 = sphi 0, %s94
      %s98 = sphi 0, %s97
      %s114 = sphi 0, %s98
      %s122 = sphi 0, %s124
      %s125 = sphi 0, %s122
      %s126 = sphi 0, %s125
      %s142 = sphi 0, %s126
    $region4: #{tpu_custom_call.1} parent=1 // loop_header_branch
      %12 = sbr.rel (%p10) target = $region8
    $region5: #{tpu_custom_call.1} parent=1 // loop_body
      %s14 = ssub.s32 %s9, 1
      %s15 = ssub.s32 %s9, 2
      %s25 = sadd.s32 1, %s18
      %p26 = scmp.ge.s32.totalorder %s25, 1
      %s27 = scalar_select %p26, 0, %s25
      %s28 = sadd.s32 1, %s17
      %s29 = scalar_select %p26, %s28, %s17
      %p30 = scmp.ge.s32.totalorder %s29, 1
      %s31 = scalar_select %p30, 0, %s29
      %s32 = sadd.s32 1, %s16
      %s33 = scalar_select %p30, %s32, %s16
      %p34 = scmp.ge.s32.totalorder %s33, 2
      %s35 = scalar_select %p34, 0, %s33
      %s36 = ssub.s32 %s16, %s35
      %s37 = ssub.s32 %s18, %s27
      %s38 = sor.u32 %s36, %s37
      %p39 = scmp.eq.s32.totalorder %s38, 0
      %s41 = sadd.s32 %s40, 1
      %s42 = scalar_select %p39, %s40, %s41
      %p45 = pneg %p39
      %p46 = scmp.eq.s32.totalorder %s9, 1
      %p47 = por %p45, %p46
      %p48 = scmp.ne.s32.totalorder %s40, %s43
      %p49 = scmp.eq.s32.totalorder %s9, 0
      %p50 = por %p48, %p49
      %p51 = scmp.ne.s32.totalorder %s40, %s43
      %p52 = scmp.eq.s32.totalorder %s14, 1
      %p53 = por %p51, %p52
      %p54 = scmp.ne.s32.totalorder %s43, %s44
      %p55 = scmp.eq.s32.totalorder %s14, 0
      %p56 = por %p54, %p55
      %p57 = scmp.ne.s32.totalorder %s43, %s44
      %p58 = scmp.eq.s32.totalorder %s15, 1
      %p59 = por %p57, %p58
      %p61 = scmp.ne.s32.totalorder %s44, %s60
      %p62 = scmp.eq.s32.totalorder %s15, 0
      %p63 = por %p61, %p62
      %s64 = ssub.s32 %s18, %s27
      %s65 = ssub.s32 %s17, %s31
      %s66 = sor.u32 %s64, %s65
      %p67 = scmp.eq.s32.totalorder %s66, 0
      %s69 = sadd.s32 %s68, 1
      %s70 = scalar_select %p67, %s68, %s69
      %p73 = pneg %p67
      %p74 = scmp.eq.s32.totalorder %s9, 1
      %p75 = por %p73, %p74
      %p76 = scmp.ne.s32.totalorder %s68, %s71
      %p77 = scmp.eq.s32.totalorder %s9, 0
      %p78 = por %p76, %p77
      %p79 = scmp.ne.s32.totalorder %s68, %s71
      %p80 = scmp.eq.s32.totalorder %s14, 1
      %p81 = por %p79, %p80
      %p82 = scmp.ne.s32.totalorder %s71, %s72
      %p83 = scmp.eq.s32.totalorder %s14, 0
      %p84 = por %p82, %p83
      %p85 = scmp.ne.s32.totalorder %s71, %s72
      %p86 = scmp.eq.s32.totalorder %s15, 1
      %p87 = por %p85, %p86
      %p89 = scmp.ne.s32.totalorder %s72, %s88
      %p90 = scmp.eq.s32.totalorder %s15, 0
      %p91 = por %p89, %p90
      %s92 = ssub.s32 %s17, %s31
      %p93 = scmp.eq.s32.totalorder %s92, 0
      %s95 = sadd.s32 %s94, 1
      %s96 = scalar_select %p93, %s94, %s95
      %p99 = pneg %p93
      %p100 = scmp.eq.s32.totalorder %s9, 1
      %p101 = por %p99, %p100
      %p102 = scmp.ne.s32.totalorder %s94, %s97
      %p103 = scmp.eq.s32.totalorder %s9, 0
      %p104 = por %p102, %p103
      %p105 = scmp.ne.s32.totalorder %s94, %s97
      %p106 = scmp.eq.s32.totalorder %s14, 1
      %p107 = por %p105, %p106
      %p108 = scmp.ne.s32.totalorder %s97, %s98
      %p109 = scmp.eq.s32.totalorder %s14, 0
      %p110 = por %p108, %p109
      %p111 = scmp.ne.s32.totalorder %s97, %s98
      %p112 = scmp.eq.s32.totalorder %s15, 1
      %p113 = por %p111, %p112
      %p115 = scmp.ne.s32.totalorder %s98, %s114
      %p116 = scmp.eq.s32.totalorder %s15, 0
      %p117 = por %p115, %p116
      %s118 = ssub.s32 %s16, %s35
      %s119 = ssub.s32 %s17, %s31
      %s120 = sor.u32 %s118, %s119
      %p121 = scmp.eq.s32.totalorder %s120, 0
      %s123 = sadd.s32 %s122, 1
      %s124 = scalar_select %p121, %s122, %s123
      %p127 = pneg %p121
      %p128 = scmp.eq.s32.totalorder %s9, 1
      %p129 = por %p127, %p128
      %p130 = scmp.ne.s32.totalorder %s122, %s125
      %p131 = scmp.eq.s32.totalorder %s9, 0
      %p132 = por %p130, %p131
      %p133 = scmp.ne.s32.totalorder %s122, %s125
      %p134 = scmp.eq.s32.totalorder %s14, 1
      %p135 = por %p133, %p134
      %p136 = scmp.ne.s32.totalorder %s125, %s126
      %p137 = scmp.eq.s32.totalorder %s14, 0
      %p138 = por %p136, %p137
      %p139 = scmp.ne.s32.totalorder %s125, %s126
      %p140 = scmp.eq.s32.totalorder %s15, 1
      %p141 = por %p139, %p140
      %p143 = scmp.ne.s32.totalorder %s126, %s142
      %p144 = scmp.eq.s32.totalorder %s15, 0
      %p145 = por %p143, %p144
      %p146 = scmp.le.s32.totalorder 1, %s9
      %p147 = scmp.lt.s32.totalorder %s9, 3
      %p148 = pnand %p146, %p147
      %p149 = pneg %p148
      // Predicated region
      $region9: #{tpu_custom_call.1} parent=5 // pred_check
        _
      $region10: #{tpu_custom_call.1} parent=5 // pred_check_branch
        %151 = sbr.rel (%p148) target = $region12
      $region11: #{tpu_custom_call.1} parent=5 // pred_region
        %s152 = ssub.s32 %s9, 1
        // Predicated region
        $region13: #{tpu_custom_call.1} parent=11 // pred_check
          %p153 = pneg %p84
        $region14: #{tpu_custom_call.1} parent=11 // pred_check_branch
          %155 = sbr.rel (%p153) target = $region16
        $region15: #{tpu_custom_call.1} parent=11 // pred_region
          %s156 = smul.u32 4, %s21
          %p157 = scmp.lt.s32.totalorder %s156, 3
          %s158 = scalar_select %p157, %s156, 3
          %p159 = scmp.lt.s32.totalorder %s20, 0
          %s160 = scalar_select %p159, %s20, 0
          %s161 = sadd.s32 %s160, %s158
          %s162 = smul.addr %s161, 4
          %s163 = scalar_lea.vmem %s1, %s162
          %s164 = smul.u32 4, %s21
        $region16: #{tpu_custom_call.1} parent=11 // pred_fallthru
          _
        // Predicated region
        $region17: #{tpu_custom_call.1} parent=11 // pred_check
          %p165 = pneg %p110
        $region18: #{tpu_custom_call.1} parent=11 // pred_check_branch
          %167 = sbr.rel (%p165) target = $region20
        $region19: #{tpu_custom_call.1} parent=11 // pred_region
          %p168 = scmp.lt.s32.totalorder %s20, 0
          %s169 = scalar_select %p168, %s20, 0
          %s170 = scalar_lea.vmem %s2, %s169
        $region20: #{tpu_custom_call.1} parent=11 // pred_fallthru
          _
      $region12: #{tpu_custom_call.1} parent=5 // pred_fallthru
        _
      %p171 = scmp.lt.s32.totalorder %s9, 2
      // Predicated region
      $region21: #{tpu_custom_call.1} parent=5 // pred_check
        %p172 = pneg %p171
      $region22: #{tpu_custom_call.1} parent=5 // pred_check_branch
        %174 = sbr.rel (%p172) target = $region24
      $region23: #{tpu_custom_call.1} parent=5 // pred_region
        // Predicated region
        $region25: #{tpu_custom_call.1} parent=23 // pred_check
          %p175 = pneg %p50
        $region26: #{tpu_custom_call.1} parent=23 // pred_check_branch
          %177 = sbr.rel (%p175) target = $region28
        $region27: #{tpu_custom_call.1} parent=23 // pred_region
          %s178 = sand.u32 %s40, 1
          %s179 = sand.u32 %s40, 1
          %s180 = smul.addr %s179, 512
          %s181 = scalar_lea.vmem [#allocation3], %s180
          %s182 = smul.u32 32, %s16
          %s183 = sadd.s32 %s18, %s182
          %s184 = smul.addr %s183, 4
          %s185 = scalar_lea.vmem %s0, %s184
          // Predicated region
          $region29: #{tpu_custom_call.1} parent=27 // pred_check
            _
          $region30: #{tpu_custom_call.1} parent=27 // pred_check_branch
            %187 = sbr.rel (0) target = $region32
          $region31: #{tpu_custom_call.1} parent=27 // pred_region
            // Predicated region
            $region33: #{tpu_custom_call.1} parent=31 // pred_check
              _
            $region34: #{tpu_custom_call.1} parent=31 // pred_check_branch
              %189 = sbr.rel target = $region36
            $region35: #{tpu_custom_call.1} parent=31 // pred_region
              // Predicated region
              $region48: #{tpu_custom_call.1} parent=35 // pred_check
                _
              $region49: #{tpu_custom_call.1} parent=35 // pred_check_branch
                %458 = sbr.rel (0) target = $region51
              $region50: #{tpu_custom_call.1} parent=35 // pred_region
                loop: start=0, step=1, limit=1
                $region52: #{tpu_custom_call.1} parent=50 // loop_pre_header
                  _
                $region53: #{tpu_custom_call.1} parent=50 // loop_header
                  %s460 = sphi 0, %s464
                  %p461 = scmp.ge.s32.totalorder %s460, 1
                  %s465 = sphi %s185, %s185
                  %s466 = sphi %s181, %s181
                $region54: #{tpu_custom_call.1} parent=50 // loop_header_branch
                  %463 = sbr.rel (%p461) target = $region58
                $region55: #{tpu_custom_call.1} parent=50 // loop_body
                  _
                $region56: #{tpu_custom_call.1} parent=50 // loop_footer
                  %s464 = sadd.s32 1, %s460
                $region57: #{tpu_custom_call.1} parent=50 // loop_footer_branch
                  %459 = sbr.rel target = $region53
                $region58: #{tpu_custom_call.1} parent=50 // loop_exit
                  _
                loop: start=0, step=1, limit=1
                $region59: #{tpu_custom_call.1} parent=50 // loop_pre_header
                  _
                $region60: #{tpu_custom_call.1} parent=50 // loop_header
                  %s469 = sphi 0, %s473
                  %p470 = scmp.ge.s32.totalorder %s469, 1
                  %s474 = sphi %s185, %s185
                  %s475 = sphi %s181, %s181
                $region61: #{tpu_custom_call.1} parent=50 // loop_header_branch
                  %472 = sbr.rel (%p470) target = $region65
                $region62: #{tpu_custom_call.1} parent=50 // loop_body
                  %v476 = vld [vmem:[%s474] sm:$0xf]
                  %477 = vst [vmem:[%s475] sm:$0xf] %v476
                  %v478 = vld [vmem:[%s474 + $0x4] sm:$0xf]
                  %479 = vst [vmem:[%s475 + $0x4] sm:$0xf] %v478
                  %v480 = vld [vmem:[%s474 + $0x8] sm:$0xf]
                  %481 = vst [vmem:[%s475 + $0x8] sm:$0xf] %v480
                  %v482 = vld [vmem:[%s474 + $0xc] sm:$0xf]
                  %483 = vst [vmem:[%s475 + $0xc] sm:$0xf] %v482
                  %v484 = vld [vmem:[%s474 + $0x10] sm:$0xf]
                  %485 = vst [vmem:[%s475 + $0x10] sm:$0xf] %v484
                  %v486 = vld [vmem:[%s474 + $0x14] sm:$0xf]
                  %487 = vst [vmem:[%s475 + $0x14] sm:$0xf] %v486
                  %v488 = vld [vmem:[%s474 + $0x18] sm:$0xf]
                  %489 = vst [vmem:[%s475 + $0x18] sm:$0xf] %v488
                  %v490 = vld [vmem:[%s474 + $0x1c] sm:$0xf]
                  %491 = vst [vmem:[%s475 + $0x1c] sm:$0xf] %v490
                  %v492 = vld [vmem:[%s474 + $0x20] sm:$0xf]
                  %493 = vst [vmem:[%s475 + $0x20] sm:$0xf] %v492
                  %v494 = vld [vmem:[%s474 + $0x24] sm:$0xf]
                  %495 = vst [vmem:[%s475 + $0x24] sm:$0xf] %v494
                  %v496 = vld [vmem:[%s474 + $0x28] sm:$0xf]
                  %497 = vst [vmem:[%s475 + $0x28] sm:$0xf] %v496
                  %v498 = vld [vmem:[%s474 + $0x2c] sm:$0xf]
                  %499 = vst [vmem:[%s475 + $0x2c] sm:$0xf] %v498
                  %v500 = vld [vmem:[%s474 + $0x30] sm:$0xf]
                  %501 = vst [vmem:[%s475 + $0x30] sm:$0xf] %v500
                  %v502 = vld [vmem:[%s474 + $0x34] sm:$0xf]
                  %503 = vst [vmem:[%s475 + $0x34] sm:$0xf] %v502
                  %v504 = vld [vmem:[%s474 + $0x38] sm:$0xf]
                  %505 = vst [vmem:[%s475 + $0x38] sm:$0xf] %v504
                  %v506 = vld [vmem:[%s474 + $0x3c] sm:$0xf]
                  %507 = vst [vmem:[%s475 + $0x3c] sm:$0xf] %v506
                  %v508 = vld [vmem:[%s474 + $0x40] sm:$0xf]
                  %509 = vst [vmem:[%s475 + $0x40] sm:$0xf] %v508
                  %v510 = vld [vmem:[%s474 + $0x44] sm:$0xf]
                  %511 = vst [vmem:[%s475 + $0x44] sm:$0xf] %v510
                  %v512 = vld [vmem:[%s474 + $0x48] sm:$0xf]
                  %513 = vst [vmem:[%s475 + $0x48] sm:$0xf] %v512
                  %v514 = vld [vmem:[%s474 + $0x4c] sm:$0xf]
                  %515 = vst [vmem:[%s475 + $0x4c] sm:$0xf] %v514
                  %v516 = vld [vmem:[%s474 + $0x50] sm:$0xf]
                  %517 = vst [vmem:[%s475 + $0x50] sm:$0xf] %v516
                  %v518 = vld [vmem:[%s474 + $0x54] sm:$0xf]
                  %519 = vst [vmem:[%s475 + $0x54] sm:$0xf] %v518
                  %v520 = vld [vmem:[%s474 + $0x58] sm:$0xf]
                  %521 = vst [vmem:[%s475 + $0x58] sm:$0xf] %v520
                  %v522 = vld [vmem:[%s474 + $0x5c] sm:$0xf]
                  %523 = vst [vmem:[%s475 + $0x5c] sm:$0xf] %v522
                  %v524 = vld [vmem:[%s474 + $0x60] sm:$0xf]
                  %525 = vst [vmem:[%s475 + $0x60] sm:$0xf] %v524
                  %v526 = vld [vmem:[%s474 + $0x64] sm:$0xf]
                  %527 = vst [vmem:[%s475 + $0x64] sm:$0xf] %v526
                  %v528 = vld [vmem:[%s474 + $0x68] sm:$0xf]
                  %529 = vst [vmem:[%s475 + $0x68] sm:$0xf] %v528
                  %v530 = vld [vmem:[%s474 + $0x6c] sm:$0xf]
                  %531 = vst [vmem:[%s475 + $0x6c] sm:$0xf] %v530
                  %v532 = vld [vmem:[%s474 + $0x70] sm:$0xf]
                  %533 = vst [vmem:[%s475 + $0x70] sm:$0xf] %v532
                  %v534 = vld [vmem:[%s474 + $0x74] sm:$0xf]
                  %535 = vst [vmem:[%s475 + $0x74] sm:$0xf] %v534
                  %v536 = vld [vmem:[%s474 + $0x78] sm:$0xf]
                  %537 = vst [vmem:[%s475 + $0x78] sm:$0xf] %v536
                  %v538 = vld [vmem:[%s474 + $0x7c] sm:$0xf]
                  %539 = vst [vmem:[%s475 + $0x7c] sm:$0xf] %v538
                  %v540 = vld [vmem:[%s474 + $0x100] sm:$0xf]
                  %541 = vst [vmem:[%s475 + $0x80] sm:$0xf] %v540
                  %v542 = vld [vmem:[%s474 + $0x104] sm:$0xf]
                  %543 = vst [vmem:[%s475 + $0x84] sm:$0xf] %v542
                  %v544 = vld [vmem:[%s474 + $0x108] sm:$0xf]
                  %545 = vst [vmem:[%s475 + $0x88] sm:$0xf] %v544
                  %v546 = vld [vmem:[%s474 + $0x10c] sm:$0xf]
                  %547 = vst [vmem:[%s475 + $0x8c] sm:$0xf] %v546
                  %v548 = vld [vmem:[%s474 + $0x110] sm:$0xf]
                  %549 = vst [vmem:[%s475 + $0x90] sm:$0xf] %v548
                  %v550 = vld [vmem:[%s474 + $0x114] sm:$0xf]
                  %551 = vst [vmem:[%s475 + $0x94] sm:$0xf] %v550
                  %v552 = vld [vmem:[%s474 + $0x118] sm:$0xf]
                  %553 = vst [vmem:[%s475 + $0x98] sm:$0xf] %v552
                  %v554 = vld [vmem:[%s474 + $0x11c] sm:$0xf]
                  %555 = vst [vmem:[%s475 + $0x9c] sm:$0xf] %v554
                  %v556 = vld [vmem:[%s474 + $0x120] sm:$0xf]
                  %557 = vst [vmem:[%s475 + $0xa0] sm:$0xf] %v556
                  %v558 = vld [vmem:[%s474 + $0x124] sm:$0xf]
                  %559 = vst [vmem:[%s475 + $0xa4] sm:$0xf] %v558
                  %v560 = vld [vmem:[%s474 + $0x128] sm:$0xf]
                  %561 = vst [vmem:[%s475 + $0xa8] sm:$0xf] %v560
                  %v562 = vld [vmem:[%s474 + $0x12c] sm:$0xf]
                  %563 = vst [vmem:[%s475 + $0xac] sm:$0xf] %v562
                  %v564 = vld [vmem:[%s474 + $0x130] sm:$0xf]
                  %565 = vst [vmem:[%s475 + $0xb0] sm:$0xf] %v564
                  %v566 = vld [vmem:[%s474 + $0x134] sm:$0xf]
                  %567 = vst [vmem:[%s475 + $0xb4] sm:$0xf] %v566
                  %v568 = vld [vmem:[%s474 + $0x138] sm:$0xf]
                  %569 = vst [vmem:[%s475 + $0xb8] sm:$0xf] %v568
                  %v570 = vld [vmem:[%s474 + $0x13c] sm:$0xf]
                  %571 = vst [vmem:[%s475 + $0xbc] sm:$0xf] %v570
                  %v572 = vld [vmem:[%s474 + $0x140] sm:$0xf]
                  %573 = vst [vmem:[%s475 + $0xc0] sm:$0xf] %v572
                  %v574 = vld [vmem:[%s474 + $0x144] sm:$0xf]
                  %575 = vst [vmem:[%s475 + $0xc4] sm:$0xf] %v574
                  %v576 = vld [vmem:[%s474 + $0x148] sm:$0xf]
                  %577 = vst [vmem:[%s475 + $0xc8] sm:$0xf] %v576
                  %v578 = vld [vmem:[%s474 + $0x14c] sm:$0xf]
                  %579 = vst [vmem:[%s475 + $0xcc] sm:$0xf] %v578
                  %v580 = vld [vmem:[%s474 + $0x150] sm:$0xf]
                  %581 = vst [vmem:[%s475 + $0xd0] sm:$0xf] %v580
                  %v582 = vld [vmem:[%s474 + $0x154] sm:$0xf]
                  %583 = vst [vmem:[%s475 + $0xd4] sm:$0xf] %v582
                  %v584 = vld [vmem:[%s474 + $0x158] sm:$0xf]
                  %585 = vst [vmem:[%s475 + $0xd8] sm:$0xf] %v584
                  %v586 = vld [vmem:[%s474 + $0x15c] sm:$0xf]
                  %587 = vst [vmem:[%s475 + $0xdc] sm:$0xf] %v586
                  %v588 = vld [vmem:[%s474 + $0x160] sm:$0xf]
                  %589 = vst [vmem:[%s475 + $0xe0] sm:$0xf] %v588
                  %v590 = vld [vmem:[%s474 + $0x164] sm:$0xf]
                  %591 = vst [vmem:[%s475 + $0xe4] sm:$0xf] %v590
                  %v592 = vld [vmem:[%s474 + $0x168] sm:$0xf]
                  %593 = vst [vmem:[%s475 + $0xe8] sm:$0xf] %v592
                  %v594 = vld [vmem:[%s474 + $0x16c] sm:$0xf]
                  %595 = vst [vmem:[%s475 + $0xec] sm:$0xf] %v594
                  %v596 = vld [vmem:[%s474 + $0x170] sm:$0xf]
                  %597 = vst [vmem:[%s475 + $0xf0] sm:$0xf] %v596
                  %v598 = vld [vmem:[%s474 + $0x174] sm:$0xf]
                  %599 = vst [vmem:[%s475 + $0xf4] sm:$0xf] %v598
                  %v600 = vld [vmem:[%s474 + $0x178] sm:$0xf]
                  %601 = vst [vmem:[%s475 + $0xf8] sm:$0xf] %v600
                  %v602 = vld [vmem:[%s474 + $0x17c] sm:$0xf]
                  %603 = vst [vmem:[%s475 + $0xfc] sm:$0xf] %v602
                  %v604 = vld [vmem:[%s474 + $0x200] sm:$0xf]
                  %605 = vst [vmem:[%s475 + $0x100] sm:$0xf] %v604
                  %v606 = vld [vmem:[%s474 + $0x204] sm:$0xf]
                  %607 = vst [vmem:[%s475 + $0x104] sm:$0xf] %v606
                  %v608 = vld [vmem:[%s474 + $0x208] sm:$0xf]
                  %609 = vst [vmem:[%s475 + $0x108] sm:$0xf] %v608
                  %v610 = vld [vmem:[%s474 + $0x20c] sm:$0xf]
                  %611 = vst [vmem:[%s475 + $0x10c] sm:$0xf] %v610
                  %v612 = vld [vmem:[%s474 + $0x210] sm:$0xf]
                  %613 = vst [vmem:[%s475 + $0x110] sm:$0xf] %v612
                  %v614 = vld [vmem:[%s474 + $0x214] sm:$0xf]
                  %615 = vst [vmem:[%s475 + $0x114] sm:$0xf] %v614
                  %v616 = vld [vmem:[%s474 + $0x218] sm:$0xf]
                  %617 = vst [vmem:[%s475 + $0x118] sm:$0xf] %v616
                  %v618 = vld [vmem:[%s474 + $0x21c] sm:$0xf]
                  %619 = vst [vmem:[%s475 + $0x11c] sm:$0xf] %v618
                  %v620 = vld [vmem:[%s474 + $0x220] sm:$0xf]
                  %621 = vst [vmem:[%s475 + $0x120] sm:$0xf] %v620
                  %v622 = vld [vmem:[%s474 + $0x224] sm:$0xf]
                  %623 = vst [vmem:[%s475 + $0x124] sm:$0xf] %v622
                  %v624 = vld [vmem:[%s474 + $0x228] sm:$0xf]
                  %625 = vst [vmem:[%s475 + $0x128] sm:$0xf] %v624
                  %v626 = vld [vmem:[%s474 + $0x22c] sm:$0xf]
                  %627 = vst [vmem:[%s475 + $0x12c] sm:$0xf] %v626
                  %v628 = vld [vmem:[%s474 + $0x230] sm:$0xf]
                  %629 = vst [vmem:[%s475 + $0x130] sm:$0xf] %v628
                  %v630 = vld [vmem:[%s474 + $0x234] sm:$0xf]
                  %631 = vst [vmem:[%s475 + $0x134] sm:$0xf] %v630
                  %v632 = vld [vmem:[%s474 + $0x238] sm:$0xf]
                  %633 = vst [vmem:[%s475 + $0x138] sm:$0xf] %v632
                  %v634 = vld [vmem:[%s474 + $0x23c] sm:$0xf]
                  %635 = vst [vmem:[%s475 + $0x13c] sm:$0xf] %v634
                  %v636 = vld [vmem:[%s474 + $0x240] sm:$0xf]
                  %637 = vst [vmem:[%s475 + $0x140] sm:$0xf] %v636
                  %v638 = vld [vmem:[%s474 + $0x244] sm:$0xf]
                  %639 = vst [vmem:[%s475 + $0x144] sm:$0xf] %v638
                  %v640 = vld [vmem:[%s474 + $0x248] sm:$0xf]
                  %641 = vst [vmem:[%s475 + $0x148] sm:$0xf] %v640
                  %v642 = vld [vmem:[%s474 + $0x24c] sm:$0xf]
                  %643 = vst [vmem:[%s475 + $0x14c] sm:$0xf] %v642
                  %v644 = vld [vmem:[%s474 + $0x250] sm:$0xf]
                  %645 = vst [vmem:[%s475 + $0x150] sm:$0xf] %v644
                  %v646 = vld [vmem:[%s474 + $0x254] sm:$0xf]
                  %647 = vst [vmem:[%s475 + $0x154] sm:$0xf] %v646
                  %v648 = vld [vmem:[%s474 + $0x258] sm:$0xf]
                  %649 = vst [vmem:[%s475 + $0x158] sm:$0xf] %v648
                  %v650 = vld [vmem:[%s474 + $0x25c] sm:$0xf]
                  %651 = vst [vmem:[%s475 + $0x15c] sm:$0xf] %v650
                  %v652 = vld [vmem:[%s474 + $0x260] sm:$0xf]
                  %653 = vst [vmem:[%s475 + $0x160] sm:$0xf] %v652
                  %v654 = vld [vmem:[%s474 + $0x264] sm:$0xf]
                  %655 = vst [vmem:[%s475 + $0x164] sm:$0xf] %v654
                  %v656 = vld [vmem:[%s474 + $0x268] sm:$0xf]
                  %657 = vst [vmem:[%s475 + $0x168] sm:$0xf] %v656
                  %v658 = vld [vmem:[%s474 + $0x26c] sm:$0xf]
                  %659 = vst [vmem:[%s475 + $0x16c] sm:$0xf] %v658
                  %v660 = vld [vmem:[%s474 + $0x270] sm:$0xf]
                  %661 = vst [vmem:[%s475 + $0x170] sm:$0xf] %v660
                  %v662 = vld [vmem:[%s474 + $0x274] sm:$0xf]
                  %663 = vst [vmem:[%s475 + $0x174] sm:$0xf] %v662
                  %v664 = vld [vmem:[%s474 + $0x278] sm:$0xf]
                  %665 = vst [vmem:[%s475 + $0x178] sm:$0xf] %v664
                  %v666 = vld [vmem:[%s474 + $0x27c] sm:$0xf]
                  %667 = vst [vmem:[%s475 + $0x17c] sm:$0xf] %v666
                  %v668 = vld [vmem:[%s474 + $0x300] sm:$0xf]
                  %669 = vst [vmem:[%s475 + $0x180] sm:$0xf] %v668
                  %v670 = vld [vmem:[%s474 + $0x304] sm:$0xf]
                  %671 = vst [vmem:[%s475 + $0x184] sm:$0xf] %v670
                  %v672 = vld [vmem:[%s474 + $0x308] sm:$0xf]
                  %673 = vst [vmem:[%s475 + $0x188] sm:$0xf] %v672
                  %v674 = vld [vmem:[%s474 + $0x30c] sm:$0xf]
                  %675 = vst [vmem:[%s475 + $0x18c] sm:$0xf] %v674
                  %v676 = vld [vmem:[%s474 + $0x310] sm:$0xf]
                  %677 = vst [vmem:[%s475 + $0x190] sm:$0xf] %v676
                  %v678 = vld [vmem:[%s474 + $0x314] sm:$0xf]
                  %679 = vst [vmem:[%s475 + $0x194] sm:$0xf] %v678
                  %v680 = vld [vmem:[%s474 + $0x318] sm:$0xf]
                  %681 = vst [vmem:[%s475 + $0x198] sm:$0xf] %v680
                  %v682 = vld [vmem:[%s474 + $0x31c] sm:$0xf]
                  %683 = vst [vmem:[%s475 + $0x19c] sm:$0xf] %v682
                  %v684 = vld [vmem:[%s474 + $0x320] sm:$0xf]
                  %685 = vst [vmem:[%s475 + $0x1a0] sm:$0xf] %v684
                  %v686 = vld [vmem:[%s474 + $0x324] sm:$0xf]
                  %687 = vst [vmem:[%s475 + $0x1a4] sm:$0xf] %v686
                  %v688 = vld [vmem:[%s474 + $0x328] sm:$0xf]
                  %689 = vst [vmem:[%s475 + $0x1a8] sm:$0xf] %v688
                  %v690 = vld [vmem:[%s474 + $0x32c] sm:$0xf]
                  %691 = vst [vmem:[%s475 + $0x1ac] sm:$0xf] %v690
                  %v692 = vld [vmem:[%s474 + $0x330] sm:$0xf]
                  %693 = vst [vmem:[%s475 + $0x1b0] sm:$0xf] %v692
                  %v694 = vld [vmem:[%s474 + $0x334] sm:$0xf]
                  %695 = vst [vmem:[%s475 + $0x1b4] sm:$0xf] %v694
                  %v696 = vld [vmem:[%s474 + $0x338] sm:$0xf]
                  %697 = vst [vmem:[%s475 + $0x1b8] sm:$0xf] %v696
                  %v698 = vld [vmem:[%s474 + $0x33c] sm:$0xf]
                  %699 = vst [vmem:[%s475 + $0x1bc] sm:$0xf] %v698
                  %v700 = vld [vmem:[%s474 + $0x340] sm:$0xf]
                  %701 = vst [vmem:[%s475 + $0x1c0] sm:$0xf] %v700
                  %v702 = vld [vmem:[%s474 + $0x344] sm:$0xf]
                  %703 = vst [vmem:[%s475 + $0x1c4] sm:$0xf] %v702
                  %v704 = vld [vmem:[%s474 + $0x348] sm:$0xf]
                  %705 = vst [vmem:[%s475 + $0x1c8] sm:$0xf] %v704
                  %v706 = vld [vmem:[%s474 + $0x34c] sm:$0xf]
                  %707 = vst [vmem:[%s475 + $0x1cc] sm:$0xf] %v706
                  %v708 = vld [vmem:[%s474 + $0x350] sm:$0xf]
                  %709 = vst [vmem:[%s475 + $0x1d0] sm:$0xf] %v708
                  %v710 = vld [vmem:[%s474 + $0x354] sm:$0xf]
                  %711 = vst [vmem:[%s475 + $0x1d4] sm:$0xf] %v710
                  %v712 = vld [vmem:[%s474 + $0x358] sm:$0xf]
                  %713 = vst [vmem:[%s475 + $0x1d8] sm:$0xf] %v712
                  %v714 = vld [vmem:[%s474 + $0x35c] sm:$0xf]
                  %715 = vst [vmem:[%s475 + $0x1dc] sm:$0xf] %v714
                  %v716 = vld [vmem:[%s474 + $0x360] sm:$0xf]
                  %717 = vst [vmem:[%s475 + $0x1e0] sm:$0xf] %v716
                  %v718 = vld [vmem:[%s474 + $0x364] sm:$0xf]
                  %719 = vst [vmem:[%s475 + $0x1e4] sm:$0xf] %v718
                  %v720 = vld [vmem:[%s474 + $0x368] sm:$0xf]
                  %721 = vst [vmem:[%s475 + $0x1e8] sm:$0xf] %v720
                  %v722 = vld [vmem:[%s474 + $0x36c] sm:$0xf]
                  %723 = vst [vmem:[%s475 + $0x1ec] sm:$0xf] %v722
                  %v724 = vld [vmem:[%s474 + $0x370] sm:$0xf]
                  %725 = vst [vmem:[%s475 + $0x1f0] sm:$0xf] %v724
                  %v726 = vld [vmem:[%s474 + $0x374] sm:$0xf]
                  %727 = vst [vmem:[%s475 + $0x1f4] sm:$0xf] %v726
                  %v728 = vld [vmem:[%s474 + $0x378] sm:$0xf]
                  %729 = vst [vmem:[%s475 + $0x1f8] sm:$0xf] %v728
                  %v730 = vld [vmem:[%s474 + $0x37c] sm:$0xf]
                  %731 = vst [vmem:[%s475 + $0x1fc] sm:$0xf] %v730
                $region63: #{tpu_custom_call.1} parent=50 // loop_footer
                  %s473 = sadd.s32 1, %s469
                $region64: #{tpu_custom_call.1} parent=50 // loop_footer_branch
                  %468 = sbr.rel target = $region60
                $region65: #{tpu_custom_call.1} parent=50 // loop_exit
                  _
              $region51: #{tpu_custom_call.1} parent=35 // pred_fallthru
                _
            $region36: #{tpu_custom_call.1} parent=31 // pred_fallthru
              _
            // Predicated region
            $region37: #{tpu_custom_call.1} parent=31 // pred_check
              _
            $region38: #{tpu_custom_call.1} parent=31 // pred_check_branch
              %191 = sbr.rel (0) target = $region40
            $region39: #{tpu_custom_call.1} parent=31 // pred_region
              loop: start=0, step=1, limit=1
              $region41: #{tpu_custom_call.1} parent=39 // loop_pre_header
                _
              $region42: #{tpu_custom_call.1} parent=39 // loop_header
                %s194 = sphi 0, %s198
                %p195 = scmp.ge.s32.totalorder %s194, 1
                %s199 = sphi %s185, %s185
                %s200 = sphi %s181, %s181
              $region43: #{tpu_custom_call.1} parent=39 // loop_header_branch
                %197 = sbr.rel (%p195) target = $region47
              $region44: #{tpu_custom_call.1} parent=39 // loop_body
                %v201 = vld [vmem:[%s199] sm:$0xf]
                %202 = vst [vmem:[%s200] sm:$0xf] %v201
                %v203 = vld [vmem:[%s199 + $0x4] sm:$0xf]
                %204 = vst [vmem:[%s200 + $0x4] sm:$0xf] %v203
                %v205 = vld [vmem:[%s199 + $0x8] sm:$0xf]
                %206 = vst [vmem:[%s200 + $0x8] sm:$0xf] %v205
                %v207 = vld [vmem:[%s199 + $0xc] sm:$0xf]
                %208 = vst [vmem:[%s200 + $0xc] sm:$0xf] %v207
                %v209 = vld [vmem:[%s199 + $0x10] sm:$0xf]
                %210 = vst [vmem:[%s200 + $0x10] sm:$0xf] %v209
                %v211 = vld [vmem:[%s199 + $0x14] sm:$0xf]
                %212 = vst [vmem:[%s200 + $0x14] sm:$0xf] %v211
                %v213 = vld [vmem:[%s199 + $0x18] sm:$0xf]
                %214 = vst [vmem:[%s200 + $0x18] sm:$0xf] %v213
                %v215 = vld [vmem:[%s199 + $0x1c] sm:$0xf]
                %216 = vst [vmem:[%s200 + $0x1c] sm:$0xf] %v215
                %v217 = vld [vmem:[%s199 + $0x20] sm:$0xf]
                %218 = vst [vmem:[%s200 + $0x20] sm:$0xf] %v217
                %v219 = vld [vmem:[%s199 + $0x24] sm:$0xf]
                %220 = vst [vmem:[%s200 + $0x24] sm:$0xf] %v219
                %v221 = vld [vmem:[%s199 + $0x28] sm:$0xf]
                %222 = vst [vmem:[%s200 + $0x28] sm:$0xf] %v221
                %v223 = vld [vmem:[%s199 + $0x2c] sm:$0xf]
                %224 = vst [vmem:[%s200 + $0x2c] sm:$0xf] %v223
                %v225 = vld [vmem:[%s199 + $0x30] sm:$0xf]
                %226 = vst [vmem:[%s200 + $0x30] sm:$0xf] %v225
                %v227 = vld [vmem:[%s199 + $0x34] sm:$0xf]
                %228 = vst [vmem:[%s200 + $0x34] sm:$0xf] %v227
                %v229 = vld [vmem:[%s199 + $0x38] sm:$0xf]
                %230 = vst [vmem:[%s200 + $0x38] sm:$0xf] %v229
                %v231 = vld [vmem:[%s199 + $0x3c] sm:$0xf]
                %232 = vst [vmem:[%s200 + $0x3c] sm:$0xf] %v231
                %v233 = vld [vmem:[%s199 + $0x40] sm:$0xf]
                %234 = vst [vmem:[%s200 + $0x40] sm:$0xf] %v233
                %v235 = vld [vmem:[%s199 + $0x44] sm:$0xf]
                %236 = vst [vmem:[%s200 + $0x44] sm:$0xf] %v235
                %v237 = vld [vmem:[%s199 + $0x48] sm:$0xf]
                %238 = vst [vmem:[%s200 + $0x48] sm:$0xf] %v237
                %v239 = vld [vmem:[%s199 + $0x4c] sm:$0xf]
                %240 = vst [vmem:[%s200 + $0x4c] sm:$0xf] %v239
                %v241 = vld [vmem:[%s199 + $0x50] sm:$0xf]
                %242 = vst [vmem:[%s200 + $0x50] sm:$0xf] %v241
                %v243 = vld [vmem:[%s199 + $0x54] sm:$0xf]
                %244 = vst [vmem:[%s200 + $0x54] sm:$0xf] %v243
                %v245 = vld [vmem:[%s199 + $0x58] sm:$0xf]
                %246 = vst [vmem:[%s200 + $0x58] sm:$0xf] %v245
                %v247 = vld [vmem:[%s199 + $0x5c] sm:$0xf]
                %248 = vst [vmem:[%s200 + $0x5c] sm:$0xf] %v247
                %v249 = vld [vmem:[%s199 + $0x60] sm:$0xf]
                %250 = vst [vmem:[%s200 + $0x60] sm:$0xf] %v249
                %v251 = vld [vmem:[%s199 + $0x64] sm:$0xf]
                %252 = vst [vmem:[%s200 + $0x64] sm:$0xf] %v251
                %v253 = vld [vmem:[%s199 + $0x68] sm:$0xf]
                %254 = vst [vmem:[%s200 + $0x68] sm:$0xf] %v253
                %v255 = vld [vmem:[%s199 + $0x6c] sm:$0xf]
                %256 = vst [vmem:[%s200 + $0x6c] sm:$0xf] %v255
                %v257 = vld [vmem:[%s199 + $0x70] sm:$0xf]
                %258 = vst [vmem:[%s200 + $0x70] sm:$0xf] %v257
                %v259 = vld [vmem:[%s199 + $0x74] sm:$0xf]
                %260 = vst [vmem:[%s200 + $0x74] sm:$0xf] %v259
                %v261 = vld [vmem:[%s199 + $0x78] sm:$0xf]
                %262 = vst [vmem:[%s200 + $0x78] sm:$0xf] %v261
                %v263 = vld [vmem:[%s199 + $0x7c] sm:$0xf]
                %264 = vst [vmem:[%s200 + $0x7c] sm:$0xf] %v263
                %v265 = vld [vmem:[%s199 + $0x100] sm:$0xf]
                %266 = vst [vmem:[%s200 + $0x80] sm:$0xf] %v265
                %v267 = vld [vmem:[%s199 + $0x104] sm:$0xf]
                %268 = vst [vmem:[%s200 + $0x84] sm:$0xf] %v267
                %v269 = vld [vmem:[%s199 + $0x108] sm:$0xf]
                %270 = vst [vmem:[%s200 + $0x88] sm:$0xf] %v269
                %v271 = vld [vmem:[%s199 + $0x10c] sm:$0xf]
                %272 = vst [vmem:[%s200 + $0x8c] sm:$0xf] %v271
                %v273 = vld [vmem:[%s199 + $0x110] sm:$0xf]
                %274 = vst [vmem:[%s200 + $0x90] sm:$0xf] %v273
                %v275 = vld [vmem:[%s199 + $0x114] sm:$0xf]
                %276 = vst [vmem:[%s200 + $0x94] sm:$0xf] %v275
                %v277 = vld [vmem:[%s199 + $0x118] sm:$0xf]
                %278 = vst [vmem:[%s200 + $0x98] sm:$0xf] %v277
                %v279 = vld [vmem:[%s199 + $0x11c] sm:$0xf]
                %280 = vst [vmem:[%s200 + $0x9c] sm:$0xf] %v279
                %v281 = vld [vmem:[%s199 + $0x120] sm:$0xf]
                %282 = vst [vmem:[%s200 + $0xa0] sm:$0xf] %v281
                %v283 = vld [vmem:[%s199 + $0x124] sm:$0xf]
                %284 = vst [vmem:[%s200 + $0xa4] sm:$0xf] %v283
                %v285 = vld [vmem:[%s199 + $0x128] sm:$0xf]
                %286 = vst [vmem:[%s200 + $0xa8] sm:$0xf] %v285
                %v287 = vld [vmem:[%s199 + $0x12c] sm:$0xf]
                %288 = vst [vmem:[%s200 + $0xac] sm:$0xf] %v287
                %v289 = vld [vmem:[%s199 + $0x130] sm:$0xf]
                %290 = vst [vmem:[%s200 + $0xb0] sm:$0xf] %v289
                %v291 = vld [vmem:[%s199 + $0x134] sm:$0xf]
                %292 = vst [vmem:[%s200 + $0xb4] sm:$0xf] %v291
                %v293 = vld [vmem:[%s199 + $0x138] sm:$0xf]
                %294 = vst [vmem:[%s200 + $0xb8] sm:$0xf] %v293
                %v295 = vld [vmem:[%s199 + $0x13c] sm:$0xf]
                %296 = vst [vmem:[%s200 + $0xbc] sm:$0xf] %v295
                %v297 = vld [vmem:[%s199 + $0x140] sm:$0xf]
                %298 = vst [vmem:[%s200 + $0xc0] sm:$0xf] %v297
                %v299 = vld [vmem:[%s199 + $0x144] sm:$0xf]
                %300 = vst [vmem:[%s200 + $0xc4] sm:$0xf] %v299
                %v301 = vld [vmem:[%s199 + $0x148] sm:$0xf]
                %302 = vst [vmem:[%s200 + $0xc8] sm:$0xf] %v301
                %v303 = vld [vmem:[%s199 + $0x14c] sm:$0xf]
                %304 = vst [vmem:[%s200 + $0xcc] sm:$0xf] %v303
                %v305 = vld [vmem:[%s199 + $0x150] sm:$0xf]
                %306 = vst [vmem:[%s200 + $0xd0] sm:$0xf] %v305
                %v307 = vld [vmem:[%s199 + $0x154] sm:$0xf]
                %308 = vst [vmem:[%s200 + $0xd4] sm:$0xf] %v307
                %v309 = vld [vmem:[%s199 + $0x158] sm:$0xf]
                %310 = vst [vmem:[%s200 + $0xd8] sm:$0xf] %v309
                %v311 = vld [vmem:[%s199 + $0x15c] sm:$0xf]
                %312 = vst [vmem:[%s200 + $0xdc] sm:$0xf] %v311
                %v313 = vld [vmem:[%s199 + $0x160] sm:$0xf]
                %314 = vst [vmem:[%s200 + $0xe0] sm:$0xf] %v313
                %v315 = vld [vmem:[%s199 + $0x164] sm:$0xf]
                %316 = vst [vmem:[%s200 + $0xe4] sm:$0xf] %v315
                %v317 = vld [vmem:[%s199 + $0x168] sm:$0xf]
                %318 = vst [vmem:[%s200 + $0xe8] sm:$0xf] %v317
                %v319 = vld [vmem:[%s199 + $0x16c] sm:$0xf]
                %320 = vst [vmem:[%s200 + $0xec] sm:$0xf] %v319
                %v321 = vld [vmem:[%s199 + $0x170] sm:$0xf]
                %322 = vst [vmem:[%s200 + $0xf0] sm:$0xf] %v321
                %v323 = vld [vmem:[%s199 + $0x174] sm:$0xf]
                %324 = vst [vmem:[%s200 + $0xf4] sm:$0xf] %v323
                %v325 = vld [vmem:[%s199 + $0x178] sm:$0xf]
                %326 = vst [vmem:[%s200 + $0xf8] sm:$0xf] %v325
                %v327 = vld [vmem:[%s199 + $0x17c] sm:$0xf]
                %328 = vst [vmem:[%s200 + $0xfc] sm:$0xf] %v327
                %v329 = vld [vmem:[%s199 + $0x200] sm:$0xf]
                %330 = vst [vmem:[%s200 + $0x100] sm:$0xf] %v329
                %v331 = vld [vmem:[%s199 + $0x204] sm:$0xf]
                %332 = vst [vmem:[%s200 + $0x104] sm:$0xf] %v331
                %v333 = vld [vmem:[%s199 + $0x208] sm:$0xf]
                %334 = vst [vmem:[%s200 + $0x108] sm:$0xf] %v333
                %v335 = vld [vmem:[%s199 + $0x20c] sm:$0xf]
                %336 = vst [vmem:[%s200 + $0x10c] sm:$0xf] %v335
                %v337 = vld [vmem:[%s199 + $0x210] sm:$0xf]
                %338 = vst [vmem:[%s200 + $0x110] sm:$0xf] %v337
                %v339 = vld [vmem:[%s199 + $0x214] sm:$0xf]
                %340 = vst [vmem:[%s200 + $0x114] sm:$0xf] %v339
                %v341 = vld [vmem:[%s199 + $0x218] sm:$0xf]
                %342 = vst [vmem:[%s200 + $0x118] sm:$0xf] %v341
                %v343 = vld [vmem:[%s199 + $0x21c] sm:$0xf]
                %344 = vst [vmem:[%s200 + $0x11c] sm:$0xf] %v343
                %v345 = vld [vmem:[%s199 + $0x220] sm:$0xf]
                %346 = vst [vmem:[%s200 + $0x120] sm:$0xf] %v345
                %v347 = vld [vmem:[%s199 + $0x224] sm:$0xf]
                %348 = vst [vmem:[%s200 + $0x124] sm:$0xf] %v347
                %v349 = vld [vmem:[%s199 + $0x228] sm:$0xf]
                %350 = vst [vmem:[%s200 + $0x128] sm:$0xf] %v349
                %v351 = vld [vmem:[%s199 + $0x22c] sm:$0xf]
                %352 = vst [vmem:[%s200 + $0x12c] sm:$0xf] %v351
                %v353 = vld [vmem:[%s199 + $0x230] sm:$0xf]
                %354 = vst [vmem:[%s200 + $0x130] sm:$0xf] %v353
                %v355 = vld [vmem:[%s199 + $0x234] sm:$0xf]
                %356 = vst [vmem:[%s200 + $0x134] sm:$0xf] %v355
                %v357 = vld [vmem:[%s199 + $0x238] sm:$0xf]
                %358 = vst [vmem:[%s200 + $0x138] sm:$0xf] %v357
                %v359 = vld [vmem:[%s199 + $0x23c] sm:$0xf]
                %360 = vst [vmem:[%s200 + $0x13c] sm:$0xf] %v359
                %v361 = vld [vmem:[%s199 + $0x240] sm:$0xf]
                %362 = vst [vmem:[%s200 + $0x140] sm:$0xf] %v361
                %v363 = vld [vmem:[%s199 + $0x244] sm:$0xf]
                %364 = vst [vmem:[%s200 + $0x144] sm:$0xf] %v363
                %v365 = vld [vmem:[%s199 + $0x248] sm:$0xf]
                %366 = vst [vmem:[%s200 + $0x148] sm:$0xf] %v365
                %v367 = vld [vmem:[%s199 + $0x24c] sm:$0xf]
                %368 = vst [vmem:[%s200 + $0x14c] sm:$0xf] %v367
                %v369 = vld [vmem:[%s199 + $0x250] sm:$0xf]
                %370 = vst [vmem:[%s200 + $0x150] sm:$0xf] %v369
                %v371 = vld [vmem:[%s199 + $0x254] sm:$0xf]
                %372 = vst [vmem:[%s200 + $0x154] sm:$0xf] %v371
                %v373 = vld [vmem:[%s199 + $0x258] sm:$0xf]
                %374 = vst [vmem:[%s200 + $0x158] sm:$0xf] %v373
                %v375 = vld [vmem:[%s199 + $0x25c] sm:$0xf]
                %376 = vst [vmem:[%s200 + $0x15c] sm:$0xf] %v375
                %v377 = vld [vmem:[%s199 + $0x260] sm:$0xf]
                %378 = vst [vmem:[%s200 + $0x160] sm:$0xf] %v377
                %v379 = vld [vmem:[%s199 + $0x264] sm:$0xf]
                %380 = vst [vmem:[%s200 + $0x164] sm:$0xf] %v379
                %v381 = vld [vmem:[%s199 + $0x268] sm:$0xf]
                %382 = vst [vmem:[%s200 + $0x168] sm:$0xf] %v381
                %v383 = vld [vmem:[%s199 + $0x26c] sm:$0xf]
                %384 = vst [vmem:[%s200 + $0x16c] sm:$0xf] %v383
                %v385 = vld [vmem:[%s199 + $0x270] sm:$0xf]
                %386 = vst [vmem:[%s200 + $0x170] sm:$0xf] %v385
                %v387 = vld [vmem:[%s199 + $0x274] sm:$0xf]
                %388 = vst [vmem:[%s200 + $0x174] sm:$0xf] %v387
                %v389 = vld [vmem:[%s199 + $0x278] sm:$0xf]
                %390 = vst [vmem:[%s200 + $0x178] sm:$0xf] %v389
                %v391 = vld [vmem:[%s199 + $0x27c] sm:$0xf]
                %392 = vst [vmem:[%s200 + $0x17c] sm:$0xf] %v391
                %v393 = vld [vmem:[%s199 + $0x300] sm:$0xf]
                %394 = vst [vmem:[%s200 + $0x180] sm:$0xf] %v393
                %v395 = vld [vmem:[%s199 + $0x304] sm:$0xf]
                %396 = vst [vmem:[%s200 + $0x184] sm:$0xf] %v395
                %v397 = vld [vmem:[%s199 + $0x308] sm:$0xf]
                %398 = vst [vmem:[%s200 + $0x188] sm:$0xf] %v397
                %v399 = vld [vmem:[%s199 + $0x30c] sm:$0xf]
                %400 = vst [vmem:[%s200 + $0x18c] sm:$0xf] %v399
                %v401 = vld [vmem:[%s199 + $0x310] sm:$0xf]
                %402 = vst [vmem:[%s200 + $0x190] sm:$0xf] %v401
                %v403 = vld [vmem:[%s199 + $0x314] sm:$0xf]
                %404 = vst [vmem:[%s200 + $0x194] sm:$0xf] %v403
                %v405 = vld [vmem:[%s199 + $0x318] sm:$0xf]
                %406 = vst [vmem:[%s200 + $0x198] sm:$0xf] %v405
                %v407 = vld [vmem:[%s199 + $0x31c] sm:$0xf]
                %408 = vst [vmem:[%s200 + $0x19c] sm:$0xf] %v407
                %v409 = vld [vmem:[%s199 + $0x320] sm:$0xf]
                %410 = vst [vmem:[%s200 + $0x1a0] sm:$0xf] %v409
                %v411 = vld [vmem:[%s199 + $0x324] sm:$0xf]
                %412 = vst [vmem:[%s200 + $0x1a4] sm:$0xf] %v411
                %v413 = vld [vmem:[%s199 + $0x328] sm:$0xf]
                %414 = vst [vmem:[%s200 + $0x1a8] sm:$0xf] %v413
                %v415 = vld [vmem:[%s199 + $0x32c] sm:$0xf]
                %416 = vst [vmem:[%s200 + $0x1ac] sm:$0xf] %v415
                %v417 = vld [vmem:[%s199 + $0x330] sm:$0xf]
                %418 = vst [vmem:[%s200 + $0x1b0] sm:$0xf] %v417
                %v419 = vld [vmem:[%s199 + $0x334] sm:$0xf]
                %420 = vst [vmem:[%s200 + $0x1b4] sm:$0xf] %v419
                %v421 = vld [vmem:[%s199 + $0x338] sm:$0xf]
                %422 = vst [vmem:[%s200 + $0x1b8] sm:$0xf] %v421
                %v423 = vld [vmem:[%s199 + $0x33c] sm:$0xf]
                %424 = vst [vmem:[%s200 + $0x1bc] sm:$0xf] %v423
                %v425 = vld [vmem:[%s199 + $0x340] sm:$0xf]
                %426 = vst [vmem:[%s200 + $0x1c0] sm:$0xf] %v425
                %v427 = vld [vmem:[%s199 + $0x344] sm:$0xf]
                %428 = vst [vmem:[%s200 + $0x1c4] sm:$0xf] %v427
                %v429 = vld [vmem:[%s199 + $0x348] sm:$0xf]
                %430 = vst [vmem:[%s200 + $0x1c8] sm:$0xf] %v429
                %v431 = vld [vmem:[%s199 + $0x34c] sm:$0xf]
                %432 = vst [vmem:[%s200 + $0x1cc] sm:$0xf] %v431
                %v433 = vld [vmem:[%s199 + $0x350] sm:$0xf]
                %434 = vst [vmem:[%s200 + $0x1d0] sm:$0xf] %v433
                %v435 = vld [vmem:[%s199 + $0x354] sm:$0xf]
                %436 = vst [vmem:[%s200 + $0x1d4] sm:$0xf] %v435
                %v437 = vld [vmem:[%s199 + $0x358] sm:$0xf]
                %438 = vst [vmem:[%s200 + $0x1d8] sm:$0xf] %v437
                %v439 = vld [vmem:[%s199 + $0x35c] sm:$0xf]
                %440 = vst [vmem:[%s200 + $0x1dc] sm:$0xf] %v439
                %v441 = vld [vmem:[%s199 + $0x360] sm:$0xf]
                %442 = vst [vmem:[%s200 + $0x1e0] sm:$0xf] %v441
                %v443 = vld [vmem:[%s199 + $0x364] sm:$0xf]
                %444 = vst [vmem:[%s200 + $0x1e4] sm:$0xf] %v443
                %v445 = vld [vmem:[%s199 + $0x368] sm:$0xf]
                %446 = vst [vmem:[%s200 + $0x1e8] sm:$0xf] %v445
                %v447 = vld [vmem:[%s199 + $0x36c] sm:$0xf]
                %448 = vst [vmem:[%s200 + $0x1ec] sm:$0xf] %v447
                %v449 = vld [vmem:[%s199 + $0x370] sm:$0xf]
                %450 = vst [vmem:[%s200 + $0x1f0] sm:$0xf] %v449
                %v451 = vld [vmem:[%s199 + $0x374] sm:$0xf]
                %452 = vst [vmem:[%s200 + $0x1f4] sm:$0xf] %v451
                %v453 = vld [vmem:[%s199 + $0x378] sm:$0xf]
                %454 = vst [vmem:[%s200 + $0x1f8] sm:$0xf] %v453
                %v455 = vld [vmem:[%s199 + $0x37c] sm:$0xf]
                %456 = vst [vmem:[%s200 + $0x1fc] sm:$0xf] %v455
              $region45: #{tpu_custom_call.1} parent=39 // loop_footer
                %s198 = sadd.s32 1, %s194
              $region46: #{tpu_custom_call.1} parent=39 // loop_footer_branch
                %193 = sbr.rel target = $region42
              $region47: #{tpu_custom_call.1} parent=39 // loop_exit
                _
            $region40: #{tpu_custom_call.1} parent=31 // pred_fallthru
              _
          $region32: #{tpu_custom_call.1} parent=27 // pred_fallthru
            _
          %732 = vnop
        $region28: #{tpu_custom_call.1} parent=23 // pred_fallthru
          _
      $region24: #{tpu_custom_call.1} parent=5 // pred_fallthru
        _
      %p733 = scmp.le.s32.totalorder 1, %s9
      %p734 = scmp.lt.s32.totalorder %s9, 3
      %p735 = pnand %p733, %p734
      %p736 = pneg %p735
      // Predicated region
      $region66: #{tpu_custom_call.1} parent=5 // pred_check
        _
      $region67: #{tpu_custom_call.1} parent=5 // pred_check_branch
        %738 = sbr.rel (%p735) target = $region69
      $region68: #{tpu_custom_call.1} parent=5 // pred_region
        %s739 = ssub.s32 %s9, 1
        %s740 = sand.u32 %s43, 1
        %s741 = sand.u32 %s43, 1
        %s742 = smul.addr %s741, 512
        %s743 = scalar_lea.vmem [#allocation3], %s742
        // Predicated region
        $region70: #{tpu_custom_call.1} parent=68 // pred_check
          %p744 = pneg %p56
        $region71: #{tpu_custom_call.1} parent=68 // pred_check_branch
          %746 = sbr.rel (%p744) target = $region73
        $region72: #{tpu_custom_call.1} parent=68 // pred_region
          _
        $region73: #{tpu_custom_call.1} parent=68 // pred_fallthru
          _
        %s747 = sand.u32 %s43, 1
        %s748 = sand.u32 %s43, 1
        %s749 = smul.addr %s748, 512
        %s750 = scalar_lea.vmem [#allocation3], %s749
        %p751 = pneg %p56
        %p752 = pneg %p53
        %s753 = smul.u32 4, %s21
        %p754 = scmp.lt.s32.totalorder %s753, 3
        %s755 = scalar_select %p754, %s753, 3
        %p756 = scmp.lt.s32.totalorder %s20, 0
        %s757 = scalar_select %p756, %s20, 0
        %s758 = sadd.s32 %s757, %s755
        %s759 = smul.addr %s758, 4
        %s760 = scalar_lea.vmem %s1, %s759
        %p761 = pneg %p84
        %p762 = pneg %p81
        %p763 = scmp.lt.s32.totalorder %s20, 0
        %s764 = scalar_select %p763, %s20, 0
        %s765 = scalar_lea.vmem %s2, %s764
        %p766 = pneg %p110
        %p767 = pneg %p107
        %p768 = pneg %p138
        %p769 = pneg %p135
        %s770 = smul.u32 32, %s19
        %p771 = scmp.lt.s32.totalorder %s770, 63
        %s772 = scalar_select %p771, %s770, 63
        %p773 = scmp.lt.s32.totalorder %s20, 0
        %s774 = scalar_select %p773, %s20, 0
        %s775 = sadd.s32 %s774, %s772
        %s776 = smul.addr %s775, 4
        %s777 = scalar_lea.vmem %s3, %s776
        %s778 = smul.u32 32, %s19
        %s779 = smul.u32 4, %s21
        %p780 = scmp.lt.s32.totalorder %s779, 3
        %s781 = scalar_select %p780, %s779, 3
        %p782 = scmp.lt.s32.totalorder %s20, 0
        %s783 = scalar_select %p782, %s20, 0
        %s784 = sadd.s32 %s783, %s781
        %s785 = smul.addr %s784, 4
        %s786 = scalar_lea.vmem %s1, %s785
        %s787 = smul.u32 4, %s21
        %p788 = scmp.lt.s32.totalorder %s20, 0
        %s789 = scalar_select %p788, %s20, 0
        %s790 = scalar_lea.vmem %s2, %s789
        %s791 = smul.u32 32, %s19
        %p792 = scmp.lt.s32.totalorder %s791, 63
        %s793 = scalar_select %p792, %s791, 63
        %p794 = scmp.lt.s32.totalorder %s20, 0
        %s795 = scalar_select %p794, %s20, 0
        %s796 = sadd.s32 %s795, %s793
        %s797 = smul.addr %s796, 4
        %s798 = scalar_lea.vmem %s3, %s797
        %s799 = smul.u32 32, %s19
        %p801 = scmp.eq.s32.totalorder %s21, 0
        // Predicated region
        $region74: #{tpu_custom_call.1} parent=68 // pred_check
          %p802 = pneg %p801
        $region75: #{tpu_custom_call.1} parent=68 // pred_check_branch
          %804 = sbr.rel (%p802) target = $region77
        $region76: #{tpu_custom_call.1} parent=68 // pred_region
          %vm805 = vcmask 523264
          %806 = vst.msk [vmem:[#allocation2] sm:$0xff] %vm805, 0.0
          %807 = vst.msk [vmem:[#allocation2 + $0x8] sm:$0xff] %vm805, 0.0
          %808 = vst.msk [vmem:[#allocation2 + $0x10] sm:$0xff] %vm805, 0.0
          %809 = vst.msk [vmem:[#allocation2 + $0x18] sm:$0xff] %vm805, 0.0
          %810 = vst.msk [vmem:[#allocation2 + $0x20] sm:$0xff] %vm805, 0.0
          %811 = vst.msk [vmem:[#allocation2 + $0x28] sm:$0xff] %vm805, 0.0
          %812 = vst.msk [vmem:[#allocation2 + $0x30] sm:$0xff] %vm805, 0.0
          %813 = vst.msk [vmem:[#allocation2 + $0x38] sm:$0xff] %vm805, 0.0
          %814 = vst.msk [vmem:[#allocation2 + $0x40] sm:$0xff] %vm805, 0.0
          %815 = vst.msk [vmem:[#allocation2 + $0x48] sm:$0xff] %vm805, 0.0
          %816 = vst.msk [vmem:[#allocation2 + $0x50] sm:$0xff] %vm805, 0.0
          %817 = vst.msk [vmem:[#allocation2 + $0x58] sm:$0xff] %vm805, 0.0
          %818 = vst.msk [vmem:[#allocation2 + $0x60] sm:$0xff] %vm805, 0.0
          %819 = vst.msk [vmem:[#allocation2 + $0x68] sm:$0xff] %vm805, 0.0
          %820 = vst.msk [vmem:[#allocation2 + $0x70] sm:$0xff] %vm805, 0.0
          %821 = vst.msk [vmem:[#allocation2 + $0x78] sm:$0xff] %vm805, 0.0
          %822 = vst.msk [vmem:[#allocation2 + $0x80] sm:$0xff] %vm805, 0.0
          %823 = vst.msk [vmem:[#allocation2 + $0x88] sm:$0xff] %vm805, 0.0
          %824 = vst.msk [vmem:[#allocation2 + $0x90] sm:$0xff] %vm805, 0.0
          %825 = vst.msk [vmem:[#allocation2 + $0x98] sm:$0xff] %vm805, 0.0
          %826 = vst.msk [vmem:[#allocation2 + $0xa0] sm:$0xff] %vm805, 0.0
          %827 = vst.msk [vmem:[#allocation2 + $0xa8] sm:$0xff] %vm805, 0.0
          %828 = vst.msk [vmem:[#allocation2 + $0xb0] sm:$0xff] %vm805, 0.0
          %829 = vst.msk [vmem:[#allocation2 + $0xb8] sm:$0xff] %vm805, 0.0
          %830 = vst.msk [vmem:[#allocation2 + $0xc0] sm:$0xff] %vm805, 0.0
          %831 = vst.msk [vmem:[#allocation2 + $0xc8] sm:$0xff] %vm805, 0.0
          %832 = vst.msk [vmem:[#allocation2 + $0xd0] sm:$0xff] %vm805, 0.0
          %833 = vst.msk [vmem:[#allocation2 + $0xd8] sm:$0xff] %vm805, 0.0
          %834 = vst.msk [vmem:[#allocation2 + $0xe0] sm:$0xff] %vm805, 0.0
          %835 = vst.msk [vmem:[#allocation2 + $0xe8] sm:$0xff] %vm805, 0.0
          %836 = vst.msk [vmem:[#allocation2 + $0xf0] sm:$0xff] %vm805, 0.0
          %837 = vst.msk [vmem:[#allocation2 + $0xf8] sm:$0xff] %vm805, 0.0
          %838 = vst.msk [vmem:[#allocation2 + $0x100] sm:$0xff] %vm805, 0.0
          %839 = vst.msk [vmem:[#allocation2 + $0x108] sm:$0xff] %vm805, 0.0
          %840 = vst.msk [vmem:[#allocation2 + $0x110] sm:$0xff] %vm805, 0.0
          %841 = vst.msk [vmem:[#allocation2 + $0x118] sm:$0xff] %vm805, 0.0
          %842 = vst.msk [vmem:[#allocation2 + $0x120] sm:$0xff] %vm805, 0.0
          %843 = vst.msk [vmem:[#allocation2 + $0x128] sm:$0xff] %vm805, 0.0
          %844 = vst.msk [vmem:[#allocation2 + $0x130] sm:$0xff] %vm805, 0.0
          %845 = vst.msk [vmem:[#allocation2 + $0x138] sm:$0xff] %vm805, 0.0
          %846 = vst.msk [vmem:[#allocation2 + $0x140] sm:$0xff] %vm805, 0.0
          %847 = vst.msk [vmem:[#allocation2 + $0x148] sm:$0xff] %vm805, 0.0
          %848 = vst.msk [vmem:[#allocation2 + $0x150] sm:$0xff] %vm805, 0.0
          %849 = vst.msk [vmem:[#allocation2 + $0x158] sm:$0xff] %vm805, 0.0
          %850 = vst.msk [vmem:[#allocation2 + $0x160] sm:$0xff] %vm805, 0.0
          %851 = vst.msk [vmem:[#allocation2 + $0x168] sm:$0xff] %vm805, 0.0
          %852 = vst.msk [vmem:[#allocation2 + $0x170] sm:$0xff] %vm805, 0.0
          %853 = vst.msk [vmem:[#allocation2 + $0x178] sm:$0xff] %vm805, 0.0
          %854 = vst.msk [vmem:[#allocation2 + $0x180] sm:$0xff] %vm805, 0.0
          %855 = vst.msk [vmem:[#allocation2 + $0x188] sm:$0xff] %vm805, 0.0
          %856 = vst.msk [vmem:[#allocation2 + $0x190] sm:$0xff] %vm805, 0.0
          %857 = vst.msk [vmem:[#allocation2 + $0x198] sm:$0xff] %vm805, 0.0
          %858 = vst.msk [vmem:[#allocation2 + $0x1a0] sm:$0xff] %vm805, 0.0
          %859 = vst.msk [vmem:[#allocation2 + $0x1a8] sm:$0xff] %vm805, 0.0
          %860 = vst.msk [vmem:[#allocation2 + $0x1b0] sm:$0xff] %vm805, 0.0
          %861 = vst.msk [vmem:[#allocation2 + $0x1b8] sm:$0xff] %vm805, 0.0
          %862 = vst.msk [vmem:[#allocation2 + $0x1c0] sm:$0xff] %vm805, 0.0
          %863 = vst.msk [vmem:[#allocation2 + $0x1c8] sm:$0xff] %vm805, 0.0
          %864 = vst.msk [vmem:[#allocation2 + $0x1d0] sm:$0xff] %vm805, 0.0
          %865 = vst.msk [vmem:[#allocation2 + $0x1d8] sm:$0xff] %vm805, 0.0
          %866 = vst.msk [vmem:[#allocation2 + $0x1e0] sm:$0xff] %vm805, 0.0
          %867 = vst.msk [vmem:[#allocation2 + $0x1e8] sm:$0xff] %vm805, 0.0
          %868 = vst.msk [vmem:[#allocation2 + $0x1f0] sm:$0xff] %vm805, 0.0
          %869 = vst.msk [vmem:[#allocation2 + $0x1f8] sm:$0xff] %vm805, 0.0
          %870 = vst.msk [vmem:[#allocation2 + $0x200] sm:$0xff] %vm805, 0.0
          %871 = vst.msk [vmem:[#allocation2 + $0x208] sm:$0xff] %vm805, 0.0
          %872 = vst.msk [vmem:[#allocation2 + $0x210] sm:$0xff] %vm805, 0.0
          %873 = vst.msk [vmem:[#allocation2 + $0x218] sm:$0xff] %vm805, 0.0
          %874 = vst.msk [vmem:[#allocation2 + $0x220] sm:$0xff] %vm805, 0.0
          %875 = vst.msk [vmem:[#allocation2 + $0x228] sm:$0xff] %vm805, 0.0
          %876 = vst.msk [vmem:[#allocation2 + $0x230] sm:$0xff] %vm805, 0.0
          %877 = vst.msk [vmem:[#allocation2 + $0x238] sm:$0xff] %vm805, 0.0
          %878 = vst.msk [vmem:[#allocation2 + $0x240] sm:$0xff] %vm805, 0.0
          %879 = vst.msk [vmem:[#allocation2 + $0x248] sm:$0xff] %vm805, 0.0
          %880 = vst.msk [vmem:[#allocation2 + $0x250] sm:$0xff] %vm805, 0.0
          %881 = vst.msk [vmem:[#allocation2 + $0x258] sm:$0xff] %vm805, 0.0
          %882 = vst.msk [vmem:[#allocation2 + $0x260] sm:$0xff] %vm805, 0.0
          %883 = vst.msk [vmem:[#allocation2 + $0x268] sm:$0xff] %vm805, 0.0
          %884 = vst.msk [vmem:[#allocation2 + $0x270] sm:$0xff] %vm805, 0.0
          %885 = vst.msk [vmem:[#allocation2 + $0x278] sm:$0xff] %vm805, 0.0
          %886 = vst.msk [vmem:[#allocation2 + $0x280] sm:$0xff] %vm805, 0.0
          %887 = vst.msk [vmem:[#allocation2 + $0x288] sm:$0xff] %vm805, 0.0
          %888 = vst.msk [vmem:[#allocation2 + $0x290] sm:$0xff] %vm805, 0.0
          %889 = vst.msk [vmem:[#allocation2 + $0x298] sm:$0xff] %vm805, 0.0
          %890 = vst.msk [vmem:[#allocation2 + $0x2a0] sm:$0xff] %vm805, 0.0
          %891 = vst.msk [vmem:[#allocation2 + $0x2a8] sm:$0xff] %vm805, 0.0
          %892 = vst.msk [vmem:[#allocation2 + $0x2b0] sm:$0xff] %vm805, 0.0
          %893 = vst.msk [vmem:[#allocation2 + $0x2b8] sm:$0xff] %vm805, 0.0
          %894 = vst.msk [vmem:[#allocation2 + $0x2c0] sm:$0xff] %vm805, 0.0
          %895 = vst.msk [vmem:[#allocation2 + $0x2c8] sm:$0xff] %vm805, 0.0
          %896 = vst.msk [vmem:[#allocation2 + $0x2d0] sm:$0xff] %vm805, 0.0
          %897 = vst.msk [vmem:[#allocation2 + $0x2d8] sm:$0xff] %vm805, 0.0
          %898 = vst.msk [vmem:[#allocation2 + $0x2e0] sm:$0xff] %vm805, 0.0
          %899 = vst.msk [vmem:[#allocation2 + $0x2e8] sm:$0xff] %vm805, 0.0
          %900 = vst.msk [vmem:[#allocation2 + $0x2f0] sm:$0xff] %vm805, 0.0
          %901 = vst.msk [vmem:[#allocation2 + $0x2f8] sm:$0xff] %vm805, 0.0
          %902 = vst.msk [vmem:[#allocation2 + $0x300] sm:$0xff] %vm805, 0.0
          %903 = vst.msk [vmem:[#allocation2 + $0x308] sm:$0xff] %vm805, 0.0
          %904 = vst.msk [vmem:[#allocation2 + $0x310] sm:$0xff] %vm805, 0.0
          %905 = vst.msk [vmem:[#allocation2 + $0x318] sm:$0xff] %vm805, 0.0
          %906 = vst.msk [vmem:[#allocation2 + $0x320] sm:$0xff] %vm805, 0.0
          %907 = vst.msk [vmem:[#allocation2 + $0x328] sm:$0xff] %vm805, 0.0
          %908 = vst.msk [vmem:[#allocation2 + $0x330] sm:$0xff] %vm805, 0.0
          %909 = vst.msk [vmem:[#allocation2 + $0x338] sm:$0xff] %vm805, 0.0
          %910 = vst.msk [vmem:[#allocation2 + $0x340] sm:$0xff] %vm805, 0.0
          %911 = vst.msk [vmem:[#allocation2 + $0x348] sm:$0xff] %vm805, 0.0
          %912 = vst.msk [vmem:[#allocation2 + $0x350] sm:$0xff] %vm805, 0.0
          %913 = vst.msk [vmem:[#allocation2 + $0x358] sm:$0xff] %vm805, 0.0
          %914 = vst.msk [vmem:[#allocation2 + $0x360] sm:$0xff] %vm805, 0.0
          %915 = vst.msk [vmem:[#allocation2 + $0x368] sm:$0xff] %vm805, 0.0
          %916 = vst.msk [vmem:[#allocation2 + $0x370] sm:$0xff] %vm805, 0.0
          %917 = vst.msk [vmem:[#allocation2 + $0x378] sm:$0xff] %vm805, 0.0
          %918 = vst.msk [vmem:[#allocation2 + $0x380] sm:$0xff] %vm805, 0.0
          %919 = vst.msk [vmem:[#allocation2 + $0x388] sm:$0xff] %vm805, 0.0
          %920 = vst.msk [vmem:[#allocation2 + $0x390] sm:$0xff] %vm805, 0.0
          %921 = vst.msk [vmem:[#allocation2 + $0x398] sm:$0xff] %vm805, 0.0
          %922 = vst.msk [vmem:[#allocation2 + $0x3a0] sm:$0xff] %vm805, 0.0
          %923 = vst.msk [vmem:[#allocation2 + $0x3a8] sm:$0xff] %vm805, 0.0
          %924 = vst.msk [vmem:[#allocation2 + $0x3b0] sm:$0xff] %vm805, 0.0
          %925 = vst.msk [vmem:[#allocation2 + $0x3b8] sm:$0xff] %vm805, 0.0
          %926 = vst.msk [vmem:[#allocation2 + $0x3c0] sm:$0xff] %vm805, 0.0
          %927 = vst.msk [vmem:[#allocation2 + $0x3c8] sm:$0xff] %vm805, 0.0
          %928 = vst.msk [vmem:[#allocation2 + $0x3d0] sm:$0xff] %vm805, 0.0
          %929 = vst.msk [vmem:[#allocation2 + $0x3d8] sm:$0xff] %vm805, 0.0
          %930 = vst.msk [vmem:[#allocation2 + $0x3e0] sm:$0xff] %vm805, 0.0
          %931 = vst.msk [vmem:[#allocation2 + $0x3e8] sm:$0xff] %vm805, 0.0
          %932 = vst.msk [vmem:[#allocation2 + $0x3f0] sm:$0xff] %vm805, 0.0
          %933 = vst.msk [vmem:[#allocation2 + $0x3f8] sm:$0xff] %vm805, 0.0
        $region77: #{tpu_custom_call.1} parent=68 // pred_fallthru
          _
        %v934 = vld [vmem:[%s743] sm:$0xf]
        %v935 = vld [vmem:[%s743 + $0x4] sm:$0xf]
        %v936 = vld [vmem:[%s743 + $0x8] sm:$0xf]
        %v937 = vld [vmem:[%s743 + $0xc] sm:$0xf]
        %v938 = vld [vmem:[%s743 + $0x10] sm:$0xf]
        %v939 = vld [vmem:[%s743 + $0x14] sm:$0xf]
        %v940 = vld [vmem:[%s743 + $0x18] sm:$0xf]
        %v941 = vld [vmem:[%s743 + $0x1c] sm:$0xf]
        %v942 = vld [vmem:[%s743 + $0x20] sm:$0xf]
        %v943 = vld [vmem:[%s743 + $0x24] sm:$0xf]
        %v944 = vld [vmem:[%s743 + $0x28] sm:$0xf]
        %v945 = vld [vmem:[%s743 + $0x2c] sm:$0xf]
        %v946 = vld [vmem:[%s743 + $0x30] sm:$0xf]
        %v947 = vld [vmem:[%s743 + $0x34] sm:$0xf]
        %v948 = vld [vmem:[%s743 + $0x38] sm:$0xf]
        %v949 = vld [vmem:[%s743 + $0x3c] sm:$0xf]
        %v950 = vld [vmem:[%s743 + $0x40] sm:$0xf]
        %v951 = vld [vmem:[%s743 + $0x44] sm:$0xf]
        %v952 = vld [vmem:[%s743 + $0x48] sm:$0xf]
        %v953 = vld [vmem:[%s743 + $0x4c] sm:$0xf]
        %v954 = vld [vmem:[%s743 + $0x50] sm:$0xf]
        %v955 = vld [vmem:[%s743 + $0x54] sm:$0xf]
        %v956 = vld [vmem:[%s743 + $0x58] sm:$0xf]
        %v957 = vld [vmem:[%s743 + $0x5c] sm:$0xf]
        %v958 = vld [vmem:[%s743 + $0x60] sm:$0xf]
        %v959 = vld [vmem:[%s743 + $0x64] sm:$0xf]
        %v960 = vld [vmem:[%s743 + $0x68] sm:$0xf]
        %v961 = vld [vmem:[%s743 + $0x6c] sm:$0xf]
        %v962 = vld [vmem:[%s743 + $0x70] sm:$0xf]
        %v963 = vld [vmem:[%s743 + $0x74] sm:$0xf]
        %v964 = vld [vmem:[%s743 + $0x78] sm:$0xf]
        %v965 = vld [vmem:[%s743 + $0x7c] sm:$0xf]
        %s966 = scalar_lea.vmem %s743, 128 [#allocation3]
        %v967 = vld [vmem:[%s966] sm:$0xf]
        %v968 = vld [vmem:[%s966 + $0x4] sm:$0xf]
        %v969 = vld [vmem:[%s966 + $0x8] sm:$0xf]
        %v970 = vld [vmem:[%s966 + $0xc] sm:$0xf]
        %v971 = vld [vmem:[%s966 + $0x10] sm:$0xf]
        %v972 = vld [vmem:[%s966 + $0x14] sm:$0xf]
        %v973 = vld [vmem:[%s966 + $0x18] sm:$0xf]
        %v974 = vld [vmem:[%s966 + $0x1c] sm:$0xf]
        %v975 = vld [vmem:[%s966 + $0x20] sm:$0xf]
        %v976 = vld [vmem:[%s966 + $0x24] sm:$0xf]
        %v977 = vld [vmem:[%s966 + $0x28] sm:$0xf]
        %v978 = vld [vmem:[%s966 + $0x2c] sm:$0xf]
        %v979 = vld [vmem:[%s966 + $0x30] sm:$0xf]
        %v980 = vld [vmem:[%s966 + $0x34] sm:$0xf]
        %v981 = vld [vmem:[%s966 + $0x38] sm:$0xf]
        %v982 = vld [vmem:[%s966 + $0x3c] sm:$0xf]
        %v983 = vld [vmem:[%s966 + $0x40] sm:$0xf]
        %v984 = vld [vmem:[%s966 + $0x44] sm:$0xf]
        %v985 = vld [vmem:[%s966 + $0x48] sm:$0xf]
        %v986 = vld [vmem:[%s966 + $0x4c] sm:$0xf]
        %v987 = vld [vmem:[%s966 + $0x50] sm:$0xf]
        %v988 = vld [vmem:[%s966 + $0x54] sm:$0xf]
        %v989 = vld [vmem:[%s966 + $0x58] sm:$0xf]
        %v990 = vld [vmem:[%s966 + $0x5c] sm:$0xf]
        %v991 = vld [vmem:[%s966 + $0x60] sm:$0xf]
        %v992 = vld [vmem:[%s966 + $0x64] sm:$0xf]
        %v993 = vld [vmem:[%s966 + $0x68] sm:$0xf]
        %v994 = vld [vmem:[%s966 + $0x6c] sm:$0xf]
        %v995 = vld [vmem:[%s966 + $0x70] sm:$0xf]
        %v996 = vld [vmem:[%s966 + $0x74] sm:$0xf]
        %v997 = vld [vmem:[%s966 + $0x78] sm:$0xf]
        %v998 = vld [vmem:[%s966 + $0x7c] sm:$0xf]
        %s999 = scalar_lea.vmem %s743, 256 [#allocation3]
        %v1000 = vld [vmem:[%s999] sm:$0xf]
        %v1001 = vld [vmem:[%s999 + $0x4] sm:$0xf]
        %v1002 = vld [vmem:[%s999 + $0x8] sm:$0xf]
        %v1003 = vld [vmem:[%s999 + $0xc] sm:$0xf]
        %v1004 = vld [vmem:[%s999 + $0x10] sm:$0xf]
        %v1005 = vld [vmem:[%s999 + $0x14] sm:$0xf]
        %v1006 = vld [vmem:[%s999 + $0x18] sm:$0xf]
        %v1007 = vld [vmem:[%s999 + $0x1c] sm:$0xf]
        %v1008 = vld [vmem:[%s999 + $0x20] sm:$0xf]
        %v1009 = vld [vmem:[%s999 + $0x24] sm:$0xf]
        %v1010 = vld [vmem:[%s999 + $0x28] sm:$0xf]
        %v1011 = vld [vmem:[%s999 + $0x2c] sm:$0xf]
        %v1012 = vld [vmem:[%s999 + $0x30] sm:$0xf]
        %v1013 = vld [vmem:[%s999 + $0x34] sm:$0xf]
        %v1014 = vld [vmem:[%s999 + $0x38] sm:$0xf]
        %v1015 = vld [vmem:[%s999 + $0x3c] sm:$0xf]
        %v1016 = vld [vmem:[%s999 + $0x40] sm:$0xf]
        %v1017 = vld [vmem:[%s999 + $0x44] sm:$0xf]
        %v1018 = vld [vmem:[%s999 + $0x48] sm:$0xf]
        %v1019 = vld [vmem:[%s999 + $0x4c] sm:$0xf]
        %v1020 = vld [vmem:[%s999 + $0x50] sm:$0xf]
        %v1021 = vld [vmem:[%s999 + $0x54] sm:$0xf]
        %v1022 = vld [vmem:[%s999 + $0x58] sm:$0xf]
        %v1023 = vld [vmem:[%s999 + $0x5c] sm:$0xf]
        %v1024 = vld [vmem:[%s999 + $0x60] sm:$0xf]
        %v1025 = vld [vmem:[%s999 + $0x64] sm:$0xf]
        %v1026 = vld [vmem:[%s999 + $0x68] sm:$0xf]
        %v1027 = vld [vmem:[%s999 + $0x6c] sm:$0xf]
        %v1028 = vld [vmem:[%s999 + $0x70] sm:$0xf]
        %v1029 = vld [vmem:[%s999 + $0x74] sm:$0xf]
        %v1030 = vld [vmem:[%s999 + $0x78] sm:$0xf]
        %v1031 = vld [vmem:[%s999 + $0x7c] sm:$0xf]
        %s1032 = scalar_lea.vmem %s743, 384 [#allocation3]
        %v1033 = vld [vmem:[%s1032] sm:$0xf]
        %v1034 = vld [vmem:[%s1032 + $0x4] sm:$0xf]
        %v1035 = vld [vmem:[%s1032 + $0x8] sm:$0xf]
        %v1036 = vld [vmem:[%s1032 + $0xc] sm:$0xf]
        %v1037 = vld [vmem:[%s1032 + $0x10] sm:$0xf]
        %v1038 = vld [vmem:[%s1032 + $0x14] sm:$0xf]
        %v1039 = vld [vmem:[%s1032 + $0x18] sm:$0xf]
        %v1040 = vld [vmem:[%s1032 + $0x1c] sm:$0xf]
        %v1041 = vld [vmem:[%s1032 + $0x20] sm:$0xf]
        %v1042 = vld [vmem:[%s1032 + $0x24] sm:$0xf]
        %v1043 = vld [vmem:[%s1032 + $0x28] sm:$0xf]
        %v1044 = vld [vmem:[%s1032 + $0x2c] sm:$0xf]
        %v1045 = vld [vmem:[%s1032 + $0x30] sm:$0xf]
        %v1046 = vld [vmem:[%s1032 + $0x34] sm:$0xf]
        %v1047 = vld [vmem:[%s1032 + $0x38] sm:$0xf]
        %v1048 = vld [vmem:[%s1032 + $0x3c] sm:$0xf]
        %v1049 = vld [vmem:[%s1032 + $0x40] sm:$0xf]
        %v1050 = vld [vmem:[%s1032 + $0x44] sm:$0xf]
        %v1051 = vld [vmem:[%s1032 + $0x48] sm:$0xf]
        %v1052 = vld [vmem:[%s1032 + $0x4c] sm:$0xf]
        %v1053 = vld [vmem:[%s1032 + $0x50] sm:$0xf]
        %v1054 = vld [vmem:[%s1032 + $0x54] sm:$0xf]
        %v1055 = vld [vmem:[%s1032 + $0x58] sm:$0xf]
        %v1056 = vld [vmem:[%s1032 + $0x5c] sm:$0xf]
        %v1057 = vld [vmem:[%s1032 + $0x60] sm:$0xf]
        %v1058 = vld [vmem:[%s1032 + $0x64] sm:$0xf]
        %v1059 = vld [vmem:[%s1032 + $0x68] sm:$0xf]
        %v1060 = vld [vmem:[%s1032 + $0x6c] sm:$0xf]
        %v1061 = vld [vmem:[%s1032 + $0x70] sm:$0xf]
        %v1062 = vld [vmem:[%s1032 + $0x74] sm:$0xf]
        %v1063 = vld [vmem:[%s1032 + $0x78] sm:$0xf]
        %v1064 = vld [vmem:[%s1032 + $0x7c] sm:$0xf]
        %v1097 = vunpack.c.l.b16 %v934
        %v1098 = vunpack.c.l.b16 %v935
        %v1099 = vunpack.c.l.b16 %v936
        %v1100 = vunpack.c.l.b16 %v937
        %v1101 = vunpack.c.l.b16 %v938
        %v1102 = vunpack.c.l.b16 %v939
        %v1103 = vunpack.c.l.b16 %v940
        %v1104 = vunpack.c.l.b16 %v941
        %v1105 = vunpack.c.l.b16 %v942
        %v1106 = vunpack.c.l.b16 %v943
        %v1107 = vunpack.c.l.b16 %v944
        %v1108 = vunpack.c.l.b16 %v945
        %v1109 = vunpack.c.l.b16 %v946
        %v1110 = vunpack.c.l.b16 %v947
        %v1111 = vunpack.c.l.b16 %v948
        %v1112 = vunpack.c.l.b16 %v949
        %v1113 = vunpack.c.l.b16 %v950
        %v1114 = vunpack.c.l.b16 %v951
        %v1115 = vunpack.c.l.b16 %v952
        %v1116 = vunpack.c.l.b16 %v953
        %v1117 = vunpack.c.l.b16 %v954
        %v1118 = vunpack.c.l.b16 %v955
        %v1119 = vunpack.c.l.b16 %v956
        %v1120 = vunpack.c.l.b16 %v957
        %v1121 = vunpack.c.l.b16 %v958
        %v1122 = vunpack.c.l.b16 %v959
        %v1123 = vunpack.c.l.b16 %v960
        %v1124 = vunpack.c.l.b16 %v961
        %v1125 = vunpack.c.l.b16 %v962
        %v1126 = vunpack.c.l.b16 %v963
        %v1127 = vunpack.c.l.b16 %v964
        %v1128 = vunpack.c.l.b16 %v965
        %v1129 = vpack.c.b16 %v1098, %v1097
        %v1130 = vpack.c.b16 %v1100, %v1099
        %v1131 = vpack.c.b16 %v1102, %v1101
        %v1132 = vpack.c.b16 %v1104, %v1103
        %v1133 = vpack.c.b16 %v1106, %v1105
        %v1134 = vpack.c.b16 %v1108, %v1107
        %v1135 = vpack.c.b16 %v1110, %v1109
        %v1136 = vpack.c.b16 %v1112, %v1111
        %v1137 = vpack.c.b16 %v1114, %v1113
        %v1138 = vpack.c.b16 %v1116, %v1115
        %v1139 = vpack.c.b16 %v1118, %v1117
        %v1140 = vpack.c.b16 %v1120, %v1119
        %v1141 = vpack.c.b16 %v1122, %v1121
        %v1142 = vpack.c.b16 %v1124, %v1123
        %v1143 = vpack.c.b16 %v1126, %v1125
        %v1144 = vpack.c.b16 %v1128, %v1127
        %v1177 = vunpack.c.l.b16 %v967
        %v1178 = vunpack.c.l.b16 %v968
        %v1179 = vunpack.c.l.b16 %v969
        %v1180 = vunpack.c.l.b16 %v970
        %v1181 = vunpack.c.l.b16 %v971
        %v1182 = vunpack.c.l.b16 %v972
        %v1183 = vunpack.c.l.b16 %v973
        %v1184 = vunpack.c.l.b16 %v974
        %v1185 = vunpack.c.l.b16 %v975
        %v1186 = vunpack.c.l.b16 %v976
        %v1187 = vunpack.c.l.b16 %v977
        %v1188 = vunpack.c.l.b16 %v978
        %v1189 = vunpack.c.l.b16 %v979
        %v1190 = vunpack.c.l.b16 %v980
        %v1191 = vunpack.c.l.b16 %v981
        %v1192 = vunpack.c.l.b16 %v982
        %v1193 = vunpack.c.l.b16 %v983
        %v1194 = vunpack.c.l.b16 %v984
        %v1195 = vunpack.c.l.b16 %v985
        %v1196 = vunpack.c.l.b16 %v986
        %v1197 = vunpack.c.l.b16 %v987
        %v1198 = vunpack.c.l.b16 %v988
        %v1199 = vunpack.c.l.b16 %v989
        %v1200 = vunpack.c.l.b16 %v990
        %v1201 = vunpack.c.l.b16 %v991
        %v1202 = vunpack.c.l.b16 %v992
        %v1203 = vunpack.c.l.b16 %v993
        %v1204 = vunpack.c.l.b16 %v994
        %v1205 = vunpack.c.l.b16 %v995
        %v1206 = vunpack.c.l.b16 %v996
        %v1207 = vunpack.c.l.b16 %v997
        %v1208 = vunpack.c.l.b16 %v998
        %v1209 = vpack.c.b16 %v1178, %v1177
        %v1210 = vpack.c.b16 %v1180, %v1179
        %v1211 = vpack.c.b16 %v1182, %v1181
        %v1212 = vpack.c.b16 %v1184, %v1183
        %v1213 = vpack.c.b16 %v1186, %v1185
        %v1214 = vpack.c.b16 %v1188, %v1187
        %v1215 = vpack.c.b16 %v1190, %v1189
        %v1216 = vpack.c.b16 %v1192, %v1191
        %v1217 = vpack.c.b16 %v1194, %v1193
        %v1218 = vpack.c.b16 %v1196, %v1195
        %v1219 = vpack.c.b16 %v1198, %v1197
        %v1220 = vpack.c.b16 %v1200, %v1199
        %v1221 = vpack.c.b16 %v1202, %v1201
        %v1222 = vpack.c.b16 %v1204, %v1203
        %v1223 = vpack.c.b16 %v1206, %v1205
        %v1224 = vpack.c.b16 %v1208, %v1207
        %v1257 = vunpack.c.l.b16 %v1000
        %v1258 = vunpack.c.l.b16 %v1001
        %v1259 = vunpack.c.l.b16 %v1002
        %v1260 = vunpack.c.l.b16 %v1003
        %v1261 = vunpack.c.l.b16 %v1004
        %v1262 = vunpack.c.l.b16 %v1005
        %v1263 = vunpack.c.l.b16 %v1006
        %v1264 = vunpack.c.l.b16 %v1007
        %v1265 = vunpack.c.l.b16 %v1008
        %v1266 = vunpack.c.l.b16 %v1009
        %v1267 = vunpack.c.l.b16 %v1010
        %v1268 = vunpack.c.l.b16 %v1011
        %v1269 = vunpack.c.l.b16 %v1012
        %v1270 = vunpack.c.l.b16 %v1013
        %v1271 = vunpack.c.l.b16 %v1014
        %v1272 = vunpack.c.l.b16 %v1015
        %v1273 = vunpack.c.l.b16 %v1016
        %v1274 = vunpack.c.l.b16 %v1017
        %v1275 = vunpack.c.l.b16 %v1018
        %v1276 = vunpack.c.l.b16 %v1019
        %v1277 = vunpack.c.l.b16 %v1020
        %v1278 = vunpack.c.l.b16 %v1021
        %v1279 = vunpack.c.l.b16 %v1022
        %v1280 = vunpack.c.l.b16 %v1023
        %v1281 = vunpack.c.l.b16 %v1024
        %v1282 = vunpack.c.l.b16 %v1025
        %v1283 = vunpack.c.l.b16 %v1026
        %v1284 = vunpack.c.l.b16 %v1027
        %v1285 = vunpack.c.l.b16 %v1028
        %v1286 = vunpack.c.l.b16 %v1029
        %v1287 = vunpack.c.l.b16 %v1030
        %v1288 = vunpack.c.l.b16 %v1031
        %v1289 = vpack.c.b16 %v1258, %v1257
        %v1290 = vpack.c.b16 %v1260, %v1259
        %v1291 = vpack.c.b16 %v1262, %v1261
        %v1292 = vpack.c.b16 %v1264, %v1263
        %v1293 = vpack.c.b16 %v1266, %v1265
        %v1294 = vpack.c.b16 %v1268, %v1267
        %v1295 = vpack.c.b16 %v1270, %v1269
        %v1296 = vpack.c.b16 %v1272, %v1271
        %v1297 = vpack.c.b16 %v1274, %v1273
        %v1298 = vpack.c.b16 %v1276, %v1275
        %v1299 = vpack.c.b16 %v1278, %v1277
        %v1300 = vpack.c.b16 %v1280, %v1279
        %v1301 = vpack.c.b16 %v1282, %v1281
        %v1302 = vpack.c.b16 %v1284, %v1283
        %v1303 = vpack.c.b16 %v1286, %v1285
        %v1304 = vpack.c.b16 %v1288, %v1287
        %v1337 = vunpack.c.l.b16 %v1033
        %v1338 = vunpack.c.l.b16 %v1034
        %v1339 = vunpack.c.l.b16 %v1035
        %v1340 = vunpack.c.l.b16 %v1036
        %v1341 = vunpack.c.l.b16 %v1037
        %v1342 = vunpack.c.l.b16 %v1038
        %v1343 = vunpack.c.l.b16 %v1039
        %v1344 = vunpack.c.l.b16 %v1040
        %v1345 = vunpack.c.l.b16 %v1041
        %v1346 = vunpack.c.l.b16 %v1042
        %v1347 = vunpack.c.l.b16 %v1043
        %v1348 = vunpack.c.l.b16 %v1044
        %v1349 = vunpack.c.l.b16 %v1045
        %v1350 = vunpack.c.l.b16 %v1046
        %v1351 = vunpack.c.l.b16 %v1047
        %v1352 = vunpack.c.l.b16 %v1048
        %v1353 = vunpack.c.l.b16 %v1049
        %v1354 = vunpack.c.l.b16 %v1050
        %v1355 = vunpack.c.l.b16 %v1051
        %v1356 = vunpack.c.l.b16 %v1052
        %v1357 = vunpack.c.l.b16 %v1053
        %v1358 = vunpack.c.l.b16 %v1054
        %v1359 = vunpack.c.l.b16 %v1055
        %v1360 = vunpack.c.l.b16 %v1056
        %v1361 = vunpack.c.l.b16 %v1057
        %v1362 = vunpack.c.l.b16 %v1058
        %v1363 = vunpack.c.l.b16 %v1059
        %v1364 = vunpack.c.l.b16 %v1060
        %v1365 = vunpack.c.l.b16 %v1061
        %v1366 = vunpack.c.l.b16 %v1062
        %v1367 = vunpack.c.l.b16 %v1063
        %v1368 = vunpack.c.l.b16 %v1064
        %v1369 = vpack.c.b16 %v1338, %v1337
        %v1370 = vpack.c.b16 %v1340, %v1339
        %v1371 = vpack.c.b16 %v1342, %v1341
        %v1372 = vpack.c.b16 %v1344, %v1343
        %v1373 = vpack.c.b16 %v1346, %v1345
        %v1374 = vpack.c.b16 %v1348, %v1347
        %v1375 = vpack.c.b16 %v1350, %v1349
        %v1376 = vpack.c.b16 %v1352, %v1351
        %v1377 = vpack.c.b16 %v1354, %v1353
        %v1378 = vpack.c.b16 %v1356, %v1355
        %v1379 = vpack.c.b16 %v1358, %v1357
        %v1380 = vpack.c.b16 %v1360, %v1359
        %v1381 = vpack.c.b16 %v1362, %v1361
        %v1382 = vpack.c.b16 %v1364, %v1363
        %v1383 = vpack.c.b16 %v1366, %v1365
        %v1384 = vpack.c.b16 %v1368, %v1367
        %v1385 = vld [vmem:[#allocation2] sm:$0xff]
        %v1386 = vld [vmem:[#allocation2 + $0x8] sm:$0xff]
        %v1387 = vld [vmem:[#allocation2 + $0x10] sm:$0xff]
        %v1388 = vld [vmem:[#allocation2 + $0x18] sm:$0xff]
        %v1389 = vld [vmem:[#allocation2 + $0x20] sm:$0xff]
        %v1390 = vld [vmem:[#allocation2 + $0x28] sm:$0xff]
        %v1391 = vld [vmem:[#allocation2 + $0x30] sm:$0xff]
        %v1392 = vld [vmem:[#allocation2 + $0x38] sm:$0xff]
        %v1393 = vld [vmem:[#allocation2 + $0x40] sm:$0xff]
        %v1394 = vld [vmem:[#allocation2 + $0x48] sm:$0xff]
        %v1395 = vld [vmem:[#allocation2 + $0x50] sm:$0xff]
        %v1396 = vld [vmem:[#allocation2 + $0x58] sm:$0xff]
        %v1397 = vld [vmem:[#allocation2 + $0x60] sm:$0xff]
        %v1398 = vld [vmem:[#allocation2 + $0x68] sm:$0xff]
        %v1399 = vld [vmem:[#allocation2 + $0x70] sm:$0xff]
        %v1400 = vld [vmem:[#allocation2 + $0x78] sm:$0xff]
        %v1401 = vld [vmem:[#allocation2 + $0x80] sm:$0xff]
        %v1402 = vld [vmem:[#allocation2 + $0x88] sm:$0xff]
        %v1403 = vld [vmem:[#allocation2 + $0x90] sm:$0xff]
        %v1404 = vld [vmem:[#allocation2 + $0x98] sm:$0xff]
        %v1405 = vld [vmem:[#allocation2 + $0xa0] sm:$0xff]
        %v1406 = vld [vmem:[#allocation2 + $0xa8] sm:$0xff]
        %v1407 = vld [vmem:[#allocation2 + $0xb0] sm:$0xff]
        %v1408 = vld [vmem:[#allocation2 + $0xb8] sm:$0xff]
        %v1409 = vld [vmem:[#allocation2 + $0xc0] sm:$0xff]
        %v1410 = vld [vmem:[#allocation2 + $0xc8] sm:$0xff]
        %v1411 = vld [vmem:[#allocation2 + $0xd0] sm:$0xff]
        %v1412 = vld [vmem:[#allocation2 + $0xd8] sm:$0xff]
        %v1413 = vld [vmem:[#allocation2 + $0xe0] sm:$0xff]
        %v1414 = vld [vmem:[#allocation2 + $0xe8] sm:$0xff]
        %v1415 = vld [vmem:[#allocation2 + $0xf0] sm:$0xff]
        %v1416 = vld [vmem:[#allocation2 + $0xf8] sm:$0xff]
        %v1417 = vld [vmem:[#allocation2 + $0x100] sm:$0xff]
        %v1418 = vld [vmem:[#allocation2 + $0x108] sm:$0xff]
        %v1419 = vld [vmem:[#allocation2 + $0x110] sm:$0xff]
        %v1420 = vld [vmem:[#allocation2 + $0x118] sm:$0xff]
        %v1421 = vld [vmem:[#allocation2 + $0x120] sm:$0xff]
        %v1422 = vld [vmem:[#allocation2 + $0x128] sm:$0xff]
        %v1423 = vld [vmem:[#allocation2 + $0x130] sm:$0xff]
        %v1424 = vld [vmem:[#allocation2 + $0x138] sm:$0xff]
        %v1425 = vld [vmem:[#allocation2 + $0x140] sm:$0xff]
        %v1426 = vld [vmem:[#allocation2 + $0x148] sm:$0xff]
        %v1427 = vld [vmem:[#allocation2 + $0x150] sm:$0xff]
        %v1428 = vld [vmem:[#allocation2 + $0x158] sm:$0xff]
        %v1429 = vld [vmem:[#allocation2 + $0x160] sm:$0xff]
        %v1430 = vld [vmem:[#allocation2 + $0x168] sm:$0xff]
        %v1431 = vld [vmem:[#allocation2 + $0x170] sm:$0xff]
        %v1432 = vld [vmem:[#allocation2 + $0x178] sm:$0xff]
        %v1433 = vld [vmem:[#allocation2 + $0x180] sm:$0xff]
        %v1434 = vld [vmem:[#allocation2 + $0x188] sm:$0xff]
        %v1435 = vld [vmem:[#allocation2 + $0x190] sm:$0xff]
        %v1436 = vld [vmem:[#allocation2 + $0x198] sm:$0xff]
        %v1437 = vld [vmem:[#allocation2 + $0x1a0] sm:$0xff]
        %v1438 = vld [vmem:[#allocation2 + $0x1a8] sm:$0xff]
        %v1439 = vld [vmem:[#allocation2 + $0x1b0] sm:$0xff]
        %v1440 = vld [vmem:[#allocation2 + $0x1b8] sm:$0xff]
        %v1441 = vld [vmem:[#allocation2 + $0x1c0] sm:$0xff]
        %v1442 = vld [vmem:[#allocation2 + $0x1c8] sm:$0xff]
        %v1443 = vld [vmem:[#allocation2 + $0x1d0] sm:$0xff]
        %v1444 = vld [vmem:[#allocation2 + $0x1d8] sm:$0xff]
        %v1445 = vld [vmem:[#allocation2 + $0x1e0] sm:$0xff]
        %v1446 = vld [vmem:[#allocation2 + $0x1e8] sm:$0xff]
        %v1447 = vld [vmem:[#allocation2 + $0x1f0] sm:$0xff]
        %v1448 = vld [vmem:[#allocation2 + $0x1f8] sm:$0xff]
        %v1449 = vld [vmem:[#allocation2 + $0x200] sm:$0xff]
        %v1450 = vld [vmem:[#allocation2 + $0x208] sm:$0xff]
        %v1451 = vld [vmem:[#allocation2 + $0x210] sm:$0xff]
        %v1452 = vld [vmem:[#allocation2 + $0x218] sm:$0xff]
        %v1453 = vld [vmem:[#allocation2 + $0x220] sm:$0xff]
        %v1454 = vld [vmem:[#allocation2 + $0x228] sm:$0xff]
        %v1455 = vld [vmem:[#allocation2 + $0x230] sm:$0xff]
        %v1456 = vld [vmem:[#allocation2 + $0x238] sm:$0xff]
        %v1457 = vld [vmem:[#allocation2 + $0x240] sm:$0xff]
        %v1458 = vld [vmem:[#allocation2 + $0x248] sm:$0xff]
        %v1459 = vld [vmem:[#allocation2 + $0x250] sm:$0xff]
        %v1460 = vld [vmem:[#allocation2 + $0x258] sm:$0xff]
        %v1461 = vld [vmem:[#allocation2 + $0x260] sm:$0xff]
        %v1462 = vld [vmem:[#allocation2 + $0x268] sm:$0xff]
        %v1463 = vld [vmem:[#allocation2 + $0x270] sm:$0xff]
        %v1464 = vld [vmem:[#allocation2 + $0x278] sm:$0xff]
        %v1465 = vld [vmem:[#allocation2 + $0x280] sm:$0xff]
        %v1466 = vld [vmem:[#allocation2 + $0x288] sm:$0xff]
        %v1467 = vld [vmem:[#allocation2 + $0x290] sm:$0xff]
        %v1468 = vld [vmem:[#allocation2 + $0x298] sm:$0xff]
        %v1469 = vld [vmem:[#allocation2 + $0x2a0] sm:$0xff]
        %v1470 = vld [vmem:[#allocation2 + $0x2a8] sm:$0xff]
        %v1471 = vld [vmem:[#allocation2 + $0x2b0] sm:$0xff]
        %v1472 = vld [vmem:[#allocation2 + $0x2b8] sm:$0xff]
        %v1473 = vld [vmem:[#allocation2 + $0x2c0] sm:$0xff]
        %v1474 = vld [vmem:[#allocation2 + $0x2c8] sm:$0xff]
        %v1475 = vld [vmem:[#allocation2 + $0x2d0] sm:$0xff]
        %v1476 = vld [vmem:[#allocation2 + $0x2d8] sm:$0xff]
        %v1477 = vld [vmem:[#allocation2 + $0x2e0] sm:$0xff]
        %v1478 = vld [vmem:[#allocation2 + $0x2e8] sm:$0xff]
        %v1479 = vld [vmem:[#allocation2 + $0x2f0] sm:$0xff]
        %v1480 = vld [vmem:[#allocation2 + $0x2f8] sm:$0xff]
        %v1481 = vld [vmem:[#allocation2 + $0x300] sm:$0xff]
        %v1482 = vld [vmem:[#allocation2 + $0x308] sm:$0xff]
        %v1483 = vld [vmem:[#allocation2 + $0x310] sm:$0xff]
        %v1484 = vld [vmem:[#allocation2 + $0x318] sm:$0xff]
        %v1485 = vld [vmem:[#allocation2 + $0x320] sm:$0xff]
        %v1486 = vld [vmem:[#allocation2 + $0x328] sm:$0xff]
        %v1487 = vld [vmem:[#allocation2 + $0x330] sm:$0xff]
        %v1488 = vld [vmem:[#allocation2 + $0x338] sm:$0xff]
        %v1489 = vld [vmem:[#allocation2 + $0x340] sm:$0xff]
        %v1490 = vld [vmem:[#allocation2 + $0x348] sm:$0xff]
        %v1491 = vld [vmem:[#allocation2 + $0x350] sm:$0xff]
        %v1492 = vld [vmem:[#allocation2 + $0x358] sm:$0xff]
        %v1493 = vld [vmem:[#allocation2 + $0x360] sm:$0xff]
        %v1494 = vld [vmem:[#allocation2 + $0x368] sm:$0xff]
        %v1495 = vld [vmem:[#allocation2 + $0x370] sm:$0xff]
        %v1496 = vld [vmem:[#allocation2 + $0x378] sm:$0xff]
        %v1497 = vld [vmem:[#allocation2 + $0x380] sm:$0xff]
        %v1498 = vld [vmem:[#allocation2 + $0x388] sm:$0xff]
        %v1499 = vld [vmem:[#allocation2 + $0x390] sm:$0xff]
        %v1500 = vld [vmem:[#allocation2 + $0x398] sm:$0xff]
        %v1501 = vld [vmem:[#allocation2 + $0x3a0] sm:$0xff]
        %v1502 = vld [vmem:[#allocation2 + $0x3a8] sm:$0xff]
        %v1503 = vld [vmem:[#allocation2 + $0x3b0] sm:$0xff]
        %v1504 = vld [vmem:[#allocation2 + $0x3b8] sm:$0xff]
        %v1505 = vld [vmem:[#allocation2 + $0x3c0] sm:$0xff]
        %v1506 = vld [vmem:[#allocation2 + $0x3c8] sm:$0xff]
        %v1507 = vld [vmem:[#allocation2 + $0x3d0] sm:$0xff]
        %v1508 = vld [vmem:[#allocation2 + $0x3d8] sm:$0xff]
        %v1509 = vld [vmem:[#allocation2 + $0x3e0] sm:$0xff]
        %v1510 = vld [vmem:[#allocation2 + $0x3e8] sm:$0xff]
        %v1511 = vld [vmem:[#allocation2 + $0x3f0] sm:$0xff]
        %v1512 = vld [vmem:[#allocation2 + $0x3f8] sm:$0xff]
        %v1513 = vld [vmem:[%s786] sm:$0xf]
        %v1514 = vld [vmem:[%s786 + $0x4] sm:$0xf]
        %v1515 = vld [vmem:[%s786 + $0x8] sm:$0xf]
        %v1516 = vld [vmem:[%s786 + $0xc] sm:$0x3]
        %v1521 = vunpack.c.l.b16 %v1513
        %v1522 = vunpack.c.l.b16 %v1514
        %v1523 = vunpack.c.l.b16 %v1515
        %v1524 = vunpack.c.l.b16 %v1516
        %v1525 = vpack.c.b16 %v1522, %v1521
        %v1526 = vpack.c.b16 %v1524, %v1523
        %vm1528 = vcmask 220160
        %v1530 = vsel %vm1528, %v1129, 0
        %v1533 = vsel %vm1528, %v1130, 0
        %v1536 = vsel %vm1528, %v1131, 0
        %v1539 = vsel %vm1528, %v1132, 0
        %v1542 = vsel %vm1528, %v1133, 0
        %v1545 = vsel %vm1528, %v1134, 0
        %v1548 = vsel %vm1528, %v1135, 0
        %v1551 = vsel %vm1528, %v1136, 0
        %v1554 = vsel %vm1528, %v1137, 0
        %v1557 = vsel %vm1528, %v1138, 0
        %v1560 = vsel %vm1528, %v1139, 0
        %v1563 = vsel %vm1528, %v1140, 0
        %v1566 = vsel %vm1528, %v1141, 0
        %v1569 = vsel %vm1528, %v1142, 0
        %v1572 = vsel %vm1528, %v1143, 0
        %v1575 = vsel %vm1528, %v1144, 0
        %v1578 = vsel %vm1528, %v1209, 0
        %v1581 = vsel %vm1528, %v1210, 0
        %v1584 = vsel %vm1528, %v1211, 0
        %v1587 = vsel %vm1528, %v1212, 0
        %v1590 = vsel %vm1528, %v1213, 0
        %v1593 = vsel %vm1528, %v1214, 0
        %v1596 = vsel %vm1528, %v1215, 0
        %v1599 = vsel %vm1528, %v1216, 0
        %v1602 = vsel %vm1528, %v1217, 0
        %v1605 = vsel %vm1528, %v1218, 0
        %v1608 = vsel %vm1528, %v1219, 0
        %v1611 = vsel %vm1528, %v1220, 0
        %v1614 = vsel %vm1528, %v1221, 0
        %v1617 = vsel %vm1528, %v1222, 0
        %v1620 = vsel %vm1528, %v1223, 0
        %v1623 = vsel %vm1528, %v1224, 0
        %v1626 = vsel %vm1528, %v1289, 0
        %v1629 = vsel %vm1528, %v1290, 0
        %v1632 = vsel %vm1528, %v1291, 0
        %v1635 = vsel %vm1528, %v1292, 0
        %v1638 = vsel %vm1528, %v1293, 0
        %v1641 = vsel %vm1528, %v1294, 0
        %v1644 = vsel %vm1528, %v1295, 0
        %v1647 = vsel %vm1528, %v1296, 0
        %v1650 = vsel %vm1528, %v1297, 0
        %v1653 = vsel %vm1528, %v1298, 0
        %v1656 = vsel %vm1528, %v1299, 0
        %v1659 = vsel %vm1528, %v1300, 0
        %v1662 = vsel %vm1528, %v1301, 0
        %v1665 = vsel %vm1528, %v1302, 0
        %v1668 = vsel %vm1528, %v1303, 0
        %v1671 = vsel %vm1528, %v1304, 0
        %v1674 = vsel %vm1528, %v1369, 0
        %v1677 = vsel %vm1528, %v1370, 0
        %v1680 = vsel %vm1528, %v1371, 0
        %v1683 = vsel %vm1528, %v1372, 0
        %v1686 = vsel %vm1528, %v1373, 0
        %v1689 = vsel %vm1528, %v1374, 0
        %v1692 = vsel %vm1528, %v1375, 0
        %v1695 = vsel %vm1528, %v1376, 0
        %v1698 = vsel %vm1528, %v1377, 0
        %v1701 = vsel %vm1528, %v1378, 0
        %v1704 = vsel %vm1528, %v1379, 0
        %v1707 = vsel %vm1528, %v1380, 0
        %v1710 = vsel %vm1528, %v1381, 0
        %v1713 = vsel %vm1528, %v1382, 0
        %v1716 = vsel %vm1528, %v1383, 0
        %v1719 = vsel %vm1528, %v1384, 0
        %vm1721 = vcmask 1044480
        %vm1722 = vcmask 1045504
        %v1723 = vsel %vm1721, 4294967295, 65535
        %v1724 = vsel %vm1722, %v1723, 0
        %v1726 = vand.u32 %v1526, %v1724
        %1728 = vmatprep.subr.bf16.mxu0 0
        %1729 = vmatpush1.bf16.msra.mxu0 %v1525
        %1730 = vmatprep.subr.bf16.mxu0 0
        %1731 = vmatpush1.bf16.msra.mxu0 %v1726
        %1732 = vmatprep.subr.bf16.mxu0 0
        %1733 = vmatpush1.bf16.msra.mxu0 0
        %1734 = vmatprep.subr.bf16.mxu0 0
        %1735 = vmatpush1.bf16.msra.mxu0 0
        %1736 = vmatprep.subr.bf16.mxu0 0
        %1737 = vmatpush1.bf16.msra.mxu0 0
        %1738 = vmatprep.subr.bf16.mxu0 0
        %1739 = vmatpush1.bf16.msra.mxu0 0
        %1740 = vmatprep.subr.bf16.mxu0 0
        %1741 = vmatpush1.bf16.msra.mxu0 0
        %1742 = vmatprep.subr.bf16.mxu0 0
        %1743 = vmatpush1.bf16.msra.mxu0 0
        %1744 = vmatprep.subr.bf16.mxu0 0
        %1745 = vmatpush1.bf16.msra.mxu0 0
        %1746 = vmatprep.subr.bf16.mxu0 0
        %1747 = vmatpush1.bf16.msra.mxu0 0
        %1748 = vmatprep.subr.bf16.mxu0 0
        %1749 = vmatpush1.bf16.msra.mxu0 0
        %1750 = vmatprep.subr.bf16.mxu0 0
        %1751 = vmatpush1.bf16.msra.mxu0 0
        %1752 = vmatprep.subr.bf16.mxu0 0
        %1753 = vmatpush1.bf16.msra.mxu0 0
        %1754 = vmatprep.subr.bf16.mxu0 0
        %1755 = vmatpush1.bf16.msra.mxu0 0
        %1756 = vmatprep.subr.bf16.mxu0 0
        %1757 = vmatpush1.bf16.msra.mxu0 0
        %1758 = vmatprep.subr.bf16.mxu0 0
        %1759 = vmatpush1.bf16.msra.mxu0 0
        %1760 = vmatprep.mubr.bf16.mxu0 0
        %1761 = vmatmul.mubr.bf16.gmra.mrb[0].mxu0 %v1530
        %v1762 = vpop.f32.mrb[0].mxu0
        %v1763 = vadd.f32 0.0, %v1762
        %v1764 = vpop.f32.mrb[0].mxu0
        %v1765 = vpop.f32.mrb[0].mxu0
        %v1766 = vadd.f32 0.0, %v1765
        %v1767 = vpop.f32.mrb[0].mxu0
        %1768 = vmatprep.mubr.bf16.mxu0 0
        %1769 = vmatmul.mubr.bf16.gmra.mrb[0].mxu0 %v1533
        %v1770 = vpop.f32.mrb[0].mxu0
        %v1771 = vadd.f32 0.0, %v1770
        %v1772 = vpop.f32.mrb[0].mxu0
        %v1773 = vpop.f32.mrb[0].mxu0
        %v1774 = vadd.f32 0.0, %v1773
        %v1775 = vpop.f32.mrb[0].mxu0
        %1776 = vmatprep.mubr.bf16.mxu0 0
        %1777 = vmatmul.mubr.bf16.gmra.mrb[0].mxu0 %v1536
        %v1778 = vpop.f32.mrb[0].mxu0
        %v1779 = vadd.f32 0.0, %v1778
        %v1780 = vpop.f32.mrb[0].mxu0
        %v1781 = vpop.f32.mrb[0].mxu0
        %v1782 = vadd.f32 0.0, %v1781
        %v1783 = vpop.f32.mrb[0].mxu0
        %1784 = vmatprep.mubr.bf16.mxu0 0
        %1785 = vmatmul.mubr.bf16.gmra.mrb[0].mxu0 %v1539
        %v1786 = vpop.f32.mrb[0].mxu0
        %v1787 = vadd.f32 0.0, %v1786
        %v1788 = vpop.f32.mrb[0].mxu0
        %v1789 = vpop.f32.mrb[0].mxu0
        %v1790 = vadd.f32 0.0, %v1789
        %v1791 = vpop.f32.mrb[0].mxu0
        %1792 = vmatprep.mubr.bf16.mxu0 0
        %1793 = vmatmul.mubr.bf16.gmra.mrb[0].mxu0 %v1542
        %v1794 = vpop.f32.mrb[0].mxu0
        %v1795 = vadd.f32 0.0, %v1794
        %v1796 = vpop.f32.mrb[0].mxu0
        %v1797 = vpop.f32.mrb[0].mxu0
        %v1798 = vadd.f32 0.0, %v1797
        %v1799 = vpop.f32.mrb[0].mxu0
        %1800 = vmatprep.mubr.bf16.mxu0 0
        %1801 = vmatmul.mubr.bf16.gmra.mrb[0].mxu0 %v1545
        %v1802 = vpop.f32.mrb[0].mxu0
        %v1803 = vadd.f32 0.0, %v1802
        %v1804 = vpop.f32.mrb[0].mxu0
        %v1805 = vpop.f32.mrb[0].mxu0
        %v1806 = vadd.f32 0.0, %v1805
        %v1807 = vpop.f32.mrb[0].mxu0
        %1808 = vmatprep.mubr.bf16.mxu0 0
        %1809 = vmatmul.mubr.bf16.gmra.mrb[0].mxu0 %v1548
        %v1810 = vpop.f32.mrb[0].mxu0
        %v1811 = vadd.f32 0.0, %v1810
        %v1812 = vpop.f32.mrb[0].mxu0
        %v1813 = vpop.f32.mrb[0].mxu0
        %v1814 = vadd.f32 0.0, %v1813
        %v1815 = vpop.f32.mrb[0].mxu0
        %1816 = vmatprep.mubr.bf16.mxu0 0
        %1817 = vmatmul.mubr.bf16.gmra.mrb[0].mxu0 %v1551
        %v1818 = vpop.f32.mrb[0].mxu0
        %v1819 = vadd.f32 0.0, %v1818
        %v1820 = vpop.f32.mrb[0].mxu0
        %v1821 = vpop.f32.mrb[0].mxu0
        %v1822 = vadd.f32 0.0, %v1821
        %v1823 = vpop.f32.mrb[0].mxu0
        %1824 = vmatprep.mubr.bf16.mxu0 0
        %1825 = vmatmul.mubr.bf16.gmra.mrb[0].mxu0 %v1554
        %v1826 = vpop.f32.mrb[0].mxu0
        %v1827 = vadd.f32 0.0, %v1826
        %v1828 = vpop.f32.mrb[0].mxu0
        %v1829 = vpop.f32.mrb[0].mxu0
        %v1830 = vadd.f32 0.0, %v1829
        %v1831 = vpop.f32.mrb[0].mxu0
        %1832 = vmatprep.mubr.bf16.mxu0 0
        %1833 = vmatmul.mubr.bf16.gmra.mrb[0].mxu0 %v1557
        %v1834 = vpop.f32.mrb[0].mxu0
        %v1835 = vadd.f32 0.0, %v1834
        %v1836 = vpop.f32.mrb[0].mxu0
        %v1837 = vpop.f32.mrb[0].mxu0
        %v1838 = vadd.f32 0.0, %v1837
        %v1839 = vpop.f32.mrb[0].mxu0
        %1840 = vmatprep.mubr.bf16.mxu0 0
        %1841 = vmatmul.mubr.bf16.gmra.mrb[0].mxu0 %v1560
        %v1842 = vpop.f32.mrb[0].mxu0
        %v1843 = vadd.f32 0.0, %v1842
        %v1844 = vpop.f32.mrb[0].mxu0
        %v1845 = vpop.f32.mrb[0].mxu0
        %v1846 = vadd.f32 0.0, %v1845
        %v1847 = vpop.f32.mrb[0].mxu0
        %1848 = vmatprep.mubr.bf16.mxu0 0
        %1849 = vmatmul.mubr.bf16.gmra.mrb[0].mxu0 %v1563
        %v1850 = vpop.f32.mrb[0].mxu0
        %v1851 = vadd.f32 0.0, %v1850
        %v1852 = vpop.f32.mrb[0].mxu0
        %v1853 = vpop.f32.mrb[0].mxu0
        %v1854 = vadd.f32 0.0, %v1853
        %v1855 = vpop.f32.mrb[0].mxu0
        %1856 = vmatprep.mubr.bf16.mxu0 0
        %1857 = vmatmul.mubr.bf16.gmra.mrb[0].mxu0 %v1566
        %v1858 = vpop.f32.mrb[0].mxu0
        %v1859 = vadd.f32 0.0, %v1858
        %v1860 = vpop.f32.mrb[0].mxu0
        %v1861 = vpop.f32.mrb[0].mxu0
        %v1862 = vadd.f32 0.0, %v1861
        %v1863 = vpop.f32.mrb[0].mxu0
        %1864 = vmatprep.mubr.bf16.mxu0 0
        %1865 = vmatmul.mubr.bf16.gmra.mrb[0].mxu0 %v1569
        %v1866 = vpop.f32.mrb[0].mxu0
        %v1867 = vadd.f32 0.0, %v1866
        %v1868 = vpop.f32.mrb[0].mxu0
        %v1869 = vpop.f32.mrb[0].mxu0
        %v1870 = vadd.f32 0.0, %v1869
        %v1871 = vpop.f32.mrb[0].mxu0
        %1872 = vmatprep.mubr.bf16.mxu0 0
        %1873 = vmatmul.mubr.bf16.gmra.mrb[0].mxu0 %v1572
        %v1874 = vpop.f32.mrb[0].mxu0
        %v1875 = vadd.f32 0.0, %v1874
        %v1876 = vpop.f32.mrb[0].mxu0
        %v1877 = vpop.f32.mrb[0].mxu0
        %v1878 = vadd.f32 0.0, %v1877
        %v1879 = vpop.f32.mrb[0].mxu0
        %1880 = vmatprep.mubr.bf16.mxu0 0
        %1881 = vmatmul.mubr.bf16.gmra.mrb[0].mxu0 %v1575
        %v1882 = vpop.f32.mrb[0].mxu0
        %v1883 = vadd.f32 0.0, %v1882
        %v1884 = vpop.f32.mrb[0].mxu0
        %v1885 = vpop.f32.mrb[0].mxu0
        %v1886 = vadd.f32 0.0, %v1885
        %v1887 = vpop.f32.mrb[0].mxu0
        %1888 = vmatprep.mubr.bf16.mxu0 0
        %1889 = vmatmul.mubr.bf16.gmra.mrb[0].mxu0 %v1578
        %v1890 = vpop.f32.mrb[0].mxu0
        %v1891 = vadd.f32 0.0, %v1890
        %v1892 = vpop.f32.mrb[0].mxu0
        %v1893 = vpop.f32.mrb[0].mxu0
        %v1894 = vadd.f32 0.0, %v1893
        %v1895 = vpop.f32.mrb[0].mxu0
        %1896 = vmatprep.mubr.bf16.mxu0 0
        %1897 = vmatmul.mubr.bf16.gmra.mrb[0].mxu0 %v1581
        %v1898 = vpop.f32.mrb[0].mxu0
        %v1899 = vadd.f32 0.0, %v1898
        %v1900 = vpop.f32.mrb[0].mxu0
        %v1901 = vpop.f32.mrb[0].mxu0
        %v1902 = vadd.f32 0.0, %v1901
        %v1903 = vpop.f32.mrb[0].mxu0
        %1904 = vmatprep.mubr.bf16.mxu0 0
        %1905 = vmatmul.mubr.bf16.gmra.mrb[0].mxu0 %v1584
        %v1906 = vpop.f32.mrb[0].mxu0
        %v1907 = vadd.f32 0.0, %v1906
        %v1908 = vpop.f32.mrb[0].mxu0
        %v1909 = vpop.f32.mrb[0].mxu0
        %v1910 = vadd.f32 0.0, %v1909
        %v1911 = vpop.f32.mrb[0].mxu0
        %1912 = vmatprep.mubr.bf16.mxu0 0
        %1913 = vmatmul.mubr.bf16.gmra.mrb[0].mxu0 %v1587
        %v1914 = vpop.f32.mrb[0].mxu0
        %v1915 = vadd.f32 0.0, %v1914
        %v1916 = vpop.f32.mrb[0].mxu0
        %v1917 = vpop.f32.mrb[0].mxu0
        %v1918 = vadd.f32 0.0, %v1917
        %v1919 = vpop.f32.mrb[0].mxu0
        %1920 = vmatprep.mubr.bf16.mxu0 0
        %1921 = vmatmul.mubr.bf16.gmra.mrb[0].mxu0 %v1590
        %v1922 = vpop.f32.mrb[0].mxu0
        %v1923 = vadd.f32 0.0, %v1922
        %v1924 = vpop.f32.mrb[0].mxu0
        %v1925 = vpop.f32.mrb[0].mxu0
        %v1926 = vadd.f32 0.0, %v1925
        %v1927 = vpop.f32.mrb[0].mxu0
        %1928 = vmatprep.mubr.bf16.mxu0 0
        %1929 = vmatmul.mubr.bf16.gmra.mrb[0].mxu0 %v1593
        %v1930 = vpop.f32.mrb[0].mxu0
        %v1931 = vadd.f32 0.0, %v1930
        %v1932 = vpop.f32.mrb[0].mxu0
        %v1933 = vpop.f32.mrb[0].mxu0
        %v1934 = vadd.f32 0.0, %v1933
        %v1935 = vpop.f32.mrb[0].mxu0
        %1936 = vmatprep.mubr.bf16.mxu0 0
        %1937 = vmatmul.mubr.bf16.gmra.mrb[0].mxu0 %v1596
        %v1938 = vpop.f32.mrb[0].mxu0
        %v1939 = vadd.f32 0.0, %v1938
        %v1940 = vpop.f32.mrb[0].mxu0
        %v1941 = vpop.f32.mrb[0].mxu0
        %v1942 = vadd.f32 0.0, %v1941
        %v1943 = vpop.f32.mrb[0].mxu0
        %1944 = vmatprep.mubr.bf16.mxu0 0
        %1945 = vmatmul.mubr.bf16.gmra.mrb[0].mxu0 %v1599
        %v1946 = vpop.f32.mrb[0].mxu0
        %v1947 = vadd.f32 0.0, %v1946
        %v1948 = vpop.f32.mrb[0].mxu0
        %v1949 = vpop.f32.mrb[0].mxu0
        %v1950 = vadd.f32 0.0, %v1949
        %v1951 = vpop.f32.mrb[0].mxu0
        %1952 = vmatprep.mubr.bf16.mxu0 0
        %1953 = vmatmul.mubr.bf16.gmra.mrb[0].mxu0 %v1602
        %v1954 = vpop.f32.mrb[0].mxu0
        %v1955 = vadd.f32 0.0, %v1954
        %v1956 = vpop.f32.mrb[0].mxu0
        %v1957 = vpop.f32.mrb[0].mxu0
        %v1958 = vadd.f32 0.0, %v1957
        %v1959 = vpop.f32.mrb[0].mxu0
        %1960 = vmatprep.mubr.bf16.mxu0 0
        %1961 = vmatmul.mubr.bf16.gmra.mrb[0].mxu0 %v1605
        %v1962 = vpop.f32.mrb[0].mxu0
        %v1963 = vadd.f32 0.0, %v1962
        %v1964 = vpop.f32.mrb[0].mxu0
        %v1965 = vpop.f32.mrb[0].mxu0
        %v1966 = vadd.f32 0.0, %v1965
        %v1967 = vpop.f32.mrb[0].mxu0
        %1968 = vmatprep.mubr.bf16.mxu0 0
        %1969 = vmatmul.mubr.bf16.gmra.mrb[0].mxu0 %v1608
        %v1970 = vpop.f32.mrb[0].mxu0
        %v1971 = vadd.f32 0.0, %v1970
        %v1972 = vpop.f32.mrb[0].mxu0
        %v1973 = vpop.f32.mrb[0].mxu0
        %v1974 = vadd.f32 0.0, %v1973
        %v1975 = vpop.f32.mrb[0].mxu0
        %1976 = vmatprep.mubr.bf16.mxu0 0
        %1977 = vmatmul.mubr.bf16.gmra.mrb[0].mxu0 %v1611
        %v1978 = vpop.f32.mrb[0].mxu0
        %v1979 = vadd.f32 0.0, %v1978
        %v1980 = vpop.f32.mrb[0].mxu0
        %v1981 = vpop.f32.mrb[0].mxu0
        %v1982 = vadd.f32 0.0, %v1981
        %v1983 = vpop.f32.mrb[0].mxu0
        %1984 = vmatprep.mubr.bf16.mxu0 0
        %1985 = vmatmul.mubr.bf16.gmra.mrb[0].mxu0 %v1614
        %v1986 = vpop.f32.mrb[0].mxu0
        %v1987 = vadd.f32 0.0, %v1986
        %v1988 = vpop.f32.mrb[0].mxu0
        %v1989 = vpop.f32.mrb[0].mxu0
        %v1990 = vadd.f32 0.0, %v1989
        %v1991 = vpop.f32.mrb[0].mxu0
        %1992 = vmatprep.mubr.bf16.mxu0 0
        %1993 = vmatmul.mubr.bf16.gmra.mrb[0].mxu0 %v1617
        %v1994 = vpop.f32.mrb[0].mxu0
        %v1995 = vadd.f32 0.0, %v1994
        %v1996 = vpop.f32.mrb[0].mxu0
        %v1997 = vpop.f32.mrb[0].mxu0
        %v1998 = vadd.f32 0.0, %v1997
        %v1999 = vpop.f32.mrb[0].mxu0
        %2000 = vmatprep.mubr.bf16.mxu0 0
        %2001 = vmatmul.mubr.bf16.gmra.mrb[0].mxu0 %v1620
        %v2002 = vpop.f32.mrb[0].mxu0
        %v2003 = vadd.f32 0.0, %v2002
        %v2004 = vpop.f32.mrb[0].mxu0
        %v2005 = vpop.f32.mrb[0].mxu0
        %v2006 = vadd.f32 0.0, %v2005
        %v2007 = vpop.f32.mrb[0].mxu0
        %2008 = vmatprep.mubr.bf16.mxu0 0
        %2009 = vmatmul.mubr.bf16.gmra.mrb[0].mxu0 %v1623
        %v2010 = vpop.f32.mrb[0].mxu0
        %v2011 = vadd.f32 0.0, %v2010
        %v2012 = vpop.f32.mrb[0].mxu0
        %v2013 = vpop.f32.mrb[0].mxu0
        %v2014 = vadd.f32 0.0, %v2013
        %v2015 = vpop.f32.mrb[0].mxu0
        %2016 = vmatprep.mubr.bf16.mxu0 0
        %2017 = vmatmul.mubr.bf16.gmra.mrb[0].mxu0 %v1626
        %v2018 = vpop.f32.mrb[0].mxu0
        %v2019 = vadd.f32 0.0, %v2018
        %v2020 = vpop.f32.mrb[0].mxu0
        %v2021 = vpop.f32.mrb[0].mxu0
        %v2022 = vadd.f32 0.0, %v2021
        %v2023 = vpop.f32.mrb[0].mxu0
        %2024 = vmatprep.mubr.bf16.mxu0 0
        %2025 = vmatmul.mubr.bf16.gmra.mrb[0].mxu0 %v1629
        %v2026 = vpop.f32.mrb[0].mxu0
        %v2027 = vadd.f32 0.0, %v2026
        %v2028 = vpop.f32.mrb[0].mxu0
        %v2029 = vpop.f32.mrb[0].mxu0
        %v2030 = vadd.f32 0.0, %v2029
        %v2031 = vpop.f32.mrb[0].mxu0
        %2032 = vmatprep.mubr.bf16.mxu0 0
        %2033 = vmatmul.mubr.bf16.gmra.mrb[0].mxu0 %v1632
        %v2034 = vpop.f32.mrb[0].mxu0
        %v2035 = vadd.f32 0.0, %v2034
        %v2036 = vpop.f32.mrb[0].mxu0
        %v2037 = vpop.f32.mrb[0].mxu0
        %v2038 = vadd.f32 0.0, %v2037
        %v2039 = vpop.f32.mrb[0].mxu0
        %2040 = vmatprep.mubr.bf16.mxu0 0
        %2041 = vmatmul.mubr.bf16.gmra.mrb[0].mxu0 %v1635
        %v2042 = vpop.f32.mrb[0].mxu0
        %v2043 = vadd.f32 0.0, %v2042
        %v2044 = vpop.f32.mrb[0].mxu0
        %v2045 = vpop.f32.mrb[0].mxu0
        %v2046 = vadd.f32 0.0, %v2045
        %v2047 = vpop.f32.mrb[0].mxu0
        %2048 = vmatprep.mubr.bf16.mxu0 0
        %2049 = vmatmul.mubr.bf16.gmra.mrb[0].mxu0 %v1638
        %v2050 = vpop.f32.mrb[0].mxu0
        %v2051 = vadd.f32 0.0, %v2050
        %v2052 = vpop.f32.mrb[0].mxu0
        %v2053 = vpop.f32.mrb[0].mxu0
        %v2054 = vadd.f32 0.0, %v2053
        %v2055 = vpop.f32.mrb[0].mxu0
        %2056 = vmatprep.mubr.bf16.mxu0 0
        %2057 = vmatmul.mubr.bf16.gmra.mrb[0].mxu0 %v1641
        %v2058 = vpop.f32.mrb[0].mxu0
        %v2059 = vadd.f32 0.0, %v2058
        %v2060 = vpop.f32.mrb[0].mxu0
        %v2061 = vpop.f32.mrb[0].mxu0
        %v2062 = vadd.f32 0.0, %v2061
        %v2063 = vpop.f32.mrb[0].mxu0
        %2064 = vmatprep.mubr.bf16.mxu0 0
        %2065 = vmatmul.mubr.bf16.gmra.mrb[0].mxu0 %v1644
        %v2066 = vpop.f32.mrb[0].mxu0
        %v2067 = vadd.f32 0.0, %v2066
        %v2068 = vpop.f32.mrb[0].mxu0
        %v2069 = vpop.f32.mrb[0].mxu0
        %v2070 = vadd.f32 0.0, %v2069
        %v2071 = vpop.f32.mrb[0].mxu0
        %2072 = vmatprep.mubr.bf16.mxu0 0
        %2073 = vmatmul.mubr.bf16.gmra.mrb[0].mxu0 %v1647
        %v2074 = vpop.f32.mrb[0].mxu0
        %v2075 = vadd.f32 0.0, %v2074
        %v2076 = vpop.f32.mrb[0].mxu0
        %v2077 = vpop.f32.mrb[0].mxu0
        %v2078 = vadd.f32 0.0, %v2077
        %v2079 = vpop.f32.mrb[0].mxu0
        %2080 = vmatprep.mubr.bf16.mxu0 0
        %2081 = vmatmul.mubr.bf16.gmra.mrb[0].mxu0 %v1650
        %v2082 = vpop.f32.mrb[0].mxu0
        %v2083 = vadd.f32 0.0, %v2082
        %v2084 = vpop.f32.mrb[0].mxu0
        %v2085 = vpop.f32.mrb[0].mxu0
        %v2086 = vadd.f32 0.0, %v2085
        %v2087 = vpop.f32.mrb[0].mxu0
        %2088 = vmatprep.mubr.bf16.mxu0 0
        %2089 = vmatmul.mubr.bf16.gmra.mrb[0].mxu0 %v1653
        %v2090 = vpop.f32.mrb[0].mxu0
        %v2091 = vadd.f32 0.0, %v2090
        %v2092 = vpop.f32.mrb[0].mxu0
        %v2093 = vpop.f32.mrb[0].mxu0
        %v2094 = vadd.f32 0.0, %v2093
        %v2095 = vpop.f32.mrb[0].mxu0
        %2096 = vmatprep.mubr.bf16.mxu0 0
        %2097 = vmatmul.mubr.bf16.gmra.mrb[0].mxu0 %v1656
        %v2098 = vpop.f32.mrb[0].mxu0
        %v2099 = vadd.f32 0.0, %v2098
        %v2100 = vpop.f32.mrb[0].mxu0
        %v2101 = vpop.f32.mrb[0].mxu0
        %v2102 = vadd.f32 0.0, %v2101
        %v2103 = vpop.f32.mrb[0].mxu0
        %2104 = vmatprep.mubr.bf16.mxu0 0
        %2105 = vmatmul.mubr.bf16.gmra.mrb[0].mxu0 %v1659
        %v2106 = vpop.f32.mrb[0].mxu0
        %v2107 = vadd.f32 0.0, %v2106
        %v2108 = vpop.f32.mrb[0].mxu0
        %v2109 = vpop.f32.mrb[0].mxu0
        %v2110 = vadd.f32 0.0, %v2109
        %v2111 = vpop.f32.mrb[0].mxu0
        %2112 = vmatprep.mubr.bf16.mxu0 0
        %2113 = vmatmul.mubr.bf16.gmra.mrb[0].mxu0 %v1662
        %v2114 = vpop.f32.mrb[0].mxu0
        %v2115 = vadd.f32 0.0, %v2114
        %v2116 = vpop.f32.mrb[0].mxu0
        %v2117 = vpop.f32.mrb[0].mxu0
        %v2118 = vadd.f32 0.0, %v2117
        %v2119 = vpop.f32.mrb[0].mxu0
        %2120 = vmatprep.mubr.bf16.mxu0 0
        %2121 = vmatmul.mubr.bf16.gmra.mrb[0].mxu0 %v1665
        %v2122 = vpop.f32.mrb[0].mxu0
        %v2123 = vadd.f32 0.0, %v2122
        %v2124 = vpop.f32.mrb[0].mxu0
        %v2125 = vpop.f32.mrb[0].mxu0
        %v2126 = vadd.f32 0.0, %v2125
        %v2127 = vpop.f32.mrb[0].mxu0
        %2128 = vmatprep.mubr.bf16.mxu0 0
        %2129 = vmatmul.mubr.bf16.gmra.mrb[0].mxu0 %v1668
        %v2130 = vpop.f32.mrb[0].mxu0
        %v2131 = vadd.f32 0.0, %v2130
        %v2132 = vpop.f32.mrb[0].mxu0
        %v2133 = vpop.f32.mrb[0].mxu0
        %v2134 = vadd.f32 0.0, %v2133
        %v2135 = vpop.f32.mrb[0].mxu0
        %2136 = vmatprep.mubr.bf16.mxu0 0
        %2137 = vmatmul.mubr.bf16.gmra.mrb[0].mxu0 %v1671
        %v2138 = vpop.f32.mrb[0].mxu0
        %v2139 = vadd.f32 0.0, %v2138
        %v2140 = vpop.f32.mrb[0].mxu0
        %v2141 = vpop.f32.mrb[0].mxu0
        %v2142 = vadd.f32 0.0, %v2141
        %v2143 = vpop.f32.mrb[0].mxu0
        %2144 = vmatprep.mubr.bf16.mxu0 0
        %2145 = vmatmul.mubr.bf16.gmra.mrb[0].mxu0 %v1674
        %v2146 = vpop.f32.mrb[0].mxu0
        %v2147 = vadd.f32 0.0, %v2146
        %v2148 = vpop.f32.mrb[0].mxu0
        %v2149 = vpop.f32.mrb[0].mxu0
        %v2150 = vadd.f32 0.0, %v2149
        %v2151 = vpop.f32.mrb[0].mxu0
        %2152 = vmatprep.mubr.bf16.mxu0 0
        %2153 = vmatmul.mubr.bf16.gmra.mrb[0].mxu0 %v1677
        %v2154 = vpop.f32.mrb[0].mxu0
        %v2155 = vadd.f32 0.0, %v2154
        %v2156 = vpop.f32.mrb[0].mxu0
        %v2157 = vpop.f32.mrb[0].mxu0
        %v2158 = vadd.f32 0.0, %v2157
        %v2159 = vpop.f32.mrb[0].mxu0
        %2160 = vmatprep.mubr.bf16.mxu0 0
        %2161 = vmatmul.mubr.bf16.gmra.mrb[0].mxu0 %v1680
        %v2162 = vpop.f32.mrb[0].mxu0
        %v2163 = vadd.f32 0.0, %v2162
        %v2164 = vpop.f32.mrb[0].mxu0
        %v2165 = vpop.f32.mrb[0].mxu0
        %v2166 = vadd.f32 0.0, %v2165
        %v2167 = vpop.f32.mrb[0].mxu0
        %2168 = vmatprep.mubr.bf16.mxu0 0
        %2169 = vmatmul.mubr.bf16.gmra.mrb[0].mxu0 %v1683
        %v2170 = vpop.f32.mrb[0].mxu0
        %v2171 = vadd.f32 0.0, %v2170
        %v2172 = vpop.f32.mrb[0].mxu0
        %v2173 = vpop.f32.mrb[0].mxu0
        %v2174 = vadd.f32 0.0, %v2173
        %v2175 = vpop.f32.mrb[0].mxu0
        %2176 = vmatprep.mubr.bf16.mxu0 0
        %2177 = vmatmul.mubr.bf16.gmra.mrb[0].mxu0 %v1686
        %v2178 = vpop.f32.mrb[0].mxu0
        %v2179 = vadd.f32 0.0, %v2178
        %v2180 = vpop.f32.mrb[0].mxu0
        %v2181 = vpop.f32.mrb[0].mxu0
        %v2182 = vadd.f32 0.0, %v2181
        %v2183 = vpop.f32.mrb[0].mxu0
        %2184 = vmatprep.mubr.bf16.mxu0 0
        %2185 = vmatmul.mubr.bf16.gmra.mrb[0].mxu0 %v1689
        %v2186 = vpop.f32.mrb[0].mxu0
        %v2187 = vadd.f32 0.0, %v2186
        %v2188 = vpop.f32.mrb[0].mxu0
        %v2189 = vpop.f32.mrb[0].mxu0
        %v2190 = vadd.f32 0.0, %v2189
        %v2191 = vpop.f32.mrb[0].mxu0
        %2192 = vmatprep.mubr.bf16.mxu0 0
        %2193 = vmatmul.mubr.bf16.gmra.mrb[0].mxu0 %v1692
        %v2194 = vpop.f32.mrb[0].mxu0
        %v2195 = vadd.f32 0.0, %v2194
        %v2196 = vpop.f32.mrb[0].mxu0
        %v2197 = vpop.f32.mrb[0].mxu0
        %v2198 = vadd.f32 0.0, %v2197
        %v2199 = vpop.f32.mrb[0].mxu0
        %2200 = vmatprep.mubr.bf16.mxu0 0
        %2201 = vmatmul.mubr.bf16.gmra.mrb[0].mxu0 %v1695
        %v2202 = vpop.f32.mrb[0].mxu0
        %v2203 = vadd.f32 0.0, %v2202
        %v2204 = vpop.f32.mrb[0].mxu0
        %v2205 = vpop.f32.mrb[0].mxu0
        %v2206 = vadd.f32 0.0, %v2205
        %v2207 = vpop.f32.mrb[0].mxu0
        %2208 = vmatprep.mubr.bf16.mxu0 0
        %2209 = vmatmul.mubr.bf16.gmra.mrb[0].mxu0 %v1698
        %v2210 = vpop.f32.mrb[0].mxu0
        %v2211 = vadd.f32 0.0, %v2210
        %v2212 = vpop.f32.mrb[0].mxu0
        %v2213 = vpop.f32.mrb[0].mxu0
        %v2214 = vadd.f32 0.0, %v2213
        %v2215 = vpop.f32.mrb[0].mxu0
        %2216 = vmatprep.mubr.bf16.mxu0 0
        %2217 = vmatmul.mubr.bf16.gmra.mrb[0].mxu0 %v1701
        %v2218 = vpop.f32.mrb[0].mxu0
        %v2219 = vadd.f32 0.0, %v2218
        %v2220 = vpop.f32.mrb[0].mxu0
        %v2221 = vpop.f32.mrb[0].mxu0
        %v2222 = vadd.f32 0.0, %v2221
        %v2223 = vpop.f32.mrb[0].mxu0
        %2224 = vmatprep.mubr.bf16.mxu0 0
        %2225 = vmatmul.mubr.bf16.gmra.mrb[0].mxu0 %v1704
        %v2226 = vpop.f32.mrb[0].mxu0
        %v2227 = vadd.f32 0.0, %v2226
        %v2228 = vpop.f32.mrb[0].mxu0
        %v2229 = vpop.f32.mrb[0].mxu0
        %v2230 = vadd.f32 0.0, %v2229
        %v2231 = vpop.f32.mrb[0].mxu0
        %2232 = vmatprep.mubr.bf16.mxu0 0
        %2233 = vmatmul.mubr.bf16.gmra.mrb[0].mxu0 %v1707
        %v2234 = vpop.f32.mrb[0].mxu0
        %v2235 = vadd.f32 0.0, %v2234
        %v2236 = vpop.f32.mrb[0].mxu0
        %v2237 = vpop.f32.mrb[0].mxu0
        %v2238 = vadd.f32 0.0, %v2237
        %v2239 = vpop.f32.mrb[0].mxu0
        %2240 = vmatprep.mubr.bf16.mxu0 0
        %2241 = vmatmul.mubr.bf16.gmra.mrb[0].mxu0 %v1710
        %v2242 = vpop.f32.mrb[0].mxu0
        %v2243 = vadd.f32 0.0, %v2242
        %v2244 = vpop.f32.mrb[0].mxu0
        %v2245 = vpop.f32.mrb[0].mxu0
        %v2246 = vadd.f32 0.0, %v2245
        %v2247 = vpop.f32.mrb[0].mxu0
        %2248 = vmatprep.mubr.bf16.mxu0 0
        %2249 = vmatmul.mubr.bf16.gmra.mrb[0].mxu0 %v1713
        %v2250 = vpop.f32.mrb[0].mxu0
        %v2251 = vadd.f32 0.0, %v2250
        %v2252 = vpop.f32.mrb[0].mxu0
        %v2253 = vpop.f32.mrb[0].mxu0
        %v2254 = vadd.f32 0.0, %v2253
        %v2255 = vpop.f32.mrb[0].mxu0
        %2256 = vmatprep.mubr.bf16.mxu0 0
        %2257 = vmatmul.mubr.bf16.gmra.mrb[0].mxu0 %v1716
        %v2258 = vpop.f32.mrb[0].mxu0
        %v2259 = vadd.f32 0.0, %v2258
        %v2260 = vpop.f32.mrb[0].mxu0
        %v2261 = vpop.f32.mrb[0].mxu0
        %v2262 = vadd.f32 0.0, %v2261
        %v2263 = vpop.f32.mrb[0].mxu0
        %2264 = vmatprep.mubr.bf16.mxu0 0
        %2265 = vmatmul.mubr.bf16.gmra.mrb[0].mxu0 %v1719
        %v2266 = vpop.f32.mrb[0].mxu0
        %v2267 = vadd.f32 0.0, %v2266
        %v2268 = vpop.f32.mrb[0].mxu0
        %v2269 = vpop.f32.mrb[0].mxu0
        %v2270 = vadd.f32 0.0, %v2269
        %v2271 = vpop.f32.mrb[0].mxu0
        %2272 = vdwg.mxu0
        %v2273 = vadd.f32 %v1385, %v1763
        %v2274 = vadd.f32 %v1386, %v1766
        %v2275 = vadd.f32 %v1387, %v1771
        %v2276 = vadd.f32 %v1388, %v1774
        %v2277 = vadd.f32 %v1389, %v1779
        %v2278 = vadd.f32 %v1390, %v1782
        %v2279 = vadd.f32 %v1391, %v1787
        %v2280 = vadd.f32 %v1392, %v1790
        %v2281 = vadd.f32 %v1393, %v1795
        %v2282 = vadd.f32 %v1394, %v1798
        %v2283 = vadd.f32 %v1395, %v1803
        %v2284 = vadd.f32 %v1396, %v1806
        %v2285 = vadd.f32 %v1397, %v1811
        %v2286 = vadd.f32 %v1398, %v1814
        %v2287 = vadd.f32 %v1399, %v1819
        %v2288 = vadd.f32 %v1400, %v1822
        %v2289 = vadd.f32 %v1401, %v1827
        %v2290 = vadd.f32 %v1402, %v1830
        %v2291 = vadd.f32 %v1403, %v1835
        %v2292 = vadd.f32 %v1404, %v1838
        %v2293 = vadd.f32 %v1405, %v1843
        %v2294 = vadd.f32 %v1406, %v1846
        %v2295 = vadd.f32 %v1407, %v1851
        %v2296 = vadd.f32 %v1408, %v1854
        %v2297 = vadd.f32 %v1409, %v1859
        %v2298 = vadd.f32 %v1410, %v1862
        %v2299 = vadd.f32 %v1411, %v1867
        %v2300 = vadd.f32 %v1412, %v1870
        %v2301 = vadd.f32 %v1413, %v1875
        %v2302 = vadd.f32 %v1414, %v1878
        %v2303 = vadd.f32 %v1415, %v1883
        %v2304 = vadd.f32 %v1416, %v1886
        %v2305 = vadd.f32 %v1417, %v1891
        %v2306 = vadd.f32 %v1418, %v1894
        %v2307 = vadd.f32 %v1419, %v1899
        %v2308 = vadd.f32 %v1420, %v1902
        %v2309 = vadd.f32 %v1421, %v1907
        %v2310 = vadd.f32 %v1422, %v1910
        %v2311 = vadd.f32 %v1423, %v1915
        %v2312 = vadd.f32 %v1424, %v1918
        %v2313 = vadd.f32 %v1425, %v1923
        %v2314 = vadd.f32 %v1426, %v1926
        %v2315 = vadd.f32 %v1427, %v1931
        %v2316 = vadd.f32 %v1428, %v1934
        %v2317 = vadd.f32 %v1429, %v1939
        %v2318 = vadd.f32 %v1430, %v1942
        %v2319 = vadd.f32 %v1431, %v1947
        %v2320 = vadd.f32 %v1432, %v1950
        %v2321 = vadd.f32 %v1433, %v1955
        %v2322 = vadd.f32 %v1434, %v1958
        %v2323 = vadd.f32 %v1435, %v1963
        %v2324 = vadd.f32 %v1436, %v1966
        %v2325 = vadd.f32 %v1437, %v1971
        %v2326 = vadd.f32 %v1438, %v1974
        %v2327 = vadd.f32 %v1439, %v1979
        %v2328 = vadd.f32 %v1440, %v1982
        %v2329 = vadd.f32 %v1441, %v1987
        %v2330 = vadd.f32 %v1442, %v1990
        %v2331 = vadd.f32 %v1443, %v1995
        %v2332 = vadd.f32 %v1444, %v1998
        %v2333 = vadd.f32 %v1445, %v2003
        %v2334 = vadd.f32 %v1446, %v2006
        %v2335 = vadd.f32 %v1447, %v2011
        %v2336 = vadd.f32 %v1448, %v2014
        %v2337 = vadd.f32 %v1449, %v2019
        %v2338 = vadd.f32 %v1450, %v2022
        %v2339 = vadd.f32 %v1451, %v2027
        %v2340 = vadd.f32 %v1452, %v2030
        %v2341 = vadd.f32 %v1453, %v2035
        %v2342 = vadd.f32 %v1454, %v2038
        %v2343 = vadd.f32 %v1455, %v2043
        %v2344 = vadd.f32 %v1456, %v2046
        %v2345 = vadd.f32 %v1457, %v2051
        %v2346 = vadd.f32 %v1458, %v2054
        %v2347 = vadd.f32 %v1459, %v2059
        %v2348 = vadd.f32 %v1460, %v2062
        %v2349 = vadd.f32 %v1461, %v2067
        %v2350 = vadd.f32 %v1462, %v2070
        %v2351 = vadd.f32 %v1463, %v2075
        %v2352 = vadd.f32 %v1464, %v2078
        %v2353 = vadd.f32 %v1465, %v2083
        %v2354 = vadd.f32 %v1466, %v2086
        %v2355 = vadd.f32 %v1467, %v2091
        %v2356 = vadd.f32 %v1468, %v2094
        %v2357 = vadd.f32 %v1469, %v2099
        %v2358 = vadd.f32 %v1470, %v2102
        %v2359 = vadd.f32 %v1471, %v2107
        %v2360 = vadd.f32 %v1472, %v2110
        %v2361 = vadd.f32 %v1473, %v2115
        %v2362 = vadd.f32 %v1474, %v2118
        %v2363 = vadd.f32 %v1475, %v2123
        %v2364 = vadd.f32 %v1476, %v2126
        %v2365 = vadd.f32 %v1477, %v2131
        %v2366 = vadd.f32 %v1478, %v2134
        %v2367 = vadd.f32 %v1479, %v2139
        %v2368 = vadd.f32 %v1480, %v2142
        %v2369 = vadd.f32 %v1481, %v2147
        %v2370 = vadd.f32 %v1482, %v2150
        %v2371 = vadd.f32 %v1483, %v2155
        %v2372 = vadd.f32 %v1484, %v2158
        %v2373 = vadd.f32 %v1485, %v2163
        %v2374 = vadd.f32 %v1486, %v2166
        %v2375 = vadd.f32 %v1487, %v2171
        %v2376 = vadd.f32 %v1488, %v2174
        %v2377 = vadd.f32 %v1489, %v2179
        %v2378 = vadd.f32 %v1490, %v2182
        %v2379 = vadd.f32 %v1491, %v2187
        %v2380 = vadd.f32 %v1492, %v2190
        %v2381 = vadd.f32 %v1493, %v2195
        %v2382 = vadd.f32 %v1494, %v2198
        %v2383 = vadd.f32 %v1495, %v2203
        %v2384 = vadd.f32 %v1496, %v2206
        %v2385 = vadd.f32 %v1497, %v2211
        %v2386 = vadd.f32 %v1498, %v2214
        %v2387 = vadd.f32 %v1499, %v2219
        %v2388 = vadd.f32 %v1500, %v2222
        %v2389 = vadd.f32 %v1501, %v2227
        %v2390 = vadd.f32 %v1502, %v2230
        %v2391 = vadd.f32 %v1503, %v2235
        %v2392 = vadd.f32 %v1504, %v2238
        %v2393 = vadd.f32 %v1505, %v2243
        %v2394 = vadd.f32 %v1506, %v2246
        %v2395 = vadd.f32 %v1507, %v2251
        %v2396 = vadd.f32 %v1508, %v2254
        %v2397 = vadd.f32 %v1509, %v2259
        %v2398 = vadd.f32 %v1510, %v2262
        %v2399 = vadd.f32 %v1511, %v2267
        %v2400 = vadd.f32 %v1512, %v2270
        %vm2401 = vcmask 523264
        %2402 = vst.msk [vmem:[#allocation2] sm:$0xff] %vm2401, %v2273
        %2403 = vst.msk [vmem:[#allocation2 + $0x8] sm:$0xff] %vm2401, %v2274
        %2404 = vst.msk [vmem:[#allocation2 + $0x10] sm:$0xff] %vm2401, %v2275
        %2405 = vst.msk [vmem:[#allocation2 + $0x18] sm:$0xff] %vm2401, %v2276
        %2406 = vst.msk [vmem:[#allocation2 + $0x20] sm:$0xff] %vm2401, %v2277
        %2407 = vst.msk [vmem:[#allocation2 + $0x28] sm:$0xff] %vm2401, %v2278
        %2408 = vst.msk [vmem:[#allocation2 + $0x30] sm:$0xff] %vm2401, %v2279
        %2409 = vst.msk [vmem:[#allocation2 + $0x38] sm:$0xff] %vm2401, %v2280
        %2410 = vst.msk [vmem:[#allocation2 + $0x40] sm:$0xff] %vm2401, %v2281
        %2411 = vst.msk [vmem:[#allocation2 + $0x48] sm:$0xff] %vm2401, %v2282
        %2412 = vst.msk [vmem:[#allocation2 + $0x50] sm:$0xff] %vm2401, %v2283
        %2413 = vst.msk [vmem:[#allocation2 + $0x58] sm:$0xff] %vm2401, %v2284
        %2414 = vst.msk [vmem:[#allocation2 + $0x60] sm:$0xff] %vm2401, %v2285
        %2415 = vst.msk [vmem:[#allocation2 + $0x68] sm:$0xff] %vm2401, %v2286
        %2416 = vst.msk [vmem:[#allocation2 + $0x70] sm:$0xff] %vm2401, %v2287
        %2417 = vst.msk [vmem:[#allocation2 + $0x78] sm:$0xff] %vm2401, %v2288
        %2418 = vst.msk [vmem:[#allocation2 + $0x80] sm:$0xff] %vm2401, %v2289
        %2419 = vst.msk [vmem:[#allocation2 + $0x88] sm:$0xff] %vm2401, %v2290
        %2420 = vst.msk [vmem:[#allocation2 + $0x90] sm:$0xff] %vm2401, %v2291
        %2421 = vst.msk [vmem:[#allocation2 + $0x98] sm:$0xff] %vm2401, %v2292
        %2422 = vst.msk [vmem:[#allocation2 + $0xa0] sm:$0xff] %vm2401, %v2293
        %2423 = vst.msk [vmem:[#allocation2 + $0xa8] sm:$0xff] %vm2401, %v2294
        %2424 = vst.msk [vmem:[#allocation2 + $0xb0] sm:$0xff] %vm2401, %v2295
        %2425 = vst.msk [vmem:[#allocation2 + $0xb8] sm:$0xff] %vm2401, %v2296
        %2426 = vst.msk [vmem:[#allocation2 + $0xc0] sm:$0xff] %vm2401, %v2297
        %2427 = vst.msk [vmem:[#allocation2 + $0xc8] sm:$0xff] %vm2401, %v2298
        %2428 = vst.msk [vmem:[#allocation2 + $0xd0] sm:$0xff] %vm2401, %v2299
        %2429 = vst.msk [vmem:[#allocation2 + $0xd8] sm:$0xff] %vm2401, %v2300
        %2430 = vst.msk [vmem:[#allocation2 + $0xe0] sm:$0xff] %vm2401, %v2301
        %2431 = vst.msk [vmem:[#allocation2 + $0xe8] sm:$0xff] %vm2401, %v2302
        %2432 = vst.msk [vmem:[#allocation2 + $0xf0] sm:$0xff] %vm2401, %v2303
        %2433 = vst.msk [vmem:[#allocation2 + $0xf8] sm:$0xff] %vm2401, %v2304
        %2434 = vst.msk [vmem:[#allocation2 + $0x100] sm:$0xff] %vm2401, %v2305
        %2435 = vst.msk [vmem:[#allocation2 + $0x108] sm:$0xff] %vm2401, %v2306
        %2436 = vst.msk [vmem:[#allocation2 + $0x110] sm:$0xff] %vm2401, %v2307
        %2437 = vst.msk [vmem:[#allocation2 + $0x118] sm:$0xff] %vm2401, %v2308
        %2438 = vst.msk [vmem:[#allocation2 + $0x120] sm:$0xff] %vm2401, %v2309
        %2439 = vst.msk [vmem:[#allocation2 + $0x128] sm:$0xff] %vm2401, %v2310
        %2440 = vst.msk [vmem:[#allocation2 + $0x130] sm:$0xff] %vm2401, %v2311
        %2441 = vst.msk [vmem:[#allocation2 + $0x138] sm:$0xff] %vm2401, %v2312
        %2442 = vst.msk [vmem:[#allocation2 + $0x140] sm:$0xff] %vm2401, %v2313
        %2443 = vst.msk [vmem:[#allocation2 + $0x148] sm:$0xff] %vm2401, %v2314
        %2444 = vst.msk [vmem:[#allocation2 + $0x150] sm:$0xff] %vm2401, %v2315
        %2445 = vst.msk [vmem:[#allocation2 + $0x158] sm:$0xff] %vm2401, %v2316
        %2446 = vst.msk [vmem:[#allocation2 + $0x160] sm:$0xff] %vm2401, %v2317
        %2447 = vst.msk [vmem:[#allocation2 + $0x168] sm:$0xff] %vm2401, %v2318
        %2448 = vst.msk [vmem:[#allocation2 + $0x170] sm:$0xff] %vm2401, %v2319
        %2449 = vst.msk [vmem:[#allocation2 + $0x178] sm:$0xff] %vm2401, %v2320
        %2450 = vst.msk [vmem:[#allocation2 + $0x180] sm:$0xff] %vm2401, %v2321
        %2451 = vst.msk [vmem:[#allocation2 + $0x188] sm:$0xff] %vm2401, %v2322
        %2452 = vst.msk [vmem:[#allocation2 + $0x190] sm:$0xff] %vm2401, %v2323
        %2453 = vst.msk [vmem:[#allocation2 + $0x198] sm:$0xff] %vm2401, %v2324
        %2454 = vst.msk [vmem:[#allocation2 + $0x1a0] sm:$0xff] %vm2401, %v2325
        %2455 = vst.msk [vmem:[#allocation2 + $0x1a8] sm:$0xff] %vm2401, %v2326
        %2456 = vst.msk [vmem:[#allocation2 + $0x1b0] sm:$0xff] %vm2401, %v2327
        %2457 = vst.msk [vmem:[#allocation2 + $0x1b8] sm:$0xff] %vm2401, %v2328
        %2458 = vst.msk [vmem:[#allocation2 + $0x1c0] sm:$0xff] %vm2401, %v2329
        %2459 = vst.msk [vmem:[#allocation2 + $0x1c8] sm:$0xff] %vm2401, %v2330
        %2460 = vst.msk [vmem:[#allocation2 + $0x1d0] sm:$0xff] %vm2401, %v2331
        %2461 = vst.msk [vmem:[#allocation2 + $0x1d8] sm:$0xff] %vm2401, %v2332
        %2462 = vst.msk [vmem:[#allocation2 + $0x1e0] sm:$0xff] %vm2401, %v2333
        %2463 = vst.msk [vmem:[#allocation2 + $0x1e8] sm:$0xff] %vm2401, %v2334
        %2464 = vst.msk [vmem:[#allocation2 + $0x1f0] sm:$0xff] %vm2401, %v2335
        %2465 = vst.msk [vmem:[#allocation2 + $0x1f8] sm:$0xff] %vm2401, %v2336
        %2466 = vst.msk [vmem:[#allocation2 + $0x200] sm:$0xff] %vm2401, %v2337
        %2467 = vst.msk [vmem:[#allocation2 + $0x208] sm:$0xff] %vm2401, %v2338
        %2468 = vst.msk [vmem:[#allocation2 + $0x210] sm:$0xff] %vm2401, %v2339
        %2469 = vst.msk [vmem:[#allocation2 + $0x218] sm:$0xff] %vm2401, %v2340
        %2470 = vst.msk [vmem:[#allocation2 + $0x220] sm:$0xff] %vm2401, %v2341
        %2471 = vst.msk [vmem:[#allocation2 + $0x228] sm:$0xff] %vm2401, %v2342
        %2472 = vst.msk [vmem:[#allocation2 + $0x230] sm:$0xff] %vm2401, %v2343
        %2473 = vst.msk [vmem:[#allocation2 + $0x238] sm:$0xff] %vm2401, %v2344
        %2474 = vst.msk [vmem:[#allocation2 + $0x240] sm:$0xff] %vm2401, %v2345
        %2475 = vst.msk [vmem:[#allocation2 + $0x248] sm:$0xff] %vm2401, %v2346
        %2476 = vst.msk [vmem:[#allocation2 + $0x250] sm:$0xff] %vm2401, %v2347
        %2477 = vst.msk [vmem:[#allocation2 + $0x258] sm:$0xff] %vm2401, %v2348
        %2478 = vst.msk [vmem:[#allocation2 + $0x260] sm:$0xff] %vm2401, %v2349
        %2479 = vst.msk [vmem:[#allocation2 + $0x268] sm:$0xff] %vm2401, %v2350
        %2480 = vst.msk [vmem:[#allocation2 + $0x270] sm:$0xff] %vm2401, %v2351
        %2481 = vst.msk [vmem:[#allocation2 + $0x278] sm:$0xff] %vm2401, %v2352
        %2482 = vst.msk [vmem:[#allocation2 + $0x280] sm:$0xff] %vm2401, %v2353
        %2483 = vst.msk [vmem:[#allocation2 + $0x288] sm:$0xff] %vm2401, %v2354
        %2484 = vst.msk [vmem:[#allocation2 + $0x290] sm:$0xff] %vm2401, %v2355
        %2485 = vst.msk [vmem:[#allocation2 + $0x298] sm:$0xff] %vm2401, %v2356
        %2486 = vst.msk [vmem:[#allocation2 + $0x2a0] sm:$0xff] %vm2401, %v2357
        %2487 = vst.msk [vmem:[#allocation2 + $0x2a8] sm:$0xff] %vm2401, %v2358
        %2488 = vst.msk [vmem:[#allocation2 + $0x2b0] sm:$0xff] %vm2401, %v2359
        %2489 = vst.msk [vmem:[#allocation2 + $0x2b8] sm:$0xff] %vm2401, %v2360
        %2490 = vst.msk [vmem:[#allocation2 + $0x2c0] sm:$0xff] %vm2401, %v2361
        %2491 = vst.msk [vmem:[#allocation2 + $0x2c8] sm:$0xff] %vm2401, %v2362
        %2492 = vst.msk [vmem:[#allocation2 + $0x2d0] sm:$0xff] %vm2401, %v2363
        %2493 = vst.msk [vmem:[#allocation2 + $0x2d8] sm:$0xff] %vm2401, %v2364
        %2494 = vst.msk [vmem:[#allocation2 + $0x2e0] sm:$0xff] %vm2401, %v2365
        %2495 = vst.msk [vmem:[#allocation2 + $0x2e8] sm:$0xff] %vm2401, %v2366
        %2496 = vst.msk [vmem:[#allocation2 + $0x2f0] sm:$0xff] %vm2401, %v2367
        %2497 = vst.msk [vmem:[#allocation2 + $0x2f8] sm:$0xff] %vm2401, %v2368
        %2498 = vst.msk [vmem:[#allocation2 + $0x300] sm:$0xff] %vm2401, %v2369
        %2499 = vst.msk [vmem:[#allocation2 + $0x308] sm:$0xff] %vm2401, %v2370
        %2500 = vst.msk [vmem:[#allocation2 + $0x310] sm:$0xff] %vm2401, %v2371
        %2501 = vst.msk [vmem:[#allocation2 + $0x318] sm:$0xff] %vm2401, %v2372
        %2502 = vst.msk [vmem:[#allocation2 + $0x320] sm:$0xff] %vm2401, %v2373
        %2503 = vst.msk [vmem:[#allocation2 + $0x328] sm:$0xff] %vm2401, %v2374
        %2504 = vst.msk [vmem:[#allocation2 + $0x330] sm:$0xff] %vm2401, %v2375
        %2505 = vst.msk [vmem:[#allocation2 + $0x338] sm:$0xff] %vm2401, %v2376
        %2506 = vst.msk [vmem:[#allocation2 + $0x340] sm:$0xff] %vm2401, %v2377
        %2507 = vst.msk [vmem:[#allocation2 + $0x348] sm:$0xff] %vm2401, %v2378
        %2508 = vst.msk [vmem:[#allocation2 + $0x350] sm:$0xff] %vm2401, %v2379
        %2509 = vst.msk [vmem:[#allocation2 + $0x358] sm:$0xff] %vm2401, %v2380
        %2510 = vst.msk [vmem:[#allocation2 + $0x360] sm:$0xff] %vm2401, %v2381
        %2511 = vst.msk [vmem:[#allocation2 + $0x368] sm:$0xff] %vm2401, %v2382
        %2512 = vst.msk [vmem:[#allocation2 + $0x370] sm:$0xff] %vm2401, %v2383
        %2513 = vst.msk [vmem:[#allocation2 + $0x378] sm:$0xff] %vm2401, %v2384
        %2514 = vst.msk [vmem:[#allocation2 + $0x380] sm:$0xff] %vm2401, %v2385
        %2515 = vst.msk [vmem:[#allocation2 + $0x388] sm:$0xff] %vm2401, %v2386
        %2516 = vst.msk [vmem:[#allocation2 + $0x390] sm:$0xff] %vm2401, %v2387
        %2517 = vst.msk [vmem:[#allocation2 + $0x398] sm:$0xff] %vm2401, %v2388
        %2518 = vst.msk [vmem:[#allocation2 + $0x3a0] sm:$0xff] %vm2401, %v2389
        %2519 = vst.msk [vmem:[#allocation2 + $0x3a8] sm:$0xff] %vm2401, %v2390
        %2520 = vst.msk [vmem:[#allocation2 + $0x3b0] sm:$0xff] %vm2401, %v2391
        %2521 = vst.msk [vmem:[#allocation2 + $0x3b8] sm:$0xff] %vm2401, %v2392
        %2522 = vst.msk [vmem:[#allocation2 + $0x3c0] sm:$0xff] %vm2401, %v2393
        %2523 = vst.msk [vmem:[#allocation2 + $0x3c8] sm:$0xff] %vm2401, %v2394
        %2524 = vst.msk [vmem:[#allocation2 + $0x3d0] sm:$0xff] %vm2401, %v2395
        %2525 = vst.msk [vmem:[#allocation2 + $0x3d8] sm:$0xff] %vm2401, %v2396
        %2526 = vst.msk [vmem:[#allocation2 + $0x3e0] sm:$0xff] %vm2401, %v2397
        %2527 = vst.msk [vmem:[#allocation2 + $0x3e8] sm:$0xff] %vm2401, %v2398
        %2528 = vst.msk [vmem:[#allocation2 + $0x3f0] sm:$0xff] %vm2401, %v2399
        %2529 = vst.msk [vmem:[#allocation2 + $0x3f8] sm:$0xff] %vm2401, %v2400
        // Predicated region
        $region78: #{tpu_custom_call.1} parent=68 // pred_check
          %p2530 = pneg %p801
        $region79: #{tpu_custom_call.1} parent=68 // pred_check_branch
          %2532 = sbr.rel (%p2530) target = $region81
        $region80: #{tpu_custom_call.1} parent=68 // pred_region
          %v2533 = vld [vmem:[#allocation2] sm:$0xff]
          %v2534 = vld [vmem:[#allocation2 + $0x8] sm:$0xff]
          %v2535 = vld [vmem:[#allocation2 + $0x10] sm:$0xff]
          %v2536 = vld [vmem:[#allocation2 + $0x18] sm:$0xff]
          %v2537 = vld [vmem:[#allocation2 + $0x20] sm:$0xff]
          %v2538 = vld [vmem:[#allocation2 + $0x28] sm:$0xff]
          %v2539 = vld [vmem:[#allocation2 + $0x30] sm:$0xff]
          %v2540 = vld [vmem:[#allocation2 + $0x38] sm:$0xff]
          %v2541 = vld [vmem:[#allocation2 + $0x40] sm:$0xff]
          %v2542 = vld [vmem:[#allocation2 + $0x48] sm:$0xff]
          %v2543 = vld [vmem:[#allocation2 + $0x50] sm:$0xff]
          %v2544 = vld [vmem:[#allocation2 + $0x58] sm:$0xff]
          %v2545 = vld [vmem:[#allocation2 + $0x60] sm:$0xff]
          %v2546 = vld [vmem:[#allocation2 + $0x68] sm:$0xff]
          %v2547 = vld [vmem:[#allocation2 + $0x70] sm:$0xff]
          %v2548 = vld [vmem:[#allocation2 + $0x78] sm:$0xff]
          %v2549 = vld [vmem:[#allocation2 + $0x80] sm:$0xff]
          %v2550 = vld [vmem:[#allocation2 + $0x88] sm:$0xff]
          %v2551 = vld [vmem:[#allocation2 + $0x90] sm:$0xff]
          %v2552 = vld [vmem:[#allocation2 + $0x98] sm:$0xff]
          %v2553 = vld [vmem:[#allocation2 + $0xa0] sm:$0xff]
          %v2554 = vld [vmem:[#allocation2 + $0xa8] sm:$0xff]
          %v2555 = vld [vmem:[#allocation2 + $0xb0] sm:$0xff]
          %v2556 = vld [vmem:[#allocation2 + $0xb8] sm:$0xff]
          %v2557 = vld [vmem:[#allocation2 + $0xc0] sm:$0xff]
          %v2558 = vld [vmem:[#allocation2 + $0xc8] sm:$0xff]
          %v2559 = vld [vmem:[#allocation2 + $0xd0] sm:$0xff]
          %v2560 = vld [vmem:[#allocation2 + $0xd8] sm:$0xff]
          %v2561 = vld [vmem:[#allocation2 + $0xe0] sm:$0xff]
          %v2562 = vld [vmem:[#allocation2 + $0xe8] sm:$0xff]
          %v2563 = vld [vmem:[#allocation2 + $0xf0] sm:$0xff]
          %v2564 = vld [vmem:[#allocation2 + $0xf8] sm:$0xff]
          %v2565 = vld [vmem:[#allocation2 + $0x100] sm:$0xff]
          %v2566 = vld [vmem:[#allocation2 + $0x108] sm:$0xff]
          %v2567 = vld [vmem:[#allocation2 + $0x110] sm:$0xff]
          %v2568 = vld [vmem:[#allocation2 + $0x118] sm:$0xff]
          %v2569 = vld [vmem:[#allocation2 + $0x120] sm:$0xff]
          %v2570 = vld [vmem:[#allocation2 + $0x128] sm:$0xff]
          %v2571 = vld [vmem:[#allocation2 + $0x130] sm:$0xff]
          %v2572 = vld [vmem:[#allocation2 + $0x138] sm:$0xff]
          %v2573 = vld [vmem:[#allocation2 + $0x140] sm:$0xff]
          %v2574 = vld [vmem:[#allocation2 + $0x148] sm:$0xff]
          %v2575 = vld [vmem:[#allocation2 + $0x150] sm:$0xff]
          %v2576 = vld [vmem:[#allocation2 + $0x158] sm:$0xff]
          %v2577 = vld [vmem:[#allocation2 + $0x160] sm:$0xff]
          %v2578 = vld [vmem:[#allocation2 + $0x168] sm:$0xff]
          %v2579 = vld [vmem:[#allocation2 + $0x170] sm:$0xff]
          %v2580 = vld [vmem:[#allocation2 + $0x178] sm:$0xff]
          %v2581 = vld [vmem:[#allocation2 + $0x180] sm:$0xff]
          %v2582 = vld [vmem:[#allocation2 + $0x188] sm:$0xff]
          %v2583 = vld [vmem:[#allocation2 + $0x190] sm:$0xff]
          %v2584 = vld [vmem:[#allocation2 + $0x198] sm:$0xff]
          %v2585 = vld [vmem:[#allocation2 + $0x1a0] sm:$0xff]
          %v2586 = vld [vmem:[#allocation2 + $0x1a8] sm:$0xff]
          %v2587 = vld [vmem:[#allocation2 + $0x1b0] sm:$0xff]
          %v2588 = vld [vmem:[#allocation2 + $0x1b8] sm:$0xff]
          %v2589 = vld [vmem:[#allocation2 + $0x1c0] sm:$0xff]
          %v2590 = vld [vmem:[#allocation2 + $0x1c8] sm:$0xff]
          %v2591 = vld [vmem:[#allocation2 + $0x1d0] sm:$0xff]
          %v2592 = vld [vmem:[#allocation2 + $0x1d8] sm:$0xff]
          %v2593 = vld [vmem:[#allocation2 + $0x1e0] sm:$0xff]
          %v2594 = vld [vmem:[#allocation2 + $0x1e8] sm:$0xff]
          %v2595 = vld [vmem:[#allocation2 + $0x1f0] sm:$0xff]
          %v2596 = vld [vmem:[#allocation2 + $0x1f8] sm:$0xff]
          %v2597 = vld [vmem:[#allocation2 + $0x200] sm:$0xff]
          %v2598 = vld [vmem:[#allocation2 + $0x208] sm:$0xff]
          %v2599 = vld [vmem:[#allocation2 + $0x210] sm:$0xff]
          %v2600 = vld [vmem:[#allocation2 + $0x218] sm:$0xff]
          %v2601 = vld [vmem:[#allocation2 + $0x220] sm:$0xff]
          %v2602 = vld [vmem:[#allocation2 + $0x228] sm:$0xff]
          %v2603 = vld [vmem:[#allocation2 + $0x230] sm:$0xff]
          %v2604 = vld [vmem:[#allocation2 + $0x238] sm:$0xff]
          %v2605 = vld [vmem:[#allocation2 + $0x240] sm:$0xff]
          %v2606 = vld [vmem:[#allocation2 + $0x248] sm:$0xff]
          %v2607 = vld [vmem:[#allocation2 + $0x250] sm:$0xff]
          %v2608 = vld [vmem:[#allocation2 + $0x258] sm:$0xff]
          %v2609 = vld [vmem:[#allocation2 + $0x260] sm:$0xff]
          %v2610 = vld [vmem:[#allocation2 + $0x268] sm:$0xff]
          %v2611 = vld [vmem:[#allocation2 + $0x270] sm:$0xff]
          %v2612 = vld [vmem:[#allocation2 + $0x278] sm:$0xff]
          %v2613 = vld [vmem:[#allocation2 + $0x280] sm:$0xff]
          %v2614 = vld [vmem:[#allocation2 + $0x288] sm:$0xff]
          %v2615 = vld [vmem:[#allocation2 + $0x290] sm:$0xff]
          %v2616 = vld [vmem:[#allocation2 + $0x298] sm:$0xff]
          %v2617 = vld [vmem:[#allocation2 + $0x2a0] sm:$0xff]
          %v2618 = vld [vmem:[#allocation2 + $0x2a8] sm:$0xff]
          %v2619 = vld [vmem:[#allocation2 + $0x2b0] sm:$0xff]
          %v2620 = vld [vmem:[#allocation2 + $0x2b8] sm:$0xff]
          %v2621 = vld [vmem:[#allocation2 + $0x2c0] sm:$0xff]
          %v2622 = vld [vmem:[#allocation2 + $0x2c8] sm:$0xff]
          %v2623 = vld [vmem:[#allocation2 + $0x2d0] sm:$0xff]
          %v2624 = vld [vmem:[#allocation2 + $0x2d8] sm:$0xff]
          %v2625 = vld [vmem:[#allocation2 + $0x2e0] sm:$0xff]
          %v2626 = vld [vmem:[#allocation2 + $0x2e8] sm:$0xff]
          %v2627 = vld [vmem:[#allocation2 + $0x2f0] sm:$0xff]
          %v2628 = vld [vmem:[#allocation2 + $0x2f8] sm:$0xff]
          %v2629 = vld [vmem:[#allocation2 + $0x300] sm:$0xff]
          %v2630 = vld [vmem:[#allocation2 + $0x308] sm:$0xff]
          %v2631 = vld [vmem:[#allocation2 + $0x310] sm:$0xff]
          %v2632 = vld [vmem:[#allocation2 + $0x318] sm:$0xff]
          %v2633 = vld [vmem:[#allocation2 + $0x320] sm:$0xff]
          %v2634 = vld [vmem:[#allocation2 + $0x328] sm:$0xff]
          %v2635 = vld [vmem:[#allocation2 + $0x330] sm:$0xff]
          %v2636 = vld [vmem:[#allocation2 + $0x338] sm:$0xff]
          %v2637 = vld [vmem:[#allocation2 + $0x340] sm:$0xff]
          %v2638 = vld [vmem:[#allocation2 + $0x348] sm:$0xff]
          %v2639 = vld [vmem:[#allocation2 + $0x350] sm:$0xff]
          %v2640 = vld [vmem:[#allocation2 + $0x358] sm:$0xff]
          %v2641 = vld [vmem:[#allocation2 + $0x360] sm:$0xff]
          %v2642 = vld [vmem:[#allocation2 + $0x368] sm:$0xff]
          %v2643 = vld [vmem:[#allocation2 + $0x370] sm:$0xff]
          %v2644 = vld [vmem:[#allocation2 + $0x378] sm:$0xff]
          %v2645 = vld [vmem:[#allocation2 + $0x380] sm:$0xff]
          %v2646 = vld [vmem:[#allocation2 + $0x388] sm:$0xff]
          %v2647 = vld [vmem:[#allocation2 + $0x390] sm:$0xff]
          %v2648 = vld [vmem:[#allocation2 + $0x398] sm:$0xff]
          %v2649 = vld [vmem:[#allocation2 + $0x3a0] sm:$0xff]
          %v2650 = vld [vmem:[#allocation2 + $0x3a8] sm:$0xff]
          %v2651 = vld [vmem:[#allocation2 + $0x3b0] sm:$0xff]
          %v2652 = vld [vmem:[#allocation2 + $0x3b8] sm:$0xff]
          %v2653 = vld [vmem:[#allocation2 + $0x3c0] sm:$0xff]
          %v2654 = vld [vmem:[#allocation2 + $0x3c8] sm:$0xff]
          %v2655 = vld [vmem:[#allocation2 + $0x3d0] sm:$0xff]
          %v2656 = vld [vmem:[#allocation2 + $0x3d8] sm:$0xff]
          %v2657 = vld [vmem:[#allocation2 + $0x3e0] sm:$0xff]
          %v2658 = vld [vmem:[#allocation2 + $0x3e8] sm:$0xff]
          %v2659 = vld [vmem:[#allocation2 + $0x3f0] sm:$0xff]
          %v2660 = vld [vmem:[#allocation2 + $0x3f8] sm:$0xff]
          %v2661 = vld [vmem:[%s790] sm:$0x1]
          %v2663 = vlaneseq
          %v2664 = vshrl.u32 %v2663, 7
          %v2665 = vsub.s32 0, %v2664
          %v2666 = vrot.slane %v2661, %v2665
          %v2668 = vadd.f32 %v2533, %v2666
          %v2669 = vadd.f32 %v2534, %v2666
          %v2670 = vadd.f32 %v2535, %v2666
          %v2671 = vadd.f32 %v2536, %v2666
          %v2672 = vadd.f32 %v2537, %v2666
          %v2673 = vadd.f32 %v2538, %v2666
          %v2674 = vadd.f32 %v2539, %v2666
          %v2675 = vadd.f32 %v2540, %v2666
          %v2676 = vadd.f32 %v2541, %v2666
          %v2677 = vadd.f32 %v2542, %v2666
          %v2678 = vadd.f32 %v2543, %v2666
          %v2679 = vadd.f32 %v2544, %v2666
          %v2680 = vadd.f32 %v2545, %v2666
          %v2681 = vadd.f32 %v2546, %v2666
          %v2682 = vadd.f32 %v2547, %v2666
          %v2683 = vadd.f32 %v2548, %v2666
          %v2684 = vadd.f32 %v2549, %v2666
          %v2685 = vadd.f32 %v2550, %v2666
          %v2686 = vadd.f32 %v2551, %v2666
          %v2687 = vadd.f32 %v2552, %v2666
          %v2688 = vadd.f32 %v2553, %v2666
          %v2689 = vadd.f32 %v2554, %v2666
          %v2690 = vadd.f32 %v2555, %v2666
          %v2691 = vadd.f32 %v2556, %v2666
          %v2692 = vadd.f32 %v2557, %v2666
          %v2693 = vadd.f32 %v2558, %v2666
          %v2694 = vadd.f32 %v2559, %v2666
          %v2695 = vadd.f32 %v2560, %v2666
          %v2696 = vadd.f32 %v2561, %v2666
          %v2697 = vadd.f32 %v2562, %v2666
          %v2698 = vadd.f32 %v2563, %v2666
          %v2699 = vadd.f32 %v2564, %v2666
          %v2700 = vadd.f32 %v2565, %v2666
          %v2701 = vadd.f32 %v2566, %v2666
          %v2702 = vadd.f32 %v2567, %v2666
          %v2703 = vadd.f32 %v2568, %v2666
          %v2704 = vadd.f32 %v2569, %v2666
          %v2705 = vadd.f32 %v2570, %v2666
          %v2706 = vadd.f32 %v2571, %v2666
          %v2707 = vadd.f32 %v2572, %v2666
          %v2708 = vadd.f32 %v2573, %v2666
          %v2709 = vadd.f32 %v2574, %v2666
          %v2710 = vadd.f32 %v2575, %v2666
          %v2711 = vadd.f32 %v2576, %v2666
          %v2712 = vadd.f32 %v2577, %v2666
          %v2713 = vadd.f32 %v2578, %v2666
          %v2714 = vadd.f32 %v2579, %v2666
          %v2715 = vadd.f32 %v2580, %v2666
          %v2716 = vadd.f32 %v2581, %v2666
          %v2717 = vadd.f32 %v2582, %v2666
          %v2718 = vadd.f32 %v2583, %v2666
          %v2719 = vadd.f32 %v2584, %v2666
          %v2720 = vadd.f32 %v2585, %v2666
          %v2721 = vadd.f32 %v2586, %v2666
          %v2722 = vadd.f32 %v2587, %v2666
          %v2723 = vadd.f32 %v2588, %v2666
          %v2724 = vadd.f32 %v2589, %v2666
          %v2725 = vadd.f32 %v2590, %v2666
          %v2726 = vadd.f32 %v2591, %v2666
          %v2727 = vadd.f32 %v2592, %v2666
          %v2728 = vadd.f32 %v2593, %v2666
          %v2729 = vadd.f32 %v2594, %v2666
          %v2730 = vadd.f32 %v2595, %v2666
          %v2731 = vadd.f32 %v2596, %v2666
          %v2732 = vadd.f32 %v2597, %v2666
          %v2733 = vadd.f32 %v2598, %v2666
          %v2734 = vadd.f32 %v2599, %v2666
          %v2735 = vadd.f32 %v2600, %v2666
          %v2736 = vadd.f32 %v2601, %v2666
          %v2737 = vadd.f32 %v2602, %v2666
          %v2738 = vadd.f32 %v2603, %v2666
          %v2739 = vadd.f32 %v2604, %v2666
          %v2740 = vadd.f32 %v2605, %v2666
          %v2741 = vadd.f32 %v2606, %v2666
          %v2742 = vadd.f32 %v2607, %v2666
          %v2743 = vadd.f32 %v2608, %v2666
          %v2744 = vadd.f32 %v2609, %v2666
          %v2745 = vadd.f32 %v2610, %v2666
          %v2746 = vadd.f32 %v2611, %v2666
          %v2747 = vadd.f32 %v2612, %v2666
          %v2748 = vadd.f32 %v2613, %v2666
          %v2749 = vadd.f32 %v2614, %v2666
          %v2750 = vadd.f32 %v2615, %v2666
          %v2751 = vadd.f32 %v2616, %v2666
          %v2752 = vadd.f32 %v2617, %v2666
          %v2753 = vadd.f32 %v2618, %v2666
          %v2754 = vadd.f32 %v2619, %v2666
          %v2755 = vadd.f32 %v2620, %v2666
          %v2756 = vadd.f32 %v2621, %v2666
          %v2757 = vadd.f32 %v2622, %v2666
          %v2758 = vadd.f32 %v2623, %v2666
          %v2759 = vadd.f32 %v2624, %v2666
          %v2760 = vadd.f32 %v2625, %v2666
          %v2761 = vadd.f32 %v2626, %v2666
          %v2762 = vadd.f32 %v2627, %v2666
          %v2763 = vadd.f32 %v2628, %v2666
          %v2764 = vadd.f32 %v2629, %v2666
          %v2765 = vadd.f32 %v2630, %v2666
          %v2766 = vadd.f32 %v2631, %v2666
          %v2767 = vadd.f32 %v2632, %v2666
          %v2768 = vadd.f32 %v2633, %v2666
          %v2769 = vadd.f32 %v2634, %v2666
          %v2770 = vadd.f32 %v2635, %v2666
          %v2771 = vadd.f32 %v2636, %v2666
          %v2772 = vadd.f32 %v2637, %v2666
          %v2773 = vadd.f32 %v2638, %v2666
          %v2774 = vadd.f32 %v2639, %v2666
          %v2775 = vadd.f32 %v2640, %v2666
          %v2776 = vadd.f32 %v2641, %v2666
          %v2777 = vadd.f32 %v2642, %v2666
          %v2778 = vadd.f32 %v2643, %v2666
          %v2779 = vadd.f32 %v2644, %v2666
          %v2780 = vadd.f32 %v2645, %v2666
          %v2781 = vadd.f32 %v2646, %v2666
          %v2782 = vadd.f32 %v2647, %v2666
          %v2783 = vadd.f32 %v2648, %v2666
          %v2784 = vadd.f32 %v2649, %v2666
          %v2785 = vadd.f32 %v2650, %v2666
          %v2786 = vadd.f32 %v2651, %v2666
          %v2787 = vadd.f32 %v2652, %v2666
          %v2788 = vadd.f32 %v2653, %v2666
          %v2789 = vadd.f32 %v2654, %v2666
          %v2790 = vadd.f32 %v2655, %v2666
          %v2791 = vadd.f32 %v2656, %v2666
          %v2792 = vadd.f32 %v2657, %v2666
          %v2793 = vadd.f32 %v2658, %v2666
          %v2794 = vadd.f32 %v2659, %v2666
          %v2795 = vadd.f32 %v2660, %v2666
          %v2796 = vmax.f32 %v2668, 0.0
          %v2797 = vmax.f32 %v2669, 0.0
          %v2798 = vmax.f32 %v2670, 0.0
          %v2799 = vmax.f32 %v2671, 0.0
          %v2800 = vmax.f32 %v2672, 0.0
          %v2801 = vmax.f32 %v2673, 0.0
          %v2802 = vmax.f32 %v2674, 0.0
          %v2803 = vmax.f32 %v2675, 0.0
          %v2804 = vmax.f32 %v2676, 0.0
          %v2805 = vmax.f32 %v2677, 0.0
          %v2806 = vmax.f32 %v2678, 0.0
          %v2807 = vmax.f32 %v2679, 0.0
          %v2808 = vmax.f32 %v2680, 0.0
          %v2809 = vmax.f32 %v2681, 0.0
          %v2810 = vmax.f32 %v2682, 0.0
          %v2811 = vmax.f32 %v2683, 0.0
          %v2812 = vmax.f32 %v2684, 0.0
          %v2813 = vmax.f32 %v2685, 0.0
          %v2814 = vmax.f32 %v2686, 0.0
          %v2815 = vmax.f32 %v2687, 0.0
          %v2816 = vmax.f32 %v2688, 0.0
          %v2817 = vmax.f32 %v2689, 0.0
          %v2818 = vmax.f32 %v2690, 0.0
          %v2819 = vmax.f32 %v2691, 0.0
          %v2820 = vmax.f32 %v2692, 0.0
          %v2821 = vmax.f32 %v2693, 0.0
          %v2822 = vmax.f32 %v2694, 0.0
          %v2823 = vmax.f32 %v2695, 0.0
          %v2824 = vmax.f32 %v2696, 0.0
          %v2825 = vmax.f32 %v2697, 0.0
          %v2826 = vmax.f32 %v2698, 0.0
          %v2827 = vmax.f32 %v2699, 0.0
          %v2828 = vmax.f32 %v2700, 0.0
          %v2829 = vmax.f32 %v2701, 0.0
          %v2830 = vmax.f32 %v2702, 0.0
          %v2831 = vmax.f32 %v2703, 0.0
          %v2832 = vmax.f32 %v2704, 0.0
          %v2833 = vmax.f32 %v2705, 0.0
          %v2834 = vmax.f32 %v2706, 0.0
          %v2835 = vmax.f32 %v2707, 0.0
          %v2836 = vmax.f32 %v2708, 0.0
          %v2837 = vmax.f32 %v2709, 0.0
          %v2838 = vmax.f32 %v2710, 0.0
          %v2839 = vmax.f32 %v2711, 0.0
          %v2840 = vmax.f32 %v2712, 0.0
          %v2841 = vmax.f32 %v2713, 0.0
          %v2842 = vmax.f32 %v2714, 0.0
          %v2843 = vmax.f32 %v2715, 0.0
          %v2844 = vmax.f32 %v2716, 0.0
          %v2845 = vmax.f32 %v2717, 0.0
          %v2846 = vmax.f32 %v2718, 0.0
          %v2847 = vmax.f32 %v2719, 0.0
          %v2848 = vmax.f32 %v2720, 0.0
          %v2849 = vmax.f32 %v2721, 0.0
          %v2850 = vmax.f32 %v2722, 0.0
          %v2851 = vmax.f32 %v2723, 0.0
          %v2852 = vmax.f32 %v2724, 0.0
          %v2853 = vmax.f32 %v2725, 0.0
          %v2854 = vmax.f32 %v2726, 0.0
          %v2855 = vmax.f32 %v2727, 0.0
          %v2856 = vmax.f32 %v2728, 0.0
          %v2857 = vmax.f32 %v2729, 0.0
          %v2858 = vmax.f32 %v2730, 0.0
          %v2859 = vmax.f32 %v2731, 0.0
          %v2860 = vmax.f32 %v2732, 0.0
          %v2861 = vmax.f32 %v2733, 0.0
          %v2862 = vmax.f32 %v2734, 0.0
          %v2863 = vmax.f32 %v2735, 0.0
          %v2864 = vmax.f32 %v2736, 0.0
          %v2865 = vmax.f32 %v2737, 0.0
          %v2866 = vmax.f32 %v2738, 0.0
          %v2867 = vmax.f32 %v2739, 0.0
          %v2868 = vmax.f32 %v2740, 0.0
          %v2869 = vmax.f32 %v2741, 0.0
          %v2870 = vmax.f32 %v2742, 0.0
          %v2871 = vmax.f32 %v2743, 0.0
          %v2872 = vmax.f32 %v2744, 0.0
          %v2873 = vmax.f32 %v2745, 0.0
          %v2874 = vmax.f32 %v2746, 0.0
          %v2875 = vmax.f32 %v2747, 0.0
          %v2876 = vmax.f32 %v2748, 0.0
          %v2877 = vmax.f32 %v2749, 0.0
          %v2878 = vmax.f32 %v2750, 0.0
          %v2879 = vmax.f32 %v2751, 0.0
          %v2880 = vmax.f32 %v2752, 0.0
          %v2881 = vmax.f32 %v2753, 0.0
          %v2882 = vmax.f32 %v2754, 0.0
          %v2883 = vmax.f32 %v2755, 0.0
          %v2884 = vmax.f32 %v2756, 0.0
          %v2885 = vmax.f32 %v2757, 0.0
          %v2886 = vmax.f32 %v2758, 0.0
          %v2887 = vmax.f32 %v2759, 0.0
          %v2888 = vmax.f32 %v2760, 0.0
          %v2889 = vmax.f32 %v2761, 0.0
          %v2890 = vmax.f32 %v2762, 0.0
          %v2891 = vmax.f32 %v2763, 0.0
          %v2892 = vmax.f32 %v2764, 0.0
          %v2893 = vmax.f32 %v2765, 0.0
          %v2894 = vmax.f32 %v2766, 0.0
          %v2895 = vmax.f32 %v2767, 0.0
          %v2896 = vmax.f32 %v2768, 0.0
          %v2897 = vmax.f32 %v2769, 0.0
          %v2898 = vmax.f32 %v2770, 0.0
          %v2899 = vmax.f32 %v2771, 0.0
          %v2900 = vmax.f32 %v2772, 0.0
          %v2901 = vmax.f32 %v2773, 0.0
          %v2902 = vmax.f32 %v2774, 0.0
          %v2903 = vmax.f32 %v2775, 0.0
          %v2904 = vmax.f32 %v2776, 0.0
          %v2905 = vmax.f32 %v2777, 0.0
          %v2906 = vmax.f32 %v2778, 0.0
          %v2907 = vmax.f32 %v2779, 0.0
          %v2908 = vmax.f32 %v2780, 0.0
          %v2909 = vmax.f32 %v2781, 0.0
          %v2910 = vmax.f32 %v2782, 0.0
          %v2911 = vmax.f32 %v2783, 0.0
          %v2912 = vmax.f32 %v2784, 0.0
          %v2913 = vmax.f32 %v2785, 0.0
          %v2914 = vmax.f32 %v2786, 0.0
          %v2915 = vmax.f32 %v2787, 0.0
          %v2916 = vmax.f32 %v2788, 0.0
          %v2917 = vmax.f32 %v2789, 0.0
          %v2918 = vmax.f32 %v2790, 0.0
          %v2919 = vmax.f32 %v2791, 0.0
          %v2920 = vmax.f32 %v2792, 0.0
          %v2921 = vmax.f32 %v2793, 0.0
          %v2922 = vmax.f32 %v2794, 0.0
          %v2923 = vmax.f32 %v2795, 0.0
          %v2924 = vmax.f32 %v2796, %v2828
          %v2925 = vmax.f32 %v2797, %v2829
          %v2926 = vmax.f32 %v2798, %v2830
          %v2927 = vmax.f32 %v2799, %v2831
          %v2928 = vmax.f32 %v2800, %v2832
          %v2929 = vmax.f32 %v2801, %v2833
          %v2930 = vmax.f32 %v2802, %v2834
          %v2931 = vmax.f32 %v2803, %v2835
          %v2932 = vmax.f32 %v2804, %v2836
          %v2933 = vmax.f32 %v2805, %v2837
          %v2934 = vmax.f32 %v2806, %v2838
          %v2935 = vmax.f32 %v2807, %v2839
          %v2936 = vmax.f32 %v2808, %v2840
          %v2937 = vmax.f32 %v2809, %v2841
          %v2938 = vmax.f32 %v2810, %v2842
          %v2939 = vmax.f32 %v2811, %v2843
          %v2940 = vmax.f32 %v2812, %v2844
          %v2941 = vmax.f32 %v2813, %v2845
          %v2942 = vmax.f32 %v2814, %v2846
          %v2943 = vmax.f32 %v2815, %v2847
          %v2944 = vmax.f32 %v2816, %v2848
          %v2945 = vmax.f32 %v2817, %v2849
          %v2946 = vmax.f32 %v2818, %v2850
          %v2947 = vmax.f32 %v2819, %v2851
          %v2948 = vmax.f32 %v2820, %v2852
          %v2949 = vmax.f32 %v2821, %v2853
          %v2950 = vmax.f32 %v2822, %v2854
          %v2951 = vmax.f32 %v2823, %v2855
          %v2952 = vmax.f32 %v2824, %v2856
          %v2953 = vmax.f32 %v2825, %v2857
          %v2954 = vmax.f32 %v2826, %v2858
          %v2955 = vmax.f32 %v2827, %v2859
          %v2956 = vmax.f32 %v2860, %v2892
          %v2957 = vmax.f32 %v2861, %v2893
          %v2958 = vmax.f32 %v2862, %v2894
          %v2959 = vmax.f32 %v2863, %v2895
          %v2960 = vmax.f32 %v2864, %v2896
          %v2961 = vmax.f32 %v2865, %v2897
          %v2962 = vmax.f32 %v2866, %v2898
          %v2963 = vmax.f32 %v2867, %v2899
          %v2964 = vmax.f32 %v2868, %v2900
          %v2965 = vmax.f32 %v2869, %v2901
          %v2966 = vmax.f32 %v2870, %v2902
          %v2967 = vmax.f32 %v2871, %v2903
          %v2968 = vmax.f32 %v2872, %v2904
          %v2969 = vmax.f32 %v2873, %v2905
          %v2970 = vmax.f32 %v2874, %v2906
          %v2971 = vmax.f32 %v2875, %v2907
          %v2972 = vmax.f32 %v2876, %v2908
          %v2973 = vmax.f32 %v2877, %v2909
          %v2974 = vmax.f32 %v2878, %v2910
          %v2975 = vmax.f32 %v2879, %v2911
          %v2976 = vmax.f32 %v2880, %v2912
          %v2977 = vmax.f32 %v2881, %v2913
          %v2978 = vmax.f32 %v2882, %v2914
          %v2979 = vmax.f32 %v2883, %v2915
          %v2980 = vmax.f32 %v2884, %v2916
          %v2981 = vmax.f32 %v2885, %v2917
          %v2982 = vmax.f32 %v2886, %v2918
          %v2983 = vmax.f32 %v2887, %v2919
          %v2984 = vmax.f32 %v2888, %v2920
          %v2985 = vmax.f32 %v2889, %v2921
          %v2986 = vmax.f32 %v2890, %v2922
          %v2987 = vmax.f32 %v2891, %v2923
          %v2988 = vmax.f32 %v2924, %v2956
          %v2989 = vmax.f32 %v2925, %v2957
          %v2990 = vmax.f32 %v2926, %v2958
          %v2991 = vmax.f32 %v2927, %v2959
          %v2992 = vmax.f32 %v2928, %v2960
          %v2993 = vmax.f32 %v2929, %v2961
          %v2994 = vmax.f32 %v2930, %v2962
          %v2995 = vmax.f32 %v2931, %v2963
          %v2996 = vmax.f32 %v2932, %v2964
          %v2997 = vmax.f32 %v2933, %v2965
          %v2998 = vmax.f32 %v2934, %v2966
          %v2999 = vmax.f32 %v2935, %v2967
          %v3000 = vmax.f32 %v2936, %v2968
          %v3001 = vmax.f32 %v2937, %v2969
          %v3002 = vmax.f32 %v2938, %v2970
          %v3003 = vmax.f32 %v2939, %v2971
          %v3004 = vmax.f32 %v2940, %v2972
          %v3005 = vmax.f32 %v2941, %v2973
          %v3006 = vmax.f32 %v2942, %v2974
          %v3007 = vmax.f32 %v2943, %v2975
          %v3008 = vmax.f32 %v2944, %v2976
          %v3009 = vmax.f32 %v2945, %v2977
          %v3010 = vmax.f32 %v2946, %v2978
          %v3011 = vmax.f32 %v2947, %v2979
          %v3012 = vmax.f32 %v2948, %v2980
          %v3013 = vmax.f32 %v2949, %v2981
          %v3014 = vmax.f32 %v2950, %v2982
          %v3015 = vmax.f32 %v2951, %v2983
          %v3016 = vmax.f32 %v2952, %v2984
          %v3017 = vmax.f32 %v2953, %v2985
          %v3018 = vmax.f32 %v2954, %v2986
          %v3019 = vmax.f32 %v2955, %v2987
          %v3020 = vpack.c.bf16 %v2989, %v2988
          %v3021 = vpack.c.bf16 %v2991, %v2990
          %v3022 = vpack.c.bf16 %v2993, %v2992
          %v3023 = vpack.c.bf16 %v2995, %v2994
          %v3024 = vpack.c.bf16 %v2997, %v2996
          %v3025 = vpack.c.bf16 %v2999, %v2998
          %v3026 = vpack.c.bf16 %v3001, %v3000
          %v3027 = vpack.c.bf16 %v3003, %v3002
          %v3028 = vpack.c.bf16 %v3005, %v3004
          %v3029 = vpack.c.bf16 %v3007, %v3006
          %v3030 = vpack.c.bf16 %v3009, %v3008
          %v3031 = vpack.c.bf16 %v3011, %v3010
          %v3032 = vpack.c.bf16 %v3013, %v3012
          %v3033 = vpack.c.bf16 %v3015, %v3014
          %v3034 = vpack.c.bf16 %v3017, %v3016
          %v3035 = vpack.c.bf16 %v3019, %v3018
          %v3052 = vunpack.c.l.b16 %v3020
          %v3053 = vunpack.c.h.b16 %v3020
          %v3054 = vunpack.c.l.b16 %v3021
          %v3055 = vunpack.c.h.b16 %v3021
          %v3056 = vunpack.c.l.b16 %v3022
          %v3057 = vunpack.c.h.b16 %v3022
          %v3058 = vunpack.c.l.b16 %v3023
          %v3059 = vunpack.c.h.b16 %v3023
          %v3060 = vunpack.c.l.b16 %v3024
          %v3061 = vunpack.c.h.b16 %v3024
          %v3062 = vunpack.c.l.b16 %v3025
          %v3063 = vunpack.c.h.b16 %v3025
          %v3064 = vunpack.c.l.b16 %v3026
          %v3065 = vunpack.c.h.b16 %v3026
          %v3066 = vunpack.c.l.b16 %v3027
          %v3067 = vunpack.c.h.b16 %v3027
          %v3068 = vunpack.c.l.b16 %v3028
          %v3069 = vunpack.c.h.b16 %v3028
          %v3070 = vunpack.c.l.b16 %v3029
          %v3071 = vunpack.c.h.b16 %v3029
          %v3072 = vunpack.c.l.b16 %v3030
          %v3073 = vunpack.c.h.b16 %v3030
          %v3074 = vunpack.c.l.b16 %v3031
          %v3075 = vunpack.c.h.b16 %v3031
          %v3076 = vunpack.c.l.b16 %v3032
          %v3077 = vunpack.c.h.b16 %v3032
          %v3078 = vunpack.c.l.b16 %v3033
          %v3079 = vunpack.c.h.b16 %v3033
          %v3080 = vunpack.c.l.b16 %v3034
          %v3081 = vunpack.c.h.b16 %v3034
          %v3082 = vunpack.c.l.b16 %v3035
          %v3083 = vunpack.c.h.b16 %v3035
          %v3084 = vpack.c.b16 %v3052, %v3052
          %v3085 = vpack.c.b16 %v3053, %v3053
          %v3086 = vpack.c.b16 %v3054, %v3054
          %v3087 = vpack.c.b16 %v3055, %v3055
          %v3088 = vpack.c.b16 %v3056, %v3056
          %v3089 = vpack.c.b16 %v3057, %v3057
          %v3090 = vpack.c.b16 %v3058, %v3058
          %v3091 = vpack.c.b16 %v3059, %v3059
          %v3092 = vpack.c.b16 %v3060, %v3060
          %v3093 = vpack.c.b16 %v3061, %v3061
          %v3094 = vpack.c.b16 %v3062, %v3062
          %v3095 = vpack.c.b16 %v3063, %v3063
          %v3096 = vpack.c.b16 %v3064, %v3064
          %v3097 = vpack.c.b16 %v3065, %v3065
          %v3098 = vpack.c.b16 %v3066, %v3066
          %v3099 = vpack.c.b16 %v3067, %v3067
          %v3100 = vpack.c.b16 %v3068, %v3068
          %v3101 = vpack.c.b16 %v3069, %v3069
          %v3102 = vpack.c.b16 %v3070, %v3070
          %v3103 = vpack.c.b16 %v3071, %v3071
          %v3104 = vpack.c.b16 %v3072, %v3072
          %v3105 = vpack.c.b16 %v3073, %v3073
          %v3106 = vpack.c.b16 %v3074, %v3074
          %v3107 = vpack.c.b16 %v3075, %v3075
          %v3108 = vpack.c.b16 %v3076, %v3076
          %v3109 = vpack.c.b16 %v3077, %v3077
          %v3110 = vpack.c.b16 %v3078, %v3078
          %v3111 = vpack.c.b16 %v3079, %v3079
          %v3112 = vpack.c.b16 %v3080, %v3080
          %v3113 = vpack.c.b16 %v3081, %v3081
          %v3114 = vpack.c.b16 %v3082, %v3082
          %v3115 = vpack.c.b16 %v3083, %v3083
          %vm3148 = vcmask 519168
          %3149 = vst.msk [vmem:[%s798] sm:$0xf] %vm3148, %v3084
          %3150 = vst.msk [vmem:[%s798 + $0x4] sm:$0xf] %vm3148, %v3085
          %3151 = vst.msk [vmem:[%s798 + $0x8] sm:$0xf] %vm3148, %v3086
          %3152 = vst.msk [vmem:[%s798 + $0xc] sm:$0xf] %vm3148, %v3087
          %3153 = vst.msk [vmem:[%s798 + $0x10] sm:$0xf] %vm3148, %v3088
          %3154 = vst.msk [vmem:[%s798 + $0x14] sm:$0xf] %vm3148, %v3089
          %3155 = vst.msk [vmem:[%s798 + $0x18] sm:$0xf] %vm3148, %v3090
          %3156 = vst.msk [vmem:[%s798 + $0x1c] sm:$0xf] %vm3148, %v3091
          %3157 = vst.msk [vmem:[%s798 + $0x20] sm:$0xf] %vm3148, %v3092
          %3158 = vst.msk [vmem:[%s798 + $0x24] sm:$0xf] %vm3148, %v3093
          %3159 = vst.msk [vmem:[%s798 + $0x28] sm:$0xf] %vm3148, %v3094
          %3160 = vst.msk [vmem:[%s798 + $0x2c] sm:$0xf] %vm3148, %v3095
          %3161 = vst.msk [vmem:[%s798 + $0x30] sm:$0xf] %vm3148, %v3096
          %3162 = vst.msk [vmem:[%s798 + $0x34] sm:$0xf] %vm3148, %v3097
          %3163 = vst.msk [vmem:[%s798 + $0x38] sm:$0xf] %vm3148, %v3098
          %3164 = vst.msk [vmem:[%s798 + $0x3c] sm:$0xf] %vm3148, %v3099
          %3165 = vst.msk [vmem:[%s798 + $0x40] sm:$0xf] %vm3148, %v3100
          %3166 = vst.msk [vmem:[%s798 + $0x44] sm:$0xf] %vm3148, %v3101
          %3167 = vst.msk [vmem:[%s798 + $0x48] sm:$0xf] %vm3148, %v3102
          %3168 = vst.msk [vmem:[%s798 + $0x4c] sm:$0xf] %vm3148, %v3103
          %3169 = vst.msk [vmem:[%s798 + $0x50] sm:$0xf] %vm3148, %v3104
          %3170 = vst.msk [vmem:[%s798 + $0x54] sm:$0xf] %vm3148, %v3105
          %3171 = vst.msk [vmem:[%s798 + $0x58] sm:$0xf] %vm3148, %v3106
          %3172 = vst.msk [vmem:[%s798 + $0x5c] sm:$0xf] %vm3148, %v3107
          %3173 = vst.msk [vmem:[%s798 + $0x60] sm:$0xf] %vm3148, %v3108
          %3174 = vst.msk [vmem:[%s798 + $0x64] sm:$0xf] %vm3148, %v3109
          %3175 = vst.msk [vmem:[%s798 + $0x68] sm:$0xf] %vm3148, %v3110
          %3176 = vst.msk [vmem:[%s798 + $0x6c] sm:$0xf] %vm3148, %v3111
          %3177 = vst.msk [vmem:[%s798 + $0x70] sm:$0xf] %vm3148, %v3112
          %3178 = vst.msk [vmem:[%s798 + $0x74] sm:$0xf] %vm3148, %v3113
          %3179 = vst.msk [vmem:[%s798 + $0x78] sm:$0xf] %vm3148, %v3114
          %3180 = vst.msk [vmem:[%s798 + $0x7c] sm:$0xf] %vm3148, %v3115
        $region81: #{tpu_custom_call.1} parent=68 // pred_fallthru
          _
        %s3181 = smul.u32 32, %s19
        %p3182 = scmp.lt.s32.totalorder %s3181, 63
        %s3183 = scalar_select %p3182, %s3181, 63
        %p3184 = scmp.lt.s32.totalorder %s20, 0
        %s3185 = scalar_select %p3184, %s20, 0
        %s3186 = sadd.s32 %s3185, %s3183
        %s3187 = smul.addr %s3186, 4
        %s3188 = scalar_lea.vmem %s3, %s3187
        // Predicated region
        $region82: #{tpu_custom_call.1} parent=68 // pred_check
          %p3189 = pneg %p135
        $region83: #{tpu_custom_call.1} parent=68 // pred_check_branch
          %3191 = sbr.rel (%p3189) target = $region85
        $region84: #{tpu_custom_call.1} parent=68 // pred_region
          %s3192 = smul.u32 32, %s19
        $region85: #{tpu_custom_call.1} parent=68 // pred_fallthru
          _
      $region69: #{tpu_custom_call.1} parent=5 // pred_fallthru
        _
      %p3193 = scmp.le.s32.totalorder 2, %s9
      // Predicated region
      $region86: #{tpu_custom_call.1} parent=5 // pred_check
        %p3194 = pneg %p3193
      $region87: #{tpu_custom_call.1} parent=5 // pred_check_branch
        %3196 = sbr.rel (%p3194) target = $region89
      $region88: #{tpu_custom_call.1} parent=5 // pred_region
        %s3197 = ssub.s32 %s9, 2
        // Predicated region
        $region90: #{tpu_custom_call.1} parent=88 // pred_check
          %p3198 = pneg %p141
        $region91: #{tpu_custom_call.1} parent=88 // pred_check_branch
          %3200 = sbr.rel (%p3198) target = $region93
        $region92: #{tpu_custom_call.1} parent=88 // pred_region
          %s3201 = smul.u32 32, %s22
          %p3202 = scmp.lt.s32.totalorder %s3201, 63
          %s3203 = scalar_select %p3202, %s3201, 63
          %p3204 = scmp.lt.s32.totalorder %s23, 0
          %s3205 = scalar_select %p3204, %s23, 0
          %s3206 = sadd.s32 %s3205, %s3203
          %s3207 = smul.addr %s3206, 4
          %s3208 = scalar_lea.vmem %s3, %s3207
        $region93: #{tpu_custom_call.1} parent=88 // pred_fallthru
          _
      $region89: #{tpu_custom_call.1} parent=5 // pred_fallthru
        _
    $region6: #{tpu_custom_call.1} parent=1 // loop_footer
      %s13 = sadd.s32 1, %s9
    $region7: #{tpu_custom_call.1} parent=1 // loop_footer_branch
      %8 = sbr.rel target = $region3
    $region8: #{tpu_custom_call.1} parent=1 // loop_exit
      _

</llo_original>
